<compile_context>
chip_gen: v6e
topology: v6e:2x2x1
jax: 0.10.0
libtpu: 0.0.40
codegen_flags: <defaults>
</compile_context>

<pallas_src>
import math
from functools import partial

import jax
import jax.numpy as jnp
from jax.experimental import pallas as pl
from jax.experimental.pallas import tpu as pltpu


CFG = dict(
    vocab_size=64,
    max_position=16,
    hidden=32,
    n_heads=4,
    n_layers=2,
    ffn=64,
    n_classes=3,
)

_LANE = 128  # classifier output padded to a lane-dense width


# ------------------------------ fused kernel ------------------------------- #

def _fused_encoder_kernel(
    x_ref, bias_ref,
    emb_g_ref, emb_b_ref,
    qkv_w_ref, qkv_b_ref,
    o_w_ref, o_b_ref,
    sa_g_ref, sa_b_ref,
    ff1_w_ref, ff1_b_ref,
    ff2_w_ref, ff2_b_ref,
    out_g_ref, out_b_ref,
    cls_w_ref, cls_b_ref,
    logits_ref,
    *, n_layers, n_heads, B, S, H, eps,
):
    D = H // n_heads
    BS = B * S
    scale = 1.0 / math.sqrt(D)
    f32 = jnp.float32
    bf16 = jnp.bfloat16

    def ln(t, g, b):
        # f32 elementwise path (v5e VPU/EUP have no bf16)
        mu = jnp.mean(t, axis=-1, keepdims=True)
        var = jnp.mean((t - mu) * (t - mu), axis=-1, keepdims=True)
        return (t - mu) * jax.lax.rsqrt(var + eps) * g + b

    def matmul(a, w):
        # bf16 MXU operands, f32 accumulation
        return jnp.dot(a.astype(bf16), w.astype(bf16), preferred_element_type=f32)

    x = x_ref[...]                                      # (BS, H) f32, tok+pos emb
    x = ln(x, emb_g_ref[...], emb_b_ref[...])           # embedding LayerNorm
    attn_bias = bias_ref[...]                           # (B, 1, S) additive mask

    for l in range(n_layers):
        # ---- fused QKV projection: single MXU pass ----
        qkv = matmul(x, qkv_w_ref[l]) + qkv_b_ref[l]    # (BS, 3H) f32
        o_w_l = o_w_ref[l]                              # (H, H) bf16

        # ---- multi-head attention, all heads resident in VMEM ----
        # output projection is accumulated per head: sum_h ctx_h @ Wo[h*D:(h+1)*D]
        attn_out = jnp.zeros((BS, H), f32)
        for h in range(n_heads):
            qh = qkv[:, h * D:(h + 1) * D].reshape(B, S, D)
            kh = qkv[:, H + h * D:H + (h + 1) * D].reshape(B, S, D)
            vh = qkv[:, 2 * H + h * D:2 * H + (h + 1) * D].reshape(B, S, D)
            s = jnp.einsum('bqd,bkd->bqk', qh.astype(bf16), kh.astype(bf16),
                           preferred_element_type=f32) * scale       # (B, S, S)
            s = s + attn_bias                                          # key mask
            s = s - jnp.max(s, axis=-1, keepdims=True)
            p = jnp.exp(s)
            p = p * pl.reciprocal(jnp.sum(p, axis=-1, keepdims=True), approx=True)
            ctx = jnp.einsum('bqk,bkd->bqd', p.astype(bf16), vh.astype(bf16),
                             preferred_element_type=f32)              # (B, S, D)
            attn_out = attn_out + matmul(ctx.reshape(BS, D),
                                         o_w_l[h * D:(h + 1) * D, :])
        attn_out = attn_out + o_b_ref[l]

        # ---- residual + LayerNorm (fused, stays in VMEM) ----
        x = ln(x + attn_out, sa_g_ref[l], sa_b_ref[l])

        # ---- feed-forward ----
        hdn = matmul(x, ff1_w_ref[l]) + ff1_b_ref[l]
        # TODO(synk): torch/DistilBERT default is exact (erf) GELU; tanh
        # approximation used here (erf lowering on Mosaic not relied upon).
        hdn = jax.nn.gelu(hdn, approximate=True)
        hdn = matmul(hdn, ff2_w_ref[l]) + ff2_b_ref[l]
        x = ln(x + hdn, out_g_ref[l], out_b_ref[l])

    # ---- pooled_output = hidden[:, 0, :]; classifier head (lane-dense pad) ----
    pooled = x.reshape(B, S, H)[:, 0, :]                # (B, H)
    # TODO(synk): nn.Dropout(p=0.3) is identity in eval mode; skipped.
    logits_ref[...] = matmul(pooled, cls_w_ref[...]) + cls_b_ref[...]   # (B, 128)


# ----------------------------- params & packing ----------------------------- #

def init_params(key, cfg):
    H = cfg["hidden"]

    def dense(k, din, dout):
        return dict(w=jax.random.normal(k, (din, dout), jnp.float32) * 0.02,
                    b=jnp.zeros((dout,), jnp.float32))

    keys = iter(jax.random.split(key, 64))
    params = dict(
        word_emb=jax.random.normal(next(keys), (cfg["vocab_size"], H), jnp.float32) * 0.02,
        pos_emb=jax.random.normal(next(keys), (cfg["max_position"], H), jnp.float32) * 0.02,
        emb_ln_g=jnp.ones((H,), jnp.float32),
        emb_ln_b=jnp.zeros((H,), jnp.float32),
        layers=[],
        out=dense(next(keys), H, cfg["n_classes"]),
    )
    for _ in range(cfg["n_layers"]):
        params["layers"].append(dict(
            q=dense(next(keys), H, H),
            k=dense(next(keys), H, H),
            v=dense(next(keys), H, H),
            o=dense(next(keys), H, H),
            sa_ln_g=jnp.ones((H,), jnp.float32),
            sa_ln_b=jnp.zeros((H,), jnp.float32),
            ff1=dense(next(keys), H, cfg["ffn"]),
            ff2=dense(next(keys), cfg["ffn"], H),
            out_ln_g=jnp.ones((H,), jnp.float32),
            out_ln_b=jnp.zeros((H,), jnp.float32),
        ))
    return params


def pack_params(params, cfg):
    """Stack per-layer weights, fuse QKV, cast matmul weights to bf16,
    zero-pad the classifier head to a lane-dense 128-wide output."""
    H, F, C = cfg["hidden"], cfg["ffn"], cfg["n_classes"]
    bf16 = jnp.bfloat16
    layers = params["layers"]

    def stack(fn):
        return jnp.stack([fn(l) for l in layers], axis=0)

    return dict(
        emb_ln_g=params["emb_ln_g"].reshape(1, H),
        emb_ln_b=params["emb_ln_b"].reshape(1, H),
        qkv_w=stack(lambda l: jnp.concatenate(
            [l["q"]["w"], l["k"]["w"], l["v"]["w"]], axis=1)).astype(bf16),      # (L,H,3H)
        qkv_b=stack(lambda l: jnp.concatenate(
            [l["q"]["b"], l["k"]["b"], l["v"]["b"]]).reshape(1, 3 * H)),         # (L,1,3H)
        o_w=stack(lambda l: l["o"]["w"]).astype(bf16),                            # (L,H,H)
        o_b=stack(lambda l: l["o"]["b"].reshape(1, H)),
        sa_g=stack(lambda l: l["sa_ln_g"].reshape(1, H)),
        sa_b=stack(lambda l: l["sa_ln_b"].reshape(1, H)),
        ff1_w=stack(lambda l: l["ff1"]["w"]).astype(bf16),                        # (L,H,F)
        ff1_b=stack(lambda l: l["ff1"]["b"].reshape(1, F)),
        ff2_w=stack(lambda l: l["ff2"]["w"]).astype(bf16),                        # (L,F,H)
        ff2_b=stack(lambda l: l["ff2"]["b"].reshape(1, H)),
        out_g=stack(lambda l: l["out_ln_g"].reshape(1, H)),
        out_b=stack(lambda l: l["out_ln_b"].reshape(1, H)),
        cls_w=jnp.zeros((H, _LANE), jnp.float32)
                 .at[:, :C].set(params["out"]["w"]).astype(bf16),                 # (H,128)
        cls_b=jnp.zeros((1, _LANE), jnp.float32).at[:, :C].set(params["out"]["b"]),
    )


# --------------------------------- forward --------------------------------- #

def sentiment_classifier_forward(params, input_ids, attention_mask, cfg):
    """Mirrors SentimentClassifier.forward (inference semantics)."""
    B, S = input_ids.shape
    H, NH, L, C = cfg["hidden"], cfg["n_heads"], cfg["n_layers"], cfg["n_classes"]

    # --- embeddings: gather is glue; everything after runs in one Pallas call ---
    tok = params["word_emb"][input_ids]                     # (B, S, H)
    pos = params["pos_emb"][jnp.arange(S)][None, :, :]      # (1, S, H)
    x = (tok + pos).reshape(B * S, H).astype(jnp.float32)

    # additive attention bias over key positions (1 = keep -> 0, 0 = pad -> -1e30)
    bias = (1.0 - attention_mask.astype(jnp.float32)).reshape(B, 1, S) * jnp.float32(-1e30)

    p = pack_params(params, cfg)

    kernel = partial(_fused_encoder_kernel,
                     n_layers=L, n_heads=NH, B=B, S=S, H=H, eps=1e-12)

    logits_padded = pl.pallas_call(
        kernel,
        out_shape=jax.ShapeDtypeStruct((B, _LANE), jnp.float32),
    )(
        x, bias,
        p["emb_ln_g"], p["emb_ln_b"],
        p["qkv_w"], p["qkv_b"],
        p["o_w"], p["o_b"],
        p["sa_g"], p["sa_b"],
        p["ff1_w"], p["ff1_b"],
        p["ff2_w"], p["ff2_b"],
        p["out_g"], p["out_b"],
        p["cls_w"], p["cls_b"],
    )
    return logits_padded[:, :C]


# ----------------------------------- main ----------------------------------- #

if __name__ == "__main__":
    cfg = CFG
    B, S = 2, 8

    key = jax.random.PRNGKey(0)
    k_ids, k_params = jax.random.split(key)
    input_ids = jax.random.randint(k_ids, (B, S), 0, cfg["vocab_size"], dtype=jnp.int32)
    attention_mask = jnp.ones((B, S), dtype=jnp.int32)

    params = init_params(k_params, cfg)

    fwd = jax.jit(lambda prm, ids, m: sentiment_classifier_forward(prm, ids, m, cfg))
    logits = fwd(params, input_ids, attention_mask)
    jax.block_until_ready(logits)

    assert logits.shape == (B, cfg["n_classes"])
    assert logits.dtype == jnp.float32
    print("KERNEL_OK")
</pallas_src>

<mosaic_0001>
module attributes {stable_mosaic.version = 11 : i64} {
  func.func @_fused_encoder_kernel(%arg0: memref<16x32xf32, #tpu.memory_space<vmem>>, %arg1: memref<2x1x8xf32, #tpu.memory_space<vmem>>, %arg2: memref<1x32xf32, #tpu.memory_space<vmem>>, %arg3: memref<1x32xf32, #tpu.memory_space<vmem>>, %arg4: memref<2x32x96xbf16, #tpu.memory_space<vmem>>, %arg5: memref<2x1x96xf32, #tpu.memory_space<vmem>>, %arg6: memref<2x32x32xbf16, #tpu.memory_space<vmem>>, %arg7: memref<2x1x32xf32, #tpu.memory_space<vmem>>, %arg8: memref<2x1x32xf32, #tpu.memory_space<vmem>>, %arg9: memref<2x1x32xf32, #tpu.memory_space<vmem>>, %arg10: memref<2x32x64xbf16, #tpu.memory_space<vmem>>, %arg11: memref<2x1x64xf32, #tpu.memory_space<vmem>>, %arg12: memref<2x64x32xbf16, #tpu.memory_space<vmem>>, %arg13: memref<2x1x32xf32, #tpu.memory_space<vmem>>, %arg14: memref<2x1x32xf32, #tpu.memory_space<vmem>>, %arg15: memref<2x1x32xf32, #tpu.memory_space<vmem>>, %arg16: memref<32x128xbf16, #tpu.memory_space<vmem>>, %arg17: memref<1x128xf32, #tpu.memory_space<vmem>>, %arg18: memref<2x128xf32, #tpu.memory_space<vmem>>) attributes {dimension_semantics = [], scalar_prefetch = 0 : i64, scratch_operands = 0 : i64, tpu.core_type = #tpu.core_type<tc>} {
    %c0 = arith.constant 0 : index
    %c0_0 = arith.constant 0 : index
    %0 = vector.load %arg0[%c0, %c0_0] : memref<16x32xf32, #tpu.memory_space<vmem>>, vector<16x32xf32>
    %c0_1 = arith.constant 0 : index
    %c0_2 = arith.constant 0 : index
    %1 = vector.load %arg2[%c0_1, %c0_2] : memref<1x32xf32, #tpu.memory_space<vmem>>, vector<1x32xf32>
    %c0_3 = arith.constant 0 : index
    %c0_4 = arith.constant 0 : index
    %2 = vector.load %arg3[%c0_3, %c0_4] : memref<1x32xf32, #tpu.memory_space<vmem>>, vector<1x32xf32>
    %cst = arith.constant dense<0.000000e+00> : vector<16xf32>
    %3 = vector.multi_reduction <add>, %0, %cst [1] : vector<16x32xf32> to vector<16xf32>
    %4 = vector.shape_cast %3 : vector<16xf32> to vector<16x1xf32>
    %cst_5 = arith.constant 3.200000e+01 : f32
    %5 = vector.broadcast %cst_5 : f32 to vector<16x1xf32>
    %6 = arith.divf %4, %5 : vector<16x1xf32>
    %7 = vector.broadcast %6 : vector<16x1xf32> to vector<16x32xf32>
    %8 = arith.subf %0, %7 : vector<16x32xf32>
    %9 = vector.broadcast %6 : vector<16x1xf32> to vector<16x32xf32>
    %10 = arith.subf %0, %9 : vector<16x32xf32>
    %11 = arith.mulf %8, %10 : vector<16x32xf32>
    %cst_6 = arith.constant dense<0.000000e+00> : vector<16xf32>
    %12 = vector.multi_reduction <add>, %11, %cst_6 [1] : vector<16x32xf32> to vector<16xf32>
    %13 = vector.shape_cast %12 : vector<16xf32> to vector<16x1xf32>
    %cst_7 = arith.constant 3.200000e+01 : f32
    %14 = vector.broadcast %cst_7 : f32 to vector<16x1xf32>
    %15 = arith.divf %13, %14 : vector<16x1xf32>
    %16 = vector.broadcast %6 : vector<16x1xf32> to vector<16x32xf32>
    %17 = arith.subf %0, %16 : vector<16x32xf32>
    %cst_8 = arith.constant 9.99999996E-13 : f32
    %18 = vector.broadcast %cst_8 : f32 to vector<16x1xf32>
    %19 = arith.addf %15, %18 : vector<16x1xf32>
    %20 = math.rsqrt %19 : vector<16x1xf32>
    %21 = vector.broadcast %20 : vector<16x1xf32> to vector<16x32xf32>
    %22 = arith.mulf %17, %21 : vector<16x32xf32>
    %23 = vector.broadcast %1 : vector<1x32xf32> to vector<16x32xf32>
    %24 = arith.mulf %22, %23 : vector<16x32xf32>
    %25 = vector.broadcast %2 : vector<1x32xf32> to vector<16x32xf32>
    %26 = arith.addf %24, %25 : vector<16x32xf32>
    %c0_9 = arith.constant 0 : index
    %c0_10 = arith.constant 0 : index
    %c0_11 = arith.constant 0 : index
    %27 = vector.load %arg1[%c0_9, %c0_10, %c0_11] : memref<2x1x8xf32, #tpu.memory_space<vmem>>, vector<2x1x8xf32>
    %c0_12 = arith.constant 0 : index
    %c0_13 = arith.constant 0 : index
    %c0_14 = arith.constant 0 : index
    %28 = vector.load %arg4[%c0_12, %c0_13, %c0_14] : memref<2x32x96xbf16, #tpu.memory_space<vmem>>, vector<1x32x96xbf16>
    %29 = vector.shape_cast %28 : vector<1x32x96xbf16> to vector<32x96xbf16>
    %30 = arith.truncf %26 : vector<16x32xf32> to vector<16x32xbf16>
    %cst_15 = arith.constant dense<0.000000e+00> : vector<16x96xf32>
    %31 = tpu.matmul %30, %29, %cst_15 {dimension_numbers = #tpu.dot_dimension_numbers<[1], [0], [0], [1], [0, 0, 1, 1], [], []>} : vector<16x32xbf16>, vector<32x96xbf16>, vector<16x96xf32> -> vector<16x96xf32>
    %c0_16 = arith.constant 0 : index
    %c0_17 = arith.constant 0 : index
    %c0_18 = arith.constant 0 : index
    %32 = vector.load %arg5[%c0_16, %c0_17, %c0_18] : memref<2x1x96xf32, #tpu.memory_space<vmem>>, vector<1x1x96xf32>
    %33 = vector.shape_cast %32 : vector<1x1x96xf32> to vector<1x96xf32>
    %34 = vector.broadcast %33 : vector<1x96xf32> to vector<16x96xf32>
    %35 = arith.addf %31, %34 : vector<16x96xf32>
    %c0_19 = arith.constant 0 : index
    %c0_20 = arith.constant 0 : index
    %c0_21 = arith.constant 0 : index
    %36 = vector.load %arg6[%c0_19, %c0_20, %c0_21] : memref<2x32x32xbf16, #tpu.memory_space<vmem>>, vector<1x32x32xbf16>
    %37 = vector.shape_cast %36 : vector<1x32x32xbf16> to vector<32x32xbf16>
    %cst_22 = arith.constant 0.000000e+00 : f32
    %38 = vector.broadcast %cst_22 : f32 to vector<16x32xf32>
    %39 = vector.extract_strided_slice %35 {offsets = [0, 0], sizes = [16, 8], strides = [1, 1]} : vector<16x96xf32> to vector<16x8xf32>
    %40 = vector.shape_cast %39 : vector<16x8xf32> to vector<2x8x8xf32>
    %41 = vector.extract_strided_slice %35 {offsets = [0, 32], sizes = [16, 8], strides = [1, 1]} : vector<16x96xf32> to vector<16x8xf32>
    %42 = vector.shape_cast %41 : vector<16x8xf32> to vector<2x8x8xf32>
    %43 = vector.extract_strided_slice %35 {offsets = [0, 64], sizes = [16, 8], strides = [1, 1]} : vector<16x96xf32> to vector<16x8xf32>
    %44 = vector.shape_cast %43 : vector<16x8xf32> to vector<2x8x8xf32>
    %45 = arith.truncf %40 : vector<2x8x8xf32> to vector<2x8x8xbf16>
    %46 = arith.truncf %42 : vector<2x8x8xf32> to vector<2x8x8xbf16>
    "tpu.trace_start"() <{level = 10 : i32, message = "bqd,bkd->bqk"}> : () -> ()
    %cst_23 = arith.constant dense<0.000000e+00> : vector<2x8x8xf32>
    %47 = tpu.matmul %45, %46, %cst_23 {dimension_numbers = #tpu.dot_dimension_numbers<[2], [2], [1], [1], [0, 0, 0, 1, 1, 1], [0], [0]>} : vector<2x8x8xbf16>, vector<2x8x8xbf16>, vector<2x8x8xf32> -> vector<2x8x8xf32>
    "tpu.trace_stop"() : () -> ()
    %cst_24 = arith.constant 0.353553385 : f32
    %48 = vector.broadcast %cst_24 : f32 to vector<2x8x8xf32>
    %49 = arith.mulf %47, %48 : vector<2x8x8xf32>
    %50 = vector.broadcast %27 : vector<2x1x8xf32> to vector<2x8x8xf32>
    %51 = arith.addf %49, %50 : vector<2x8x8xf32>
    %cst_25 = arith.constant dense<0xFF800000> : vector<2x8xf32>
    %52 = vector.multi_reduction <maximumf>, %51, %cst_25 [2] : vector<2x8x8xf32> to vector<2x8xf32>
    %53 = vector.shape_cast %52 : vector<2x8xf32> to vector<2x8x1xf32>
    %54 = vector.broadcast %53 : vector<2x8x1xf32> to vector<2x8x8xf32>
    %55 = arith.subf %51, %54 : vector<2x8x8xf32>
    %56 = math.exp %55 : vector<2x8x8xf32>
    %cst_26 = arith.constant dense<0.000000e+00> : vector<2x8xf32>
    %57 = vector.multi_reduction <add>, %56, %cst_26 [2] : vector<2x8x8xf32> to vector<2x8xf32>
    %58 = vector.shape_cast %57 : vector<2x8xf32> to vector<2x8x1xf32>
    %59 = tpu.reciprocal %58 {approx = true} : vector<2x8x1xf32> -> vector<2x8x1xf32>
    %60 = vector.broadcast %59 : vector<2x8x1xf32> to vector<2x8x8xf32>
    %61 = arith.mulf %56, %60 : vector<2x8x8xf32>
    %62 = arith.truncf %61 : vector<2x8x8xf32> to vector<2x8x8xbf16>
    %63 = arith.truncf %44 : vector<2x8x8xf32> to vector<2x8x8xbf16>
    "tpu.trace_start"() <{level = 10 : i32, message = "bqk,bkd->bqd"}> : () -> ()
    %cst_27 = arith.constant dense<0.000000e+00> : vector<2x8x8xf32>
    %64 = tpu.matmul %62, %63, %cst_27 {dimension_numbers = #tpu.dot_dimension_numbers<[2], [1], [1], [2], [0, 0, 0, 1, 1, 2], [0], [0]>} : vector<2x8x8xbf16>, vector<2x8x8xbf16>, vector<2x8x8xf32> -> vector<2x8x8xf32>
    "tpu.trace_stop"() : () -> ()
    %65 = vector.shape_cast %64 : vector<2x8x8xf32> to vector<16x8xf32>
    %66 = vector.extract_strided_slice %37 {offsets = [0, 0], sizes = [8, 32], strides = [1, 1]} : vector<32x32xbf16> to vector<8x32xbf16>
    %67 = arith.truncf %65 : vector<16x8xf32> to vector<16x8xbf16>
    %cst_28 = arith.constant dense<0.000000e+00> : vector<16x32xf32>
    %68 = tpu.matmul %67, %66, %cst_28 {dimension_numbers = #tpu.dot_dimension_numbers<[1], [0], [0], [1], [0, 0, 1, 1], [], []>} : vector<16x8xbf16>, vector<8x32xbf16>, vector<16x32xf32> -> vector<16x32xf32>
    %69 = arith.addf %38, %68 : vector<16x32xf32>
    %70 = vector.extract_strided_slice %35 {offsets = [0, 8], sizes = [16, 8], strides = [1, 1]} : vector<16x96xf32> to vector<16x8xf32>
    %71 = vector.shape_cast %70 : vector<16x8xf32> to vector<2x8x8xf32>
    %72 = vector.extract_strided_slice %35 {offsets = [0, 40], sizes = [16, 8], strides = [1, 1]} : vector<16x96xf32> to vector<16x8xf32>
    %73 = vector.shape_cast %72 : vector<16x8xf32> to vector<2x8x8xf32>
    %74 = vector.extract_strided_slice %35 {offsets = [0, 72], sizes = [16, 8], strides = [1, 1]} : vector<16x96xf32> to vector<16x8xf32>
    %75 = vector.shape_cast %74 : vector<16x8xf32> to vector<2x8x8xf32>
    %76 = arith.truncf %71 : vector<2x8x8xf32> to vector<2x8x8xbf16>
    %77 = arith.truncf %73 : vector<2x8x8xf32> to vector<2x8x8xbf16>
    "tpu.trace_start"() <{level = 10 : i32, message = "bqd,bkd->bqk"}> : () -> ()
    %cst_29 = arith.constant dense<0.000000e+00> : vector<2x8x8xf32>
    %78 = tpu.matmul %76, %77, %cst_29 {dimension_numbers = #tpu.dot_dimension_numbers<[2], [2], [1], [1], [0, 0, 0, 1, 1, 1], [0], [0]>} : vector<2x8x8xbf16>, vector<2x8x8xbf16>, vector<2x8x8xf32> -> vector<2x8x8xf32>
    "tpu.trace_stop"() : () -> ()
    %cst_30 = arith.constant 0.353553385 : f32
    %79 = vector.broadcast %cst_30 : f32 to vector<2x8x8xf32>
    %80 = arith.mulf %78, %79 : vector<2x8x8xf32>
    %81 = vector.broadcast %27 : vector<2x1x8xf32> to vector<2x8x8xf32>
    %82 = arith.addf %80, %81 : vector<2x8x8xf32>
    %cst_31 = arith.constant dense<0xFF800000> : vector<2x8xf32>
    %83 = vector.multi_reduction <maximumf>, %82, %cst_31 [2] : vector<2x8x8xf32> to vector<2x8xf32>
    %84 = vector.shape_cast %83 : vector<2x8xf32> to vector<2x8x1xf32>
    %85 = vector.broadcast %84 : vector<2x8x1xf32> to vector<2x8x8xf32>
    %86 = arith.subf %82, %85 : vector<2x8x8xf32>
    %87 = math.exp %86 : vector<2x8x8xf32>
    %cst_32 = arith.constant dense<0.000000e+00> : vector<2x8xf32>
    %88 = vector.multi_reduction <add>, %87, %cst_32 [2] : vector<2x8x8xf32> to vector<2x8xf32>
    %89 = vector.shape_cast %88 : vector<2x8xf32> to vector<2x8x1xf32>
    %90 = tpu.reciprocal %89 {approx = true} : vector<2x8x1xf32> -> vector<2x8x1xf32>
    %91 = vector.broadcast %90 : vector<2x8x1xf32> to vector<2x8x8xf32>
    %92 = arith.mulf %87, %91 : vector<2x8x8xf32>
    %93 = arith.truncf %92 : vector<2x8x8xf32> to vector<2x8x8xbf16>
    %94 = arith.truncf %75 : vector<2x8x8xf32> to vector<2x8x8xbf16>
    "tpu.trace_start"() <{level = 10 : i32, message = "bqk,bkd->bqd"}> : () -> ()
    %cst_33 = arith.constant dense<0.000000e+00> : vector<2x8x8xf32>
    %95 = tpu.matmul %93, %94, %cst_33 {dimension_numbers = #tpu.dot_dimension_numbers<[2], [1], [1], [2], [0, 0, 0, 1, 1, 2], [0], [0]>} : vector<2x8x8xbf16>, vector<2x8x8xbf16>, vector<2x8x8xf32> -> vector<2x8x8xf32>
    "tpu.trace_stop"() : () -> ()
    %96 = vector.shape_cast %95 : vector<2x8x8xf32> to vector<16x8xf32>
    %97 = vector.extract_strided_slice %37 {offsets = [8, 0], sizes = [8, 32], strides = [1, 1]} : vector<32x32xbf16> to vector<8x32xbf16>
    %98 = arith.truncf %96 : vector<16x8xf32> to vector<16x8xbf16>
    %cst_34 = arith.constant dense<0.000000e+00> : vector<16x32xf32>
    %99 = tpu.matmul %98, %97, %cst_34 {dimension_numbers = #tpu.dot_dimension_numbers<[1], [0], [0], [1], [0, 0, 1, 1], [], []>} : vector<16x8xbf16>, vector<8x32xbf16>, vector<16x32xf32> -> vector<16x32xf32>
    %100 = arith.addf %69, %99 : vector<16x32xf32>
    %101 = vector.extract_strided_slice %35 {offsets = [0, 16], sizes = [16, 8], strides = [1, 1]} : vector<16x96xf32> to vector<16x8xf32>
    %102 = vector.shape_cast %101 : vector<16x8xf32> to vector<2x8x8xf32>
    %103 = vector.extract_strided_slice %35 {offsets = [0, 48], sizes = [16, 8], strides = [1, 1]} : vector<16x96xf32> to vector<16x8xf32>
    %104 = vector.shape_cast %103 : vector<16x8xf32> to vector<2x8x8xf32>
    %105 = vector.extract_strided_slice %35 {offsets = [0, 80], sizes = [16, 8], strides = [1, 1]} : vector<16x96xf32> to vector<16x8xf32>
    %106 = vector.shape_cast %105 : vector<16x8xf32> to vector<2x8x8xf32>
    %107 = arith.truncf %102 : vector<2x8x8xf32> to vector<2x8x8xbf16>
    %108 = arith.truncf %104 : vector<2x8x8xf32> to vector<2x8x8xbf16>
    "tpu.trace_start"() <{level = 10 : i32, message = "bqd,bkd->bqk"}> : () -> ()
    %cst_35 = arith.constant dense<0.000000e+00> : vector<2x8x8xf32>
    %109 = tpu.matmul %107, %108, %cst_35 {dimension_numbers = #tpu.dot_dimension_numbers<[2], [2], [1], [1], [0, 0, 0, 1, 1, 1], [0], [0]>} : vector<2x8x8xbf16>, vector<2x8x8xbf16>, vector<2x8x8xf32> -> vector<2x8x8xf32>
    "tpu.trace_stop"() : () -> ()
    %cst_36 = arith.constant 0.353553385 : f32
    %110 = vector.broadcast %cst_36 : f32 to vector<2x8x8xf32>
    %111 = arith.mulf %109, %110 : vector<2x8x8xf32>
    %112 = vector.broadcast %27 : vector<2x1x8xf32> to vector<2x8x8xf32>
    %113 = arith.addf %111, %112 : vector<2x8x8xf32>
    %cst_37 = arith.constant dense<0xFF800000> : vector<2x8xf32>
    %114 = vector.multi_reduction <maximumf>, %113, %cst_37 [2] : vector<2x8x8xf32> to vector<2x8xf32>
    %115 = vector.shape_cast %114 : vector<2x8xf32> to vector<2x8x1xf32>
    %116 = vector.broadcast %115 : vector<2x8x1xf32> to vector<2x8x8xf32>
    %117 = arith.subf %113, %116 : vector<2x8x8xf32>
    %118 = math.exp %117 : vector<2x8x8xf32>
    %cst_38 = arith.constant dense<0.000000e+00> : vector<2x8xf32>
    %119 = vector.multi_reduction <add>, %118, %cst_38 [2] : vector<2x8x8xf32> to vector<2x8xf32>
    %120 = vector.shape_cast %119 : vector<2x8xf32> to vector<2x8x1xf32>
    %121 = tpu.reciprocal %120 {approx = true} : vector<2x8x1xf32> -> vector<2x8x1xf32>
    %122 = vector.broadcast %121 : vector<2x8x1xf32> to vector<2x8x8xf32>
    %123 = arith.mulf %118, %122 : vector<2x8x8xf32>
    %124 = arith.truncf %123 : vector<2x8x8xf32> to vector<2x8x8xbf16>
    %125 = arith.truncf %106 : vector<2x8x8xf32> to vector<2x8x8xbf16>
    "tpu.trace_start"() <{level = 10 : i32, message = "bqk,bkd->bqd"}> : () -> ()
    %cst_39 = arith.constant dense<0.000000e+00> : vector<2x8x8xf32>
    %126 = tpu.matmul %124, %125, %cst_39 {dimension_numbers = #tpu.dot_dimension_numbers<[2], [1], [1], [2], [0, 0, 0, 1, 1, 2], [0], [0]>} : vector<2x8x8xbf16>, vector<2x8x8xbf16>, vector<2x8x8xf32> -> vector<2x8x8xf32>
    "tpu.trace_stop"() : () -> ()
    %127 = vector.shape_cast %126 : vector<2x8x8xf32> to vector<16x8xf32>
    %128 = vector.extract_strided_slice %37 {offsets = [16, 0], sizes = [8, 32], strides = [1, 1]} : vector<32x32xbf16> to vector<8x32xbf16>
    %129 = arith.truncf %127 : vector<16x8xf32> to vector<16x8xbf16>
    %cst_40 = arith.constant dense<0.000000e+00> : vector<16x32xf32>
    %130 = tpu.matmul %129, %128, %cst_40 {dimension_numbers = #tpu.dot_dimension_numbers<[1], [0], [0], [1], [0, 0, 1, 1], [], []>} : vector<16x8xbf16>, vector<8x32xbf16>, vector<16x32xf32> -> vector<16x32xf32>
    %131 = arith.addf %100, %130 : vector<16x32xf32>
    %132 = vector.extract_strided_slice %35 {offsets = [0, 24], sizes = [16, 8], strides = [1, 1]} : vector<16x96xf32> to vector<16x8xf32>
    %133 = vector.shape_cast %132 : vector<16x8xf32> to vector<2x8x8xf32>
    %134 = vector.extract_strided_slice %35 {offsets = [0, 56], sizes = [16, 8], strides = [1, 1]} : vector<16x96xf32> to vector<16x8xf32>
    %135 = vector.shape_cast %134 : vector<16x8xf32> to vector<2x8x8xf32>
    %136 = vector.extract_strided_slice %35 {offsets = [0, 88], sizes = [16, 8], strides = [1, 1]} : vector<16x96xf32> to vector<16x8xf32>
    %137 = vector.shape_cast %136 : vector<16x8xf32> to vector<2x8x8xf32>
    %138 = arith.truncf %133 : vector<2x8x8xf32> to vector<2x8x8xbf16>
    %139 = arith.truncf %135 : vector<2x8x8xf32> to vector<2x8x8xbf16>
    "tpu.trace_start"() <{level = 10 : i32, message = "bqd,bkd->bqk"}> : () -> ()
    %cst_41 = arith.constant dense<0.000000e+00> : vector<2x8x8xf32>
    %140 = tpu.matmul %138, %139, %cst_41 {dimension_numbers = #tpu.dot_dimension_numbers<[2], [2], [1], [1], [0, 0, 0, 1, 1, 1], [0], [0]>} : vector<2x8x8xbf16>, vector<2x8x8xbf16>, vector<2x8x8xf32> -> vector<2x8x8xf32>
    "tpu.trace_stop"() : () -> ()
    %cst_42 = arith.constant 0.353553385 : f32
    %141 = vector.broadcast %cst_42 : f32 to vector<2x8x8xf32>
    %142 = arith.mulf %140, %141 : vector<2x8x8xf32>
    %143 = vector.broadcast %27 : vector<2x1x8xf32> to vector<2x8x8xf32>
    %144 = arith.addf %142, %143 : vector<2x8x8xf32>
    %cst_43 = arith.constant dense<0xFF800000> : vector<2x8xf32>
    %145 = vector.multi_reduction <maximumf>, %144, %cst_43 [2] : vector<2x8x8xf32> to vector<2x8xf32>
    %146 = vector.shape_cast %145 : vector<2x8xf32> to vector<2x8x1xf32>
    %147 = vector.broadcast %146 : vector<2x8x1xf32> to vector<2x8x8xf32>
    %148 = arith.subf %144, %147 : vector<2x8x8xf32>
    %149 = math.exp %148 : vector<2x8x8xf32>
    %cst_44 = arith.constant dense<0.000000e+00> : vector<2x8xf32>
    %150 = vector.multi_reduction <add>, %149, %cst_44 [2] : vector<2x8x8xf32> to vector<2x8xf32>
    %151 = vector.shape_cast %150 : vector<2x8xf32> to vector<2x8x1xf32>
    %152 = tpu.reciprocal %151 {approx = true} : vector<2x8x1xf32> -> vector<2x8x1xf32>
    %153 = vector.broadcast %152 : vector<2x8x1xf32> to vector<2x8x8xf32>
    %154 = arith.mulf %149, %153 : vector<2x8x8xf32>
    %155 = arith.truncf %154 : vector<2x8x8xf32> to vector<2x8x8xbf16>
    %156 = arith.truncf %137 : vector<2x8x8xf32> to vector<2x8x8xbf16>
    "tpu.trace_start"() <{level = 10 : i32, message = "bqk,bkd->bqd"}> : () -> ()
    %cst_45 = arith.constant dense<0.000000e+00> : vector<2x8x8xf32>
    %157 = tpu.matmul %155, %156, %cst_45 {dimension_numbers = #tpu.dot_dimension_numbers<[2], [1], [1], [2], [0, 0, 0, 1, 1, 2], [0], [0]>} : vector<2x8x8xbf16>, vector<2x8x8xbf16>, vector<2x8x8xf32> -> vector<2x8x8xf32>
    "tpu.trace_stop"() : () -> ()
    %158 = vector.shape_cast %157 : vector<2x8x8xf32> to vector<16x8xf32>
    %159 = vector.extract_strided_slice %37 {offsets = [24, 0], sizes = [8, 32], strides = [1, 1]} : vector<32x32xbf16> to vector<8x32xbf16>
    %160 = arith.truncf %158 : vector<16x8xf32> to vector<16x8xbf16>
    %cst_46 = arith.constant dense<0.000000e+00> : vector<16x32xf32>
    %161 = tpu.matmul %160, %159, %cst_46 {dimension_numbers = #tpu.dot_dimension_numbers<[1], [0], [0], [1], [0, 0, 1, 1], [], []>} : vector<16x8xbf16>, vector<8x32xbf16>, vector<16x32xf32> -> vector<16x32xf32>
    %162 = arith.addf %131, %161 : vector<16x32xf32>
    %c0_47 = arith.constant 0 : index
    %c0_48 = arith.constant 0 : index
    %c0_49 = arith.constant 0 : index
    %163 = vector.load %arg7[%c0_47, %c0_48, %c0_49] : memref<2x1x32xf32, #tpu.memory_space<vmem>>, vector<1x1x32xf32>
    %164 = vector.shape_cast %163 : vector<1x1x32xf32> to vector<1x32xf32>
    %165 = vector.broadcast %164 : vector<1x32xf32> to vector<16x32xf32>
    %166 = arith.addf %162, %165 : vector<16x32xf32>
    %167 = arith.addf %26, %166 : vector<16x32xf32>
    %c0_50 = arith.constant 0 : index
    %c0_51 = arith.constant 0 : index
    %c0_52 = arith.constant 0 : index
    %168 = vector.load %arg8[%c0_50, %c0_51, %c0_52] : memref<2x1x32xf32, #tpu.memory_space<vmem>>, vector<1x1x32xf32>
    %169 = vector.shape_cast %168 : vector<1x1x32xf32> to vector<1x32xf32>
    %c0_53 = arith.constant 0 : index
    %c0_54 = arith.constant 0 : index
    %c0_55 = arith.constant 0 : index
    %170 = vector.load %arg9[%c0_53, %c0_54, %c0_55] : memref<2x1x32xf32, #tpu.memory_space<vmem>>, vector<1x1x32xf32>
    %171 = vector.shape_cast %170 : vector<1x1x32xf32> to vector<1x32xf32>
    %cst_56 = arith.constant dense<0.000000e+00> : vector<16xf32>
    %172 = vector.multi_reduction <add>, %167, %cst_56 [1] : vector<16x32xf32> to vector<16xf32>
    %173 = vector.shape_cast %172 : vector<16xf32> to vector<16x1xf32>
    %cst_57 = arith.constant 3.200000e+01 : f32
    %174 = vector.broadcast %cst_57 : f32 to vector<16x1xf32>
    %175 = arith.divf %173, %174 : vector<16x1xf32>
    %176 = vector.broadcast %175 : vector<16x1xf32> to vector<16x32xf32>
    %177 = arith.subf %167, %176 : vector<16x32xf32>
    %178 = vector.broadcast %175 : vector<16x1xf32> to vector<16x32xf32>
    %179 = arith.subf %167, %178 : vector<16x32xf32>
    %180 = arith.mulf %177, %179 : vector<16x32xf32>
    %cst_58 = arith.constant dense<0.000000e+00> : vector<16xf32>
    %181 = vector.multi_reduction <add>, %180, %cst_58 [1] : vector<16x32xf32> to vector<16xf32>
    %182 = vector.shape_cast %181 : vector<16xf32> to vector<16x1xf32>
    %cst_59 = arith.constant 3.200000e+01 : f32
    %183 = vector.broadcast %cst_59 : f32 to vector<16x1xf32>
    %184 = arith.divf %182, %183 : vector<16x1xf32>
    %185 = vector.broadcast %175 : vector<16x1xf32> to vector<16x32xf32>
    %186 = arith.subf %167, %185 : vector<16x32xf32>
    %cst_60 = arith.constant 9.99999996E-13 : f32
    %187 = vector.broadcast %cst_60 : f32 to vector<16x1xf32>
    %188 = arith.addf %184, %187 : vector<16x1xf32>
    %189 = math.rsqrt %188 : vector<16x1xf32>
    %190 = vector.broadcast %189 : vector<16x1xf32> to vector<16x32xf32>
    %191 = arith.mulf %186, %190 : vector<16x32xf32>
    %192 = vector.broadcast %169 : vector<1x32xf32> to vector<16x32xf32>
    %193 = arith.mulf %191, %192 : vector<16x32xf32>
    %194 = vector.broadcast %171 : vector<1x32xf32> to vector<16x32xf32>
    %195 = arith.addf %193, %194 : vector<16x32xf32>
    %c0_61 = arith.constant 0 : index
    %c0_62 = arith.constant 0 : index
    %c0_63 = arith.constant 0 : index
    %196 = vector.load %arg10[%c0_61, %c0_62, %c0_63] : memref<2x32x64xbf16, #tpu.memory_space<vmem>>, vector<1x32x64xbf16>
    %197 = vector.shape_cast %196 : vector<1x32x64xbf16> to vector<32x64xbf16>
    %198 = arith.truncf %195 : vector<16x32xf32> to vector<16x32xbf16>
    %cst_64 = arith.constant dense<0.000000e+00> : vector<16x64xf32>
    %199 = tpu.matmul %198, %197, %cst_64 {dimension_numbers = #tpu.dot_dimension_numbers<[1], [0], [0], [1], [0, 0, 1, 1], [], []>} : vector<16x32xbf16>, vector<32x64xbf16>, vector<16x64xf32> -> vector<16x64xf32>
    %c0_65 = arith.constant 0 : index
    %c0_66 = arith.constant 0 : index
    %c0_67 = arith.constant 0 : index
    %200 = vector.load %arg11[%c0_65, %c0_66, %c0_67] : memref<2x1x64xf32, #tpu.memory_space<vmem>>, vector<1x1x64xf32>
    %201 = vector.shape_cast %200 : vector<1x1x64xf32> to vector<1x64xf32>
    %202 = vector.broadcast %201 : vector<1x64xf32> to vector<16x64xf32>
    %203 = arith.addf %199, %202 : vector<16x64xf32>
    %204 = arith.mulf %203, %203 : vector<16x64xf32>
    %205 = arith.mulf %203, %204 : vector<16x64xf32>
    %cst_68 = arith.constant 4.471500e-02 : f32
    %206 = vector.broadcast %cst_68 : f32 to vector<16x64xf32>
    %207 = arith.mulf %206, %205 : vector<16x64xf32>
    %208 = arith.addf %203, %207 : vector<16x64xf32>
    %cst_69 = arith.constant 0.797884583 : f32
    %209 = vector.broadcast %cst_69 : f32 to vector<16x64xf32>
    %210 = arith.mulf %209, %208 : vector<16x64xf32>
    %211 = math.tanh %210 : vector<16x64xf32>
    %cst_70 = arith.constant 1.000000e+00 : f32
    %212 = vector.broadcast %cst_70 : f32 to vector<16x64xf32>
    %213 = arith.addf %212, %211 : vector<16x64xf32>
    %cst_71 = arith.constant 5.000000e-01 : f32
    %214 = vector.broadcast %cst_71 : f32 to vector<16x64xf32>
    %215 = arith.mulf %214, %213 : vector<16x64xf32>
    %216 = arith.mulf %203, %215 : vector<16x64xf32>
    %c0_72 = arith.constant 0 : index
    %c0_73 = arith.constant 0 : index
    %c0_74 = arith.constant 0 : index
    %217 = vector.load %arg12[%c0_72, %c0_73, %c0_74] : memref<2x64x32xbf16, #tpu.memory_space<vmem>>, vector<1x64x32xbf16>
    %218 = vector.shape_cast %217 : vector<1x64x32xbf16> to vector<64x32xbf16>
    %219 = arith.truncf %216 : vector<16x64xf32> to vector<16x64xbf16>
    %cst_75 = arith.constant dense<0.000000e+00> : vector<16x32xf32>
    %220 = tpu.matmul %219, %218, %cst_75 {dimension_numbers = #tpu.dot_dimension_numbers<[1], [0], [0], [1], [0, 0, 1, 1], [], []>} : vector<16x64xbf16>, vector<64x32xbf16>, vector<16x32xf32> -> vector<16x32xf32>
    %c0_76 = arith.constant 0 : index
    %c0_77 = arith.constant 0 : index
    %c0_78 = arith.constant 0 : index
    %221 = vector.load %arg13[%c0_76, %c0_77, %c0_78] : memref<2x1x32xf32, #tpu.memory_space<vmem>>, vector<1x1x32xf32>
    %222 = vector.shape_cast %221 : vector<1x1x32xf32> to vector<1x32xf32>
    %223 = vector.broadcast %222 : vector<1x32xf32> to vector<16x32xf32>
    %224 = arith.addf %220, %223 : vector<16x32xf32>
    %225 = arith.addf %195, %224 : vector<16x32xf32>
    %c0_79 = arith.constant 0 : index
    %c0_80 = arith.constant 0 : index
    %c0_81 = arith.constant 0 : index
    %226 = vector.load %arg14[%c0_79, %c0_80, %c0_81] : memref<2x1x32xf32, #tpu.memory_space<vmem>>, vector<1x1x32xf32>
    %227 = vector.shape_cast %226 : vector<1x1x32xf32> to vector<1x32xf32>
    %c0_82 = arith.constant 0 : index
    %c0_83 = arith.constant 0 : index
    %c0_84 = arith.constant 0 : index
    %228 = vector.load %arg15[%c0_82, %c0_83, %c0_84] : memref<2x1x32xf32, #tpu.memory_space<vmem>>, vector<1x1x32xf32>
    %229 = vector.shape_cast %228 : vector<1x1x32xf32> to vector<1x32xf32>
    %cst_85 = arith.constant dense<0.000000e+00> : vector<16xf32>
    %230 = vector.multi_reduction <add>, %225, %cst_85 [1] : vector<16x32xf32> to vector<16xf32>
    %231 = vector.shape_cast %230 : vector<16xf32> to vector<16x1xf32>
    %cst_86 = arith.constant 3.200000e+01 : f32
    %232 = vector.broadcast %cst_86 : f32 to vector<16x1xf32>
    %233 = arith.divf %231, %232 : vector<16x1xf32>
    %234 = vector.broadcast %233 : vector<16x1xf32> to vector<16x32xf32>
    %235 = arith.subf %225, %234 : vector<16x32xf32>
    %236 = vector.broadcast %233 : vector<16x1xf32> to vector<16x32xf32>
    %237 = arith.subf %225, %236 : vector<16x32xf32>
    %238 = arith.mulf %235, %237 : vector<16x32xf32>
    %cst_87 = arith.constant dense<0.000000e+00> : vector<16xf32>
    %239 = vector.multi_reduction <add>, %238, %cst_87 [1] : vector<16x32xf32> to vector<16xf32>
    %240 = vector.shape_cast %239 : vector<16xf32> to vector<16x1xf32>
    %cst_88 = arith.constant 3.200000e+01 : f32
    %241 = vector.broadcast %cst_88 : f32 to vector<16x1xf32>
    %242 = arith.divf %240, %241 : vector<16x1xf32>
    %243 = vector.broadcast %233 : vector<16x1xf32> to vector<16x32xf32>
    %244 = arith.subf %225, %243 : vector<16x32xf32>
    %cst_89 = arith.constant 9.99999996E-13 : f32
    %245 = vector.broadcast %cst_89 : f32 to vector<16x1xf32>
    %246 = arith.addf %242, %245 : vector<16x1xf32>
    %247 = math.rsqrt %246 : vector<16x1xf32>
    %248 = vector.broadcast %247 : vector<16x1xf32> to vector<16x32xf32>
    %249 = arith.mulf %244, %248 : vector<16x32xf32>
    %250 = vector.broadcast %227 : vector<1x32xf32> to vector<16x32xf32>
    %251 = arith.mulf %249, %250 : vector<16x32xf32>
    %252 = vector.broadcast %229 : vector<1x32xf32> to vector<16x32xf32>
    %253 = arith.addf %251, %252 : vector<16x32xf32>
    %c1 = arith.constant 1 : index
    %c0_90 = arith.constant 0 : index
    %c0_91 = arith.constant 0 : index
    %254 = vector.load %arg4[%c1, %c0_90, %c0_91] : memref<2x32x96xbf16, #tpu.memory_space<vmem>>, vector<1x32x96xbf16>
    %255 = vector.shape_cast %254 : vector<1x32x96xbf16> to vector<32x96xbf16>
    %256 = arith.truncf %253 : vector<16x32xf32> to vector<16x32xbf16>
    %cst_92 = arith.constant dense<0.000000e+00> : vector<16x96xf32>
    %257 = tpu.matmul %256, %255, %cst_92 {dimension_numbers = #tpu.dot_dimension_numbers<[1], [0], [0], [1], [0, 0, 1, 1], [], []>} : vector<16x32xbf16>, vector<32x96xbf16>, vector<16x96xf32> -> vector<16x96xf32>
    %c1_93 = arith.constant 1 : index
    %c0_94 = arith.constant 0 : index
    %c0_95 = arith.constant 0 : index
    %258 = vector.load %arg5[%c1_93, %c0_94, %c0_95] : memref<2x1x96xf32, #tpu.memory_space<vmem>>, vector<1x1x96xf32>
    %259 = vector.shape_cast %258 : vector<1x1x96xf32> to vector<1x96xf32>
    %260 = vector.broadcast %259 : vector<1x96xf32> to vector<16x96xf32>
    %261 = arith.addf %257, %260 : vector<16x96xf32>
    %c1_96 = arith.constant 1 : index
    %c0_97 = arith.constant 0 : index
    %c0_98 = arith.constant 0 : index
    %262 = vector.load %arg6[%c1_96, %c0_97, %c0_98] : memref<2x32x32xbf16, #tpu.memory_space<vmem>>, vector<1x32x32xbf16>
    %263 = vector.shape_cast %262 : vector<1x32x32xbf16> to vector<32x32xbf16>
    %cst_99 = arith.constant 0.000000e+00 : f32
    %264 = vector.broadcast %cst_99 : f32 to vector<16x32xf32>
    %265 = vector.extract_strided_slice %261 {offsets = [0, 0], sizes = [16, 8], strides = [1, 1]} : vector<16x96xf32> to vector<16x8xf32>
    %266 = vector.shape_cast %265 : vector<16x8xf32> to vector<2x8x8xf32>
    %267 = vector.extract_strided_slice %261 {offsets = [0, 32], sizes = [16, 8], strides = [1, 1]} : vector<16x96xf32> to vector<16x8xf32>
    %268 = vector.shape_cast %267 : vector<16x8xf32> to vector<2x8x8xf32>
    %269 = vector.extract_strided_slice %261 {offsets = [0, 64], sizes = [16, 8], strides = [1, 1]} : vector<16x96xf32> to vector<16x8xf32>
    %270 = vector.shape_cast %269 : vector<16x8xf32> to vector<2x8x8xf32>
    %271 = arith.truncf %266 : vector<2x8x8xf32> to vector<2x8x8xbf16>
    %272 = arith.truncf %268 : vector<2x8x8xf32> to vector<2x8x8xbf16>
    "tpu.trace_start"() <{level = 10 : i32, message = "bqd,bkd->bqk"}> : () -> ()
    %cst_100 = arith.constant dense<0.000000e+00> : vector<2x8x8xf32>
    %273 = tpu.matmul %271, %272, %cst_100 {dimension_numbers = #tpu.dot_dimension_numbers<[2], [2], [1], [1], [0, 0, 0, 1, 1, 1], [0], [0]>} : vector<2x8x8xbf16>, vector<2x8x8xbf16>, vector<2x8x8xf32> -> vector<2x8x8xf32>
    "tpu.trace_stop"() : () -> ()
    %cst_101 = arith.constant 0.353553385 : f32
    %274 = vector.broadcast %cst_101 : f32 to vector<2x8x8xf32>
    %275 = arith.mulf %273, %274 : vector<2x8x8xf32>
    %276 = vector.broadcast %27 : vector<2x1x8xf32> to vector<2x8x8xf32>
    %277 = arith.addf %275, %276 : vector<2x8x8xf32>
    %cst_102 = arith.constant dense<0xFF800000> : vector<2x8xf32>
    %278 = vector.multi_reduction <maximumf>, %277, %cst_102 [2] : vector<2x8x8xf32> to vector<2x8xf32>
    %279 = vector.shape_cast %278 : vector<2x8xf32> to vector<2x8x1xf32>
    %280 = vector.broadcast %279 : vector<2x8x1xf32> to vector<2x8x8xf32>
    %281 = arith.subf %277, %280 : vector<2x8x8xf32>
    %282 = math.exp %281 : vector<2x8x8xf32>
    %cst_103 = arith.constant dense<0.000000e+00> : vector<2x8xf32>
    %283 = vector.multi_reduction <add>, %282, %cst_103 [2] : vector<2x8x8xf32> to vector<2x8xf32>
    %284 = vector.shape_cast %283 : vector<2x8xf32> to vector<2x8x1xf32>
    %285 = tpu.reciprocal %284 {approx = true} : vector<2x8x1xf32> -> vector<2x8x1xf32>
    %286 = vector.broadcast %285 : vector<2x8x1xf32> to vector<2x8x8xf32>
    %287 = arith.mulf %282, %286 : vector<2x8x8xf32>
    %288 = arith.truncf %287 : vector<2x8x8xf32> to vector<2x8x8xbf16>
    %289 = arith.truncf %270 : vector<2x8x8xf32> to vector<2x8x8xbf16>
    "tpu.trace_start"() <{level = 10 : i32, message = "bqk,bkd->bqd"}> : () -> ()
    %cst_104 = arith.constant dense<0.000000e+00> : vector<2x8x8xf32>
    %290 = tpu.matmul %288, %289, %cst_104 {dimension_numbers = #tpu.dot_dimension_numbers<[2], [1], [1], [2], [0, 0, 0, 1, 1, 2], [0], [0]>} : vector<2x8x8xbf16>, vector<2x8x8xbf16>, vector<2x8x8xf32> -> vector<2x8x8xf32>
    "tpu.trace_stop"() : () -> ()
    %291 = vector.shape_cast %290 : vector<2x8x8xf32> to vector<16x8xf32>
    %292 = vector.extract_strided_slice %263 {offsets = [0, 0], sizes = [8, 32], strides = [1, 1]} : vector<32x32xbf16> to vector<8x32xbf16>
    %293 = arith.truncf %291 : vector<16x8xf32> to vector<16x8xbf16>
    %cst_105 = arith.constant dense<0.000000e+00> : vector<16x32xf32>
    %294 = tpu.matmul %293, %292, %cst_105 {dimension_numbers = #tpu.dot_dimension_numbers<[1], [0], [0], [1], [0, 0, 1, 1], [], []>} : vector<16x8xbf16>, vector<8x32xbf16>, vector<16x32xf32> -> vector<16x32xf32>
    %295 = arith.addf %264, %294 : vector<16x32xf32>
    %296 = vector.extract_strided_slice %261 {offsets = [0, 8], sizes = [16, 8], strides = [1, 1]} : vector<16x96xf32> to vector<16x8xf32>
    %297 = vector.shape_cast %296 : vector<16x8xf32> to vector<2x8x8xf32>
    %298 = vector.extract_strided_slice %261 {offsets = [0, 40], sizes = [16, 8], strides = [1, 1]} : vector<16x96xf32> to vector<16x8xf32>
    %299 = vector.shape_cast %298 : vector<16x8xf32> to vector<2x8x8xf32>
    %300 = vector.extract_strided_slice %261 {offsets = [0, 72], sizes = [16, 8], strides = [1, 1]} : vector<16x96xf32> to vector<16x8xf32>
    %301 = vector.shape_cast %300 : vector<16x8xf32> to vector<2x8x8xf32>
    %302 = arith.truncf %297 : vector<2x8x8xf32> to vector<2x8x8xbf16>
    %303 = arith.truncf %299 : vector<2x8x8xf32> to vector<2x8x8xbf16>
    "tpu.trace_start"() <{level = 10 : i32, message = "bqd,bkd->bqk"}> : () -> ()
    %cst_106 = arith.constant dense<0.000000e+00> : vector<2x8x8xf32>
    %304 = tpu.matmul %302, %303, %cst_106 {dimension_numbers = #tpu.dot_dimension_numbers<[2], [2], [1], [1], [0, 0, 0, 1, 1, 1], [0], [0]>} : vector<2x8x8xbf16>, vector<2x8x8xbf16>, vector<2x8x8xf32> -> vector<2x8x8xf32>
    "tpu.trace_stop"() : () -> ()
    %cst_107 = arith.constant 0.353553385 : f32
    %305 = vector.broadcast %cst_107 : f32 to vector<2x8x8xf32>
    %306 = arith.mulf %304, %305 : vector<2x8x8xf32>
    %307 = vector.broadcast %27 : vector<2x1x8xf32> to vector<2x8x8xf32>
    %308 = arith.addf %306, %307 : vector<2x8x8xf32>
    %cst_108 = arith.constant dense<0xFF800000> : vector<2x8xf32>
    %309 = vector.multi_reduction <maximumf>, %308, %cst_108 [2] : vector<2x8x8xf32> to vector<2x8xf32>
    %310 = vector.shape_cast %309 : vector<2x8xf32> to vector<2x8x1xf32>
    %311 = vector.broadcast %310 : vector<2x8x1xf32> to vector<2x8x8xf32>
    %312 = arith.subf %308, %311 : vector<2x8x8xf32>
    %313 = math.exp %312 : vector<2x8x8xf32>
    %cst_109 = arith.constant dense<0.000000e+00> : vector<2x8xf32>
    %314 = vector.multi_reduction <add>, %313, %cst_109 [2] : vector<2x8x8xf32> to vector<2x8xf32>
    %315 = vector.shape_cast %314 : vector<2x8xf32> to vector<2x8x1xf32>
    %316 = tpu.reciprocal %315 {approx = true} : vector<2x8x1xf32> -> vector<2x8x1xf32>
    %317 = vector.broadcast %316 : vector<2x8x1xf32> to vector<2x8x8xf32>
    %318 = arith.mulf %313, %317 : vector<2x8x8xf32>
    %319 = arith.truncf %318 : vector<2x8x8xf32> to vector<2x8x8xbf16>
    %320 = arith.truncf %301 : vector<2x8x8xf32> to vector<2x8x8xbf16>
    "tpu.trace_start"() <{level = 10 : i32, message = "bqk,bkd->bqd"}> : () -> ()
    %cst_110 = arith.constant dense<0.000000e+00> : vector<2x8x8xf32>
    %321 = tpu.matmul %319, %320, %cst_110 {dimension_numbers = #tpu.dot_dimension_numbers<[2], [1], [1], [2], [0, 0, 0, 1, 1, 2], [0], [0]>} : vector<2x8x8xbf16>, vector<2x8x8xbf16>, vector<2x8x8xf32> -> vector<2x8x8xf32>
    "tpu.trace_stop"() : () -> ()
    %322 = vector.shape_cast %321 : vector<2x8x8xf32> to vector<16x8xf32>
    %323 = vector.extract_strided_slice %263 {offsets = [8, 0], sizes = [8, 32], strides = [1, 1]} : vector<32x32xbf16> to vector<8x32xbf16>
    %324 = arith.truncf %322 : vector<16x8xf32> to vector<16x8xbf16>
    %cst_111 = arith.constant dense<0.000000e+00> : vector<16x32xf32>
    %325 = tpu.matmul %324, %323, %cst_111 {dimension_numbers = #tpu.dot_dimension_numbers<[1], [0], [0], [1], [0, 0, 1, 1], [], []>} : vector<16x8xbf16>, vector<8x32xbf16>, vector<16x32xf32> -> vector<16x32xf32>
    %326 = arith.addf %295, %325 : vector<16x32xf32>
    %327 = vector.extract_strided_slice %261 {offsets = [0, 16], sizes = [16, 8], strides = [1, 1]} : vector<16x96xf32> to vector<16x8xf32>
    %328 = vector.shape_cast %327 : vector<16x8xf32> to vector<2x8x8xf32>
    %329 = vector.extract_strided_slice %261 {offsets = [0, 48], sizes = [16, 8], strides = [1, 1]} : vector<16x96xf32> to vector<16x8xf32>
    %330 = vector.shape_cast %329 : vector<16x8xf32> to vector<2x8x8xf32>
    %331 = vector.extract_strided_slice %261 {offsets = [0, 80], sizes = [16, 8], strides = [1, 1]} : vector<16x96xf32> to vector<16x8xf32>
    %332 = vector.shape_cast %331 : vector<16x8xf32> to vector<2x8x8xf32>
    %333 = arith.truncf %328 : vector<2x8x8xf32> to vector<2x8x8xbf16>
    %334 = arith.truncf %330 : vector<2x8x8xf32> to vector<2x8x8xbf16>
    "tpu.trace_start"() <{level = 10 : i32, message = "bqd,bkd->bqk"}> : () -> ()
    %cst_112 = arith.constant dense<0.000000e+00> : vector<2x8x8xf32>
    %335 = tpu.matmul %333, %334, %cst_112 {dimension_numbers = #tpu.dot_dimension_numbers<[2], [2], [1], [1], [0, 0, 0, 1, 1, 1], [0], [0]>} : vector<2x8x8xbf16>, vector<2x8x8xbf16>, vector<2x8x8xf32> -> vector<2x8x8xf32>
    "tpu.trace_stop"() : () -> ()
    %cst_113 = arith.constant 0.353553385 : f32
    %336 = vector.broadcast %cst_113 : f32 to vector<2x8x8xf32>
    %337 = arith.mulf %335, %336 : vector<2x8x8xf32>
    %338 = vector.broadcast %27 : vector<2x1x8xf32> to vector<2x8x8xf32>
    %339 = arith.addf %337, %338 : vector<2x8x8xf32>
    %cst_114 = arith.constant dense<0xFF800000> : vector<2x8xf32>
    %340 = vector.multi_reduction <maximumf>, %339, %cst_114 [2] : vector<2x8x8xf32> to vector<2x8xf32>
    %341 = vector.shape_cast %340 : vector<2x8xf32> to vector<2x8x1xf32>
    %342 = vector.broadcast %341 : vector<2x8x1xf32> to vector<2x8x8xf32>
    %343 = arith.subf %339, %342 : vector<2x8x8xf32>
    %344 = math.exp %343 : vector<2x8x8xf32>
    %cst_115 = arith.constant dense<0.000000e+00> : vector<2x8xf32>
    %345 = vector.multi_reduction <add>, %344, %cst_115 [2] : vector<2x8x8xf32> to vector<2x8xf32>
    %346 = vector.shape_cast %345 : vector<2x8xf32> to vector<2x8x1xf32>
    %347 = tpu.reciprocal %346 {approx = true} : vector<2x8x1xf32> -> vector<2x8x1xf32>
    %348 = vector.broadcast %347 : vector<2x8x1xf32> to vector<2x8x8xf32>
    %349 = arith.mulf %344, %348 : vector<2x8x8xf32>
    %350 = arith.truncf %349 : vector<2x8x8xf32> to vector<2x8x8xbf16>
    %351 = arith.truncf %332 : vector<2x8x8xf32> to vector<2x8x8xbf16>
    "tpu.trace_start"() <{level = 10 : i32, message = "bqk,bkd->bqd"}> : () -> ()
    %cst_116 = arith.constant dense<0.000000e+00> : vector<2x8x8xf32>
    %352 = tpu.matmul %350, %351, %cst_116 {dimension_numbers = #tpu.dot_dimension_numbers<[2], [1], [1], [2], [0, 0, 0, 1, 1, 2], [0], [0]>} : vector<2x8x8xbf16>, vector<2x8x8xbf16>, vector<2x8x8xf32> -> vector<2x8x8xf32>
    "tpu.trace_stop"() : () -> ()
    %353 = vector.shape_cast %352 : vector<2x8x8xf32> to vector<16x8xf32>
    %354 = vector.extract_strided_slice %263 {offsets = [16, 0], sizes = [8, 32], strides = [1, 1]} : vector<32x32xbf16> to vector<8x32xbf16>
    %355 = arith.truncf %353 : vector<16x8xf32> to vector<16x8xbf16>
    %cst_117 = arith.constant dense<0.000000e+00> : vector<16x32xf32>
    %356 = tpu.matmul %355, %354, %cst_117 {dimension_numbers = #tpu.dot_dimension_numbers<[1], [0], [0], [1], [0, 0, 1, 1], [], []>} : vector<16x8xbf16>, vector<8x32xbf16>, vector<16x32xf32> -> vector<16x32xf32>
    %357 = arith.addf %326, %356 : vector<16x32xf32>
    %358 = vector.extract_strided_slice %261 {offsets = [0, 24], sizes = [16, 8], strides = [1, 1]} : vector<16x96xf32> to vector<16x8xf32>
    %359 = vector.shape_cast %358 : vector<16x8xf32> to vector<2x8x8xf32>
    %360 = vector.extract_strided_slice %261 {offsets = [0, 56], sizes = [16, 8], strides = [1, 1]} : vector<16x96xf32> to vector<16x8xf32>
    %361 = vector.shape_cast %360 : vector<16x8xf32> to vector<2x8x8xf32>
    %362 = vector.extract_strided_slice %261 {offsets = [0, 88], sizes = [16, 8], strides = [1, 1]} : vector<16x96xf32> to vector<16x8xf32>
    %363 = vector.shape_cast %362 : vector<16x8xf32> to vector<2x8x8xf32>
    %364 = arith.truncf %359 : vector<2x8x8xf32> to vector<2x8x8xbf16>
    %365 = arith.truncf %361 : vector<2x8x8xf32> to vector<2x8x8xbf16>
    "tpu.trace_start"() <{level = 10 : i32, message = "bqd,bkd->bqk"}> : () -> ()
    %cst_118 = arith.constant dense<0.000000e+00> : vector<2x8x8xf32>
    %366 = tpu.matmul %364, %365, %cst_118 {dimension_numbers = #tpu.dot_dimension_numbers<[2], [2], [1], [1], [0, 0, 0, 1, 1, 1], [0], [0]>} : vector<2x8x8xbf16>, vector<2x8x8xbf16>, vector<2x8x8xf32> -> vector<2x8x8xf32>
    "tpu.trace_stop"() : () -> ()
    %cst_119 = arith.constant 0.353553385 : f32
    %367 = vector.broadcast %cst_119 : f32 to vector<2x8x8xf32>
    %368 = arith.mulf %366, %367 : vector<2x8x8xf32>
    %369 = vector.broadcast %27 : vector<2x1x8xf32> to vector<2x8x8xf32>
    %370 = arith.addf %368, %369 : vector<2x8x8xf32>
    %cst_120 = arith.constant dense<0xFF800000> : vector<2x8xf32>
    %371 = vector.multi_reduction <maximumf>, %370, %cst_120 [2] : vector<2x8x8xf32> to vector<2x8xf32>
    %372 = vector.shape_cast %371 : vector<2x8xf32> to vector<2x8x1xf32>
    %373 = vector.broadcast %372 : vector<2x8x1xf32> to vector<2x8x8xf32>
    %374 = arith.subf %370, %373 : vector<2x8x8xf32>
    %375 = math.exp %374 : vector<2x8x8xf32>
    %cst_121 = arith.constant dense<0.000000e+00> : vector<2x8xf32>
    %376 = vector.multi_reduction <add>, %375, %cst_121 [2] : vector<2x8x8xf32> to vector<2x8xf32>
    %377 = vector.shape_cast %376 : vector<2x8xf32> to vector<2x8x1xf32>
    %378 = tpu.reciprocal %377 {approx = true} : vector<2x8x1xf32> -> vector<2x8x1xf32>
    %379 = vector.broadcast %378 : vector<2x8x1xf32> to vector<2x8x8xf32>
    %380 = arith.mulf %375, %379 : vector<2x8x8xf32>
    %381 = arith.truncf %380 : vector<2x8x8xf32> to vector<2x8x8xbf16>
    %382 = arith.truncf %363 : vector<2x8x8xf32> to vector<2x8x8xbf16>
    "tpu.trace_start"() <{level = 10 : i32, message = "bqk,bkd->bqd"}> : () -> ()
    %cst_122 = arith.constant dense<0.000000e+00> : vector<2x8x8xf32>
    %383 = tpu.matmul %381, %382, %cst_122 {dimension_numbers = #tpu.dot_dimension_numbers<[2], [1], [1], [2], [0, 0, 0, 1, 1, 2], [0], [0]>} : vector<2x8x8xbf16>, vector<2x8x8xbf16>, vector<2x8x8xf32> -> vector<2x8x8xf32>
    "tpu.trace_stop"() : () -> ()
    %384 = vector.shape_cast %383 : vector<2x8x8xf32> to vector<16x8xf32>
    %385 = vector.extract_strided_slice %263 {offsets = [24, 0], sizes = [8, 32], strides = [1, 1]} : vector<32x32xbf16> to vector<8x32xbf16>
    %386 = arith.truncf %384 : vector<16x8xf32> to vector<16x8xbf16>
    %cst_123 = arith.constant dense<0.000000e+00> : vector<16x32xf32>
    %387 = tpu.matmul %386, %385, %cst_123 {dimension_numbers = #tpu.dot_dimension_numbers<[1], [0], [0], [1], [0, 0, 1, 1], [], []>} : vector<16x8xbf16>, vector<8x32xbf16>, vector<16x32xf32> -> vector<16x32xf32>
    %388 = arith.addf %357, %387 : vector<16x32xf32>
    %c1_124 = arith.constant 1 : index
    %c0_125 = arith.constant 0 : index
    %c0_126 = arith.constant 0 : index
    %389 = vector.load %arg7[%c1_124, %c0_125, %c0_126] : memref<2x1x32xf32, #tpu.memory_space<vmem>>, vector<1x1x32xf32>
    %390 = vector.shape_cast %389 : vector<1x1x32xf32> to vector<1x32xf32>
    %391 = vector.broadcast %390 : vector<1x32xf32> to vector<16x32xf32>
    %392 = arith.addf %388, %391 : vector<16x32xf32>
    %393 = arith.addf %253, %392 : vector<16x32xf32>
    %c1_127 = arith.constant 1 : index
    %c0_128 = arith.constant 0 : index
    %c0_129 = arith.constant 0 : index
    %394 = vector.load %arg8[%c1_127, %c0_128, %c0_129] : memref<2x1x32xf32, #tpu.memory_space<vmem>>, vector<1x1x32xf32>
    %395 = vector.shape_cast %394 : vector<1x1x32xf32> to vector<1x32xf32>
    %c1_130 = arith.constant 1 : index
    %c0_131 = arith.constant 0 : index
    %c0_132 = arith.constant 0 : index
    %396 = vector.load %arg9[%c1_130, %c0_131, %c0_132] : memref<2x1x32xf32, #tpu.memory_space<vmem>>, vector<1x1x32xf32>
    %397 = vector.shape_cast %396 : vector<1x1x32xf32> to vector<1x32xf32>
    %cst_133 = arith.constant dense<0.000000e+00> : vector<16xf32>
    %398 = vector.multi_reduction <add>, %393, %cst_133 [1] : vector<16x32xf32> to vector<16xf32>
    %399 = vector.shape_cast %398 : vector<16xf32> to vector<16x1xf32>
    %cst_134 = arith.constant 3.200000e+01 : f32
    %400 = vector.broadcast %cst_134 : f32 to vector<16x1xf32>
    %401 = arith.divf %399, %400 : vector<16x1xf32>
    %402 = vector.broadcast %401 : vector<16x1xf32> to vector<16x32xf32>
    %403 = arith.subf %393, %402 : vector<16x32xf32>
    %404 = vector.broadcast %401 : vector<16x1xf32> to vector<16x32xf32>
    %405 = arith.subf %393, %404 : vector<16x32xf32>
    %406 = arith.mulf %403, %405 : vector<16x32xf32>
    %cst_135 = arith.constant dense<0.000000e+00> : vector<16xf32>
    %407 = vector.multi_reduction <add>, %406, %cst_135 [1] : vector<16x32xf32> to vector<16xf32>
    %408 = vector.shape_cast %407 : vector<16xf32> to vector<16x1xf32>
    %cst_136 = arith.constant 3.200000e+01 : f32
    %409 = vector.broadcast %cst_136 : f32 to vector<16x1xf32>
    %410 = arith.divf %408, %409 : vector<16x1xf32>
    %411 = vector.broadcast %401 : vector<16x1xf32> to vector<16x32xf32>
    %412 = arith.subf %393, %411 : vector<16x32xf32>
    %cst_137 = arith.constant 9.99999996E-13 : f32
    %413 = vector.broadcast %cst_137 : f32 to vector<16x1xf32>
    %414 = arith.addf %410, %413 : vector<16x1xf32>
    %415 = math.rsqrt %414 : vector<16x1xf32>
    %416 = vector.broadcast %415 : vector<16x1xf32> to vector<16x32xf32>
    %417 = arith.mulf %412, %416 : vector<16x32xf32>
    %418 = vector.broadcast %395 : vector<1x32xf32> to vector<16x32xf32>
    %419 = arith.mulf %417, %418 : vector<16x32xf32>
    %420 = vector.broadcast %397 : vector<1x32xf32> to vector<16x32xf32>
    %421 = arith.addf %419, %420 : vector<16x32xf32>
    %c1_138 = arith.constant 1 : index
    %c0_139 = arith.constant 0 : index
    %c0_140 = arith.constant 0 : index
    %422 = vector.load %arg10[%c1_138, %c0_139, %c0_140] : memref<2x32x64xbf16, #tpu.memory_space<vmem>>, vector<1x32x64xbf16>
    %423 = vector.shape_cast %422 : vector<1x32x64xbf16> to vector<32x64xbf16>
    %424 = arith.truncf %421 : vector<16x32xf32> to vector<16x32xbf16>
    %cst_141 = arith.constant dense<0.000000e+00> : vector<16x64xf32>
    %425 = tpu.matmul %424, %423, %cst_141 {dimension_numbers = #tpu.dot_dimension_numbers<[1], [0], [0], [1], [0, 0, 1, 1], [], []>} : vector<16x32xbf16>, vector<32x64xbf16>, vector<16x64xf32> -> vector<16x64xf32>
    %c1_142 = arith.constant 1 : index
    %c0_143 = arith.constant 0 : index
    %c0_144 = arith.constant 0 : index
    %426 = vector.load %arg11[%c1_142, %c0_143, %c0_144] : memref<2x1x64xf32, #tpu.memory_space<vmem>>, vector<1x1x64xf32>
    %427 = vector.shape_cast %426 : vector<1x1x64xf32> to vector<1x64xf32>
    %428 = vector.broadcast %427 : vector<1x64xf32> to vector<16x64xf32>
    %429 = arith.addf %425, %428 : vector<16x64xf32>
    %430 = arith.mulf %429, %429 : vector<16x64xf32>
    %431 = arith.mulf %429, %430 : vector<16x64xf32>
    %cst_145 = arith.constant 4.471500e-02 : f32
    %432 = vector.broadcast %cst_145 : f32 to vector<16x64xf32>
    %433 = arith.mulf %432, %431 : vector<16x64xf32>
    %434 = arith.addf %429, %433 : vector<16x64xf32>
    %cst_146 = arith.constant 0.797884583 : f32
    %435 = vector.broadcast %cst_146 : f32 to vector<16x64xf32>
    %436 = arith.mulf %435, %434 : vector<16x64xf32>
    %437 = math.tanh %436 : vector<16x64xf32>
    %cst_147 = arith.constant 1.000000e+00 : f32
    %438 = vector.broadcast %cst_147 : f32 to vector<16x64xf32>
    %439 = arith.addf %438, %437 : vector<16x64xf32>
    %cst_148 = arith.constant 5.000000e-01 : f32
    %440 = vector.broadcast %cst_148 : f32 to vector<16x64xf32>
    %441 = arith.mulf %440, %439 : vector<16x64xf32>
    %442 = arith.mulf %429, %441 : vector<16x64xf32>
    %c1_149 = arith.constant 1 : index
    %c0_150 = arith.constant 0 : index
    %c0_151 = arith.constant 0 : index
    %443 = vector.load %arg12[%c1_149, %c0_150, %c0_151] : memref<2x64x32xbf16, #tpu.memory_space<vmem>>, vector<1x64x32xbf16>
    %444 = vector.shape_cast %443 : vector<1x64x32xbf16> to vector<64x32xbf16>
    %445 = arith.truncf %442 : vector<16x64xf32> to vector<16x64xbf16>
    %cst_152 = arith.constant dense<0.000000e+00> : vector<16x32xf32>
    %446 = tpu.matmul %445, %444, %cst_152 {dimension_numbers = #tpu.dot_dimension_numbers<[1], [0], [0], [1], [0, 0, 1, 1], [], []>} : vector<16x64xbf16>, vector<64x32xbf16>, vector<16x32xf32> -> vector<16x32xf32>
    %c1_153 = arith.constant 1 : index
    %c0_154 = arith.constant 0 : index
    %c0_155 = arith.constant 0 : index
    %447 = vector.load %arg13[%c1_153, %c0_154, %c0_155] : memref<2x1x32xf32, #tpu.memory_space<vmem>>, vector<1x1x32xf32>
    %448 = vector.shape_cast %447 : vector<1x1x32xf32> to vector<1x32xf32>
    %449 = vector.broadcast %448 : vector<1x32xf32> to vector<16x32xf32>
    %450 = arith.addf %446, %449 : vector<16x32xf32>
    %451 = arith.addf %421, %450 : vector<16x32xf32>
    %c1_156 = arith.constant 1 : index
    %c0_157 = arith.constant 0 : index
    %c0_158 = arith.constant 0 : index
    %452 = vector.load %arg14[%c1_156, %c0_157, %c0_158] : memref<2x1x32xf32, #tpu.memory_space<vmem>>, vector<1x1x32xf32>
    %453 = vector.shape_cast %452 : vector<1x1x32xf32> to vector<1x32xf32>
    %c1_159 = arith.constant 1 : index
    %c0_160 = arith.constant 0 : index
    %c0_161 = arith.constant 0 : index
    %454 = vector.load %arg15[%c1_159, %c0_160, %c0_161] : memref<2x1x32xf32, #tpu.memory_space<vmem>>, vector<1x1x32xf32>
    %455 = vector.shape_cast %454 : vector<1x1x32xf32> to vector<1x32xf32>
    %cst_162 = arith.constant dense<0.000000e+00> : vector<16xf32>
    %456 = vector.multi_reduction <add>, %451, %cst_162 [1] : vector<16x32xf32> to vector<16xf32>
    %457 = vector.shape_cast %456 : vector<16xf32> to vector<16x1xf32>
    %cst_163 = arith.constant 3.200000e+01 : f32
    %458 = vector.broadcast %cst_163 : f32 to vector<16x1xf32>
    %459 = arith.divf %457, %458 : vector<16x1xf32>
    %460 = vector.broadcast %459 : vector<16x1xf32> to vector<16x32xf32>
    %461 = arith.subf %451, %460 : vector<16x32xf32>
    %462 = vector.broadcast %459 : vector<16x1xf32> to vector<16x32xf32>
    %463 = arith.subf %451, %462 : vector<16x32xf32>
    %464 = arith.mulf %461, %463 : vector<16x32xf32>
    %cst_164 = arith.constant dense<0.000000e+00> : vector<16xf32>
    %465 = vector.multi_reduction <add>, %464, %cst_164 [1] : vector<16x32xf32> to vector<16xf32>
    %466 = vector.shape_cast %465 : vector<16xf32> to vector<16x1xf32>
    %cst_165 = arith.constant 3.200000e+01 : f32
    %467 = vector.broadcast %cst_165 : f32 to vector<16x1xf32>
    %468 = arith.divf %466, %467 : vector<16x1xf32>
    %469 = vector.broadcast %459 : vector<16x1xf32> to vector<16x32xf32>
    %470 = arith.subf %451, %469 : vector<16x32xf32>
    %cst_166 = arith.constant 9.99999996E-13 : f32
    %471 = vector.broadcast %cst_166 : f32 to vector<16x1xf32>
    %472 = arith.addf %468, %471 : vector<16x1xf32>
    %473 = math.rsqrt %472 : vector<16x1xf32>
    %474 = vector.broadcast %473 : vector<16x1xf32> to vector<16x32xf32>
    %475 = arith.mulf %470, %474 : vector<16x32xf32>
    %476 = vector.broadcast %453 : vector<1x32xf32> to vector<16x32xf32>
    %477 = arith.mulf %475, %476 : vector<16x32xf32>
    %478 = vector.broadcast %455 : vector<1x32xf32> to vector<16x32xf32>
    %479 = arith.addf %477, %478 : vector<16x32xf32>
    %480 = vector.shape_cast %479 : vector<16x32xf32> to vector<2x8x32xf32>
    %481 = vector.extract_strided_slice %480 {offsets = [0, 0, 0], sizes = [2, 1, 32], strides = [1, 1, 1]} : vector<2x8x32xf32> to vector<2x1x32xf32>
    %482 = vector.shape_cast %481 : vector<2x1x32xf32> to vector<2x32xf32>
    %c0_167 = arith.constant 0 : index
    %c0_168 = arith.constant 0 : index
    %483 = vector.load %arg16[%c0_167, %c0_168] : memref<32x128xbf16, #tpu.memory_space<vmem>>, vector<32x128xbf16>
    %484 = arith.truncf %482 : vector<2x32xf32> to vector<2x32xbf16>
    %cst_169 = arith.constant dense<0.000000e+00> : vector<2x128xf32>
    %485 = tpu.matmul %484, %483, %cst_169 {dimension_numbers = #tpu.dot_dimension_numbers<[1], [0], [0], [1], [0, 0, 1, 1], [], []>} : vector<2x32xbf16>, vector<32x128xbf16>, vector<2x128xf32> -> vector<2x128xf32>
    %c0_170 = arith.constant 0 : index
    %c0_171 = arith.constant 0 : index
    %486 = vector.load %arg17[%c0_170, %c0_171] : memref<1x128xf32, #tpu.memory_space<vmem>>, vector<1x128xf32>
    %487 = vector.broadcast %486 : vector<1x128xf32> to vector<2x128xf32>
    %488 = arith.addf %485, %487 : vector<2x128xf32>
    %c0_172 = arith.constant 0 : index
    %c0_173 = arith.constant 0 : index
    %489 = vector.load %arg18[%c0_172, %c0_173] : memref<2x128xf32, #tpu.memory_space<vmem>>, vector<2x128xf32>
    tpu.vector_store %arg18[%c0_172, %c0_173], %488 {strides = array<i32>} : memref<2x128xf32, #tpu.memory_space<vmem>>, vector<2x128xf32>,
    return
  }
}

</mosaic_0001>

<llo_original>
// kernel: _lambda_.1
$region0: #{_lambda_.1}
  #allocation0 [shape = 'u32[]', space=smem, size = 0x4, offset = 0x4, fixed_abs, tag = 'smem constant byte address 0x4 - core index']
  #allocation1 [shape = 'u32[144,128]{1,0:T(1,128)}', space=vmem, size = 0x12000, scoped, tag = 'internal scratch']
  %s0 = inlined_call_operand.vmem [shape: f32[16,32], index: 0, kind: input, shape index: {}]
  %s1 = inlined_call_operand.vmem [shape: f32[2,1,8], index: 1, kind: input, shape index: {}]
  %s2 = inlined_call_operand.vmem [shape: f32[1,32], index: 2, kind: input, shape index: {}]
  %s3 = inlined_call_operand.vmem [shape: f32[1,32], index: 3, kind: input, shape index: {}]
  %s4 = inlined_call_operand.vmem [shape: bf16[2,32,96], index: 4, kind: input, shape index: {}]
  %s5 = inlined_call_operand.vmem [shape: f32[2,1,96], index: 5, kind: input, shape index: {}]
  %s6 = inlined_call_operand.vmem [shape: bf16[2,32,32], index: 6, kind: input, shape index: {}]
  %s7 = inlined_call_operand.vmem [shape: f32[2,1,32], index: 7, kind: input, shape index: {}]
  %s8 = inlined_call_operand.vmem [shape: f32[2,1,32], index: 8, kind: input, shape index: {}]
  %s9 = inlined_call_operand.vmem [shape: f32[2,1,32], index: 9, kind: input, shape index: {}]
  %s10 = inlined_call_operand.vmem [shape: bf16[2,32,64], index: 10, kind: input, shape index: {}]
  %s11 = inlined_call_operand.vmem [shape: f32[2,1,64], index: 11, kind: input, shape index: {}]
  %s12 = inlined_call_operand.vmem [shape: bf16[2,64,32], index: 12, kind: input, shape index: {}]
  %s13 = inlined_call_operand.vmem [shape: f32[2,1,32], index: 13, kind: input, shape index: {}]
  %s14 = inlined_call_operand.vmem [shape: f32[2,1,32], index: 14, kind: input, shape index: {}]
  %s15 = inlined_call_operand.vmem [shape: f32[2,1,32], index: 15, kind: input, shape index: {}]
  %s16 = inlined_call_operand.vmem [shape: bf16[32,128], index: 16, kind: input, shape index: {}]
  %s17 = inlined_call_operand.vmem [shape: f32[1,128], index: 17, kind: input, shape index: {}]
  %s18 = inlined_call_operand.hbm [shape: f32[2,128], index: 18, kind: output, shape index: {}]
  %s19 = sld [smem:[#allocation0]]
  $region82: #{_lambda_.1} parent=0
    _
  %s21 = ssub.s32 1, %s19
  %s22 = scalar_select 0, %s21, %s19
  $region1: #{_lambda_.1} parent=0
    #allocation2 [shape = 'u8[1024]{0}', space=vmem, size = 0x400, scoped, tag = 'output window, operand 0, single buffered']
    #allocation3 [shape = 's32[1]{0}', space=sflag, size = 0x4, scoped, tag = 'scoped memory for _lambda_.1']
    %23 = vsyncpa [#allocation3], 0
    // Predicated region
    $region2: #{_lambda_.1} parent=1 // pred_check
      _
    $region3: #{_lambda_.1} parent=1 // pred_check_branch
      %25 = sbr.rel (0) target = $region5
    $region4: #{_lambda_.1} parent=1 // pred_region
      _
    $region5: #{_lambda_.1} parent=1 // pred_fallthru
      _
    // Predicated region
    $region6: #{_lambda_.1} parent=1 // pred_check
      _
    $region7: #{_lambda_.1} parent=1 // pred_check_branch
      %27 = sbr.rel (0) target = $region9
    $region8: #{_lambda_.1} parent=1 // pred_region
      _
    $region9: #{_lambda_.1} parent=1 // pred_fallthru
      _
    // Predicated region
    $region10: #{_lambda_.1} parent=1 // pred_check
      _
    $region11: #{_lambda_.1} parent=1 // pred_check_branch
      %29 = sbr.rel (0) target = $region13
    $region12: #{_lambda_.1} parent=1 // pred_region
      _
    $region13: #{_lambda_.1} parent=1 // pred_fallthru
      _
    // Predicated region
    $region14: #{_lambda_.1} parent=1 // pred_check
      _
    $region15: #{_lambda_.1} parent=1 // pred_check_branch
      %31 = sbr.rel (0) target = $region17
    $region16: #{_lambda_.1} parent=1 // pred_region
      _
    $region17: #{_lambda_.1} parent=1 // pred_fallthru
      _
    // Predicated region
    $region18: #{_lambda_.1} parent=1 // pred_check
      _
    $region19: #{_lambda_.1} parent=1 // pred_check_branch
      %33 = sbr.rel (0) target = $region21
    $region20: #{_lambda_.1} parent=1 // pred_region
      _
    $region21: #{_lambda_.1} parent=1 // pred_fallthru
      _
    // Predicated region
    $region22: #{_lambda_.1} parent=1 // pred_check
      _
    $region23: #{_lambda_.1} parent=1 // pred_check_branch
      %35 = sbr.rel (0) target = $region25
    $region24: #{_lambda_.1} parent=1 // pred_region
      _
    $region25: #{_lambda_.1} parent=1 // pred_fallthru
      _
    // Predicated region
    $region26: #{_lambda_.1} parent=1 // pred_check
      _
    $region27: #{_lambda_.1} parent=1 // pred_check_branch
      %37 = sbr.rel (0) target = $region29
    $region28: #{_lambda_.1} parent=1 // pred_region
      _
    $region29: #{_lambda_.1} parent=1 // pred_fallthru
      _
    // Predicated region
    $region30: #{_lambda_.1} parent=1 // pred_check
      _
    $region31: #{_lambda_.1} parent=1 // pred_check_branch
      %39 = sbr.rel (0) target = $region33
    $region32: #{_lambda_.1} parent=1 // pred_region
      _
    $region33: #{_lambda_.1} parent=1 // pred_fallthru
      _
    // Predicated region
    $region34: #{_lambda_.1} parent=1 // pred_check
      _
    $region35: #{_lambda_.1} parent=1 // pred_check_branch
      %41 = sbr.rel (0) target = $region37
    $region36: #{_lambda_.1} parent=1 // pred_region
      _
    $region37: #{_lambda_.1} parent=1 // pred_fallthru
      _
    // Predicated region
    $region38: #{_lambda_.1} parent=1 // pred_check
      _
    $region39: #{_lambda_.1} parent=1 // pred_check_branch
      %43 = sbr.rel (0) target = $region41
    $region40: #{_lambda_.1} parent=1 // pred_region
      _
    $region41: #{_lambda_.1} parent=1 // pred_fallthru
      _
    // Predicated region
    $region42: #{_lambda_.1} parent=1 // pred_check
      _
    $region43: #{_lambda_.1} parent=1 // pred_check_branch
      %45 = sbr.rel (0) target = $region45
    $region44: #{_lambda_.1} parent=1 // pred_region
      _
    $region45: #{_lambda_.1} parent=1 // pred_fallthru
      _
    // Predicated region
    $region46: #{_lambda_.1} parent=1 // pred_check
      _
    $region47: #{_lambda_.1} parent=1 // pred_check_branch
      %47 = sbr.rel (0) target = $region49
    $region48: #{_lambda_.1} parent=1 // pred_region
      _
    $region49: #{_lambda_.1} parent=1 // pred_fallthru
      _
    // Predicated region
    $region50: #{_lambda_.1} parent=1 // pred_check
      _
    $region51: #{_lambda_.1} parent=1 // pred_check_branch
      %49 = sbr.rel (0) target = $region53
    $region52: #{_lambda_.1} parent=1 // pred_region
      _
    $region53: #{_lambda_.1} parent=1 // pred_fallthru
      _
    // Predicated region
    $region54: #{_lambda_.1} parent=1 // pred_check
      _
    $region55: #{_lambda_.1} parent=1 // pred_check_branch
      %51 = sbr.rel (0) target = $region57
    $region56: #{_lambda_.1} parent=1 // pred_region
      _
    $region57: #{_lambda_.1} parent=1 // pred_fallthru
      _
    // Predicated region
    $region58: #{_lambda_.1} parent=1 // pred_check
      _
    $region59: #{_lambda_.1} parent=1 // pred_check_branch
      %53 = sbr.rel (0) target = $region61
    $region60: #{_lambda_.1} parent=1 // pred_region
      _
    $region61: #{_lambda_.1} parent=1 // pred_fallthru
      _
    // Predicated region
    $region62: #{_lambda_.1} parent=1 // pred_check
      _
    $region63: #{_lambda_.1} parent=1 // pred_check_branch
      %55 = sbr.rel (0) target = $region65
    $region64: #{_lambda_.1} parent=1 // pred_region
      _
    $region65: #{_lambda_.1} parent=1 // pred_fallthru
      _
    // Predicated region
    $region66: #{_lambda_.1} parent=1 // pred_check
      _
    $region67: #{_lambda_.1} parent=1 // pred_check_branch
      %57 = sbr.rel (0) target = $region69
    $region68: #{_lambda_.1} parent=1 // pred_region
      _
    $region69: #{_lambda_.1} parent=1 // pred_fallthru
      _
    // Predicated region
    $region70: #{_lambda_.1} parent=1 // pred_check
      _
    $region71: #{_lambda_.1} parent=1 // pred_check_branch
      %59 = sbr.rel (0) target = $region73
    $region72: #{_lambda_.1} parent=1 // pred_region
      _
    $region73: #{_lambda_.1} parent=1 // pred_fallthru
      _
    %v61 = vld [vmem:[%s0] sm:$0xff]
    %v62 = vld [vmem:[%s0 + $0x8] sm:$0xff]
    %v63 = vld [vmem:[%s2] sm:$0x1]
    %v64 = vld [vmem:[%s3] sm:$0x1]
    %vm65 = vcmask 261120
    %v66 = vsel %vm65, %v61, 0.0
    %67 = vadd.xlane.f32.xlu0 %v66
    %v68 = vpop.xlane.xlu0 %67
    %v69 = vsel %vm65, %v62, 0.0
    %70 = vadd.xlane.f32.xlu0 %v69
    %v71 = vpop.xlane.xlu0 %70
    %v72 = vrcp.pop 32.0
    %v73 = vmul.f32 %v68, %v72
    %v74 = vmul.f32 %v71, %v72
    %v75 = vsub.f32 %v61, %v73
    %v76 = vsub.f32 %v62, %v74
    %v77 = vmul.f32 %v75, %v75
    %v78 = vmul.f32 %v76, %v76
    %v79 = vsel %vm65, %v77, 0.0
    %80 = vadd.xlane.f32.xlu0 %v79
    %v81 = vpop.xlane.xlu0 %80
    %v82 = vsel %vm65, %v78, 0.0
    %83 = vadd.xlane.f32.xlu0 %v82
    %v84 = vpop.xlane.xlu0 %83
    %v85 = vmul.f32 %v81, %v72
    %v86 = vmul.f32 %v84, %v72
    %v87 = vadd.f32 %v85, 1e-12
    %v88 = vadd.f32 %v86, 1e-12
    %v89 = vrsqrt.pop %v87
    %v90 = vrsqrt.pop %v88
    %v91 = vmul.f32 %v75, %v89
    %v92 = vmul.f32 %v76, %v90
    %v94 = vlaneseq
    %v95 = vshrl.u32 %v94, 7
    %v96 = vsub.s32 0, %v95
    %v97 = vrot.slane %v63, %v96
    %v99 = vmul.f32 %v91, %v97
    %v100 = vmul.f32 %v92, %v97
    %v102 = vlaneseq
    %v103 = vshrl.u32 %v102, 7
    %v104 = vsub.s32 0, %v103
    %v105 = vrot.slane %v64, %v104
    %v107 = vadd.f32 %v99, %v105
    %v108 = vadd.f32 %v100, %v105
    %v109 = vld [vmem:[%s1] sm:$0x1]
    %v110 = vld [vmem:[%s1 + $0x1] sm:$0x1]
    %v111 = vld [vmem:[%s4] sm:$0xf]
    %v112 = vld [vmem:[%s4 + $0x4] sm:$0xf]
    %v113 = vld [vmem:[%s4 + $0x8] sm:$0xf]
    %v114 = vld [vmem:[%s4 + $0xc] sm:$0xf]
    %v115 = vpack.c.bf16 %v108, %v107
    %v116 = vld [vmem:[%s5] sm:$0x1]
    %v118 = vlaneseq
    %v119 = vshrl.u32 %v118, 7
    %v120 = vsub.s32 0, %v119
    %v121 = vrot.slane %v116, %v120
    %v127 = vunpack.c.l.b16 %v111
    %v128 = vunpack.c.l.b16 %v112
    %v129 = vunpack.c.l.b16 %v113
    %v130 = vunpack.c.l.b16 %v114
    %v131 = vpack.c.b16 %v128, %v127
    %v132 = vpack.c.b16 %v130, %v129
    %v136 = vsel %vm65, %v115, 0
    %138 = vmatprep.subr.bf16.mxu0 0
    %139 = vmatpush1.bf16.msra.mxu0 0
    %140 = vmatprep.subr.bf16.mxu0 0
    %141 = vmatpush1.bf16.msra.mxu0 0
    %142 = vmatprep.subr.bf16.mxu0 0
    %143 = vmatpush1.bf16.msra.mxu0 0
    %144 = vmatprep.subr.bf16.mxu0 0
    %145 = vmatpush1.bf16.msra.mxu0 0
    %146 = vmatprep.subr.bf16.mxu0 0
    %147 = vmatpush1.bf16.msra.mxu0 0
    %148 = vmatprep.subr.bf16.mxu0 0
    %149 = vmatpush1.bf16.msra.mxu0 0
    %150 = vmatprep.subr.bf16.mxu0 0
    %151 = vmatpush1.bf16.msra.mxu0 %v132
    %152 = vmatprep.subr.bf16.mxu0 0
    %153 = vmatpush1.bf16.msra.mxu0 %v131
    %154 = vmatprep.subr.bf16.mxu0 0
    %155 = vmatpush2.bf16.msra.mxu0 0
    %156 = vmatprep.subr.bf16.mxu0 0
    %157 = vmatpush2.bf16.msra.mxu0 0
    %158 = vmatprep.subr.bf16.mxu0 0
    %159 = vmatpush2.bf16.msra.mxu0 0
    %160 = vmatprep.subr.bf16.mxu0 0
    %161 = vmatpush2.bf16.msra.mxu0 0
    %162 = vmatprep.subr.bf16.mxu0 0
    %163 = vmatpush2.bf16.msra.mxu0 0
    %164 = vmatprep.subr.bf16.mxu0 0
    %165 = vmatpush2.bf16.msra.mxu0 0
    %166 = vmatprep.subr.bf16.mxu0 0
    %167 = vmatpush2.bf16.msra.mxu0 0
    %168 = vmatprep.subr.bf16.mxu0 0
    %169 = vmatpush2.bf16.msra.mxu0 0
    %170 = vmatprep.mubr.bf16.mxu0 0
    %171 = vmatmul.mubr.bf16.gmra.mxu0 %v136
    %v172 = vpop.f32.mrf.mxu0
    %v173 = vadd.f32 %v121, %v172
    %v174 = vpop.f32.mrf.mxu0
    %v175 = vpop.f32.mrf.mxu0
    %v176 = vadd.f32 %v121, %v175
    %v177 = vpop.f32.mrf.mxu0
    %178 = vdwg.mxu0
    %v179 = vld [vmem:[%s6] sm:$0xf]
    %v180 = vld [vmem:[%s6 + $0x4] sm:$0xf]
    %v181 = vld [vmem:[%s6 + $0x8] sm:$0xf]
    %v182 = vld [vmem:[%s6 + $0xc] sm:$0xf]
    %v183 = vpack.c.bf16 %v173, %v173
    %v184 = vpack.c.bf16 %v176, %v176
    %186 = vrot.lane.b32.xlu0 %v183, 96
    %v187 = vpop.permute.xlu0 %186
    %vm188 = vcmask 64512
    %v190 = vsel %vm188, %v183, 0
    %v193 = vsel %vm188, %v187, 0
    %195 = vmatprep.subr.bf16.mxu0 0
    %196 = vmatpush1.bf16.xpose.msra.mxu0 0
    %197 = vmatprep.subr.bf16.mxu0 0
    %198 = vmatpush1.bf16.xpose.msra.mxu0 0
    %199 = vmatprep.subr.bf16.mxu0 0
    %200 = vmatpush1.bf16.xpose.msra.mxu0 0
    %201 = vmatprep.subr.bf16.mxu0 0
    %202 = vmatpush1.bf16.xpose.msra.mxu0 0
    %203 = vmatprep.subr.bf16.mxu0 0
    %204 = vmatpush1.bf16.xpose.msra.mxu0 0
    %205 = vmatprep.subr.bf16.mxu0 0
    %206 = vmatpush1.bf16.xpose.msra.mxu0 0
    %207 = vmatprep.subr.bf16.mxu0 0
    %208 = vmatpush1.bf16.xpose.msra.mxu0 0
    %209 = vmatprep.subr.bf16.mxu0 0
    %210 = vmatpush1.bf16.xpose.msra.mxu0 %v193
    %211 = vmatprep.subr.bf16.mxu0 0
    %212 = vmatpush2.bf16.xpose.msra.mxu0 0
    %213 = vmatprep.subr.bf16.mxu0 0
    %214 = vmatpush2.bf16.xpose.msra.mxu0 0
    %215 = vmatprep.subr.bf16.mxu0 0
    %216 = vmatpush2.bf16.xpose.msra.mxu0 0
    %217 = vmatprep.subr.bf16.mxu0 0
    %218 = vmatpush2.bf16.xpose.msra.mxu0 0
    %219 = vmatprep.subr.bf16.mxu0 0
    %220 = vmatpush2.bf16.xpose.msra.mxu0 0
    %221 = vmatprep.subr.bf16.mxu0 0
    %222 = vmatpush2.bf16.xpose.msra.mxu0 0
    %223 = vmatprep.subr.bf16.mxu0 0
    %224 = vmatpush2.bf16.xpose.msra.mxu0 0
    %225 = vmatprep.subr.bf16.mxu0 0
    %226 = vmatpush2.bf16.xpose.msra.mxu0 0
    %227 = vmatprep.mubr.bf16.mxu0 0
    %228 = vmatmul.mubr.bf16.gmra.mxu0 %v190
    %v229 = vpop.f32.mrf.mxu0
    %v230 = vadd.f32 0.0, %v229
    %v231 = vpop.f32.mrf.mxu0
    %v232 = vpop.f32.mrf.mxu0
    %v233 = vpop.f32.mrf.mxu0
    %234 = vdwg.mxu0
    %236 = vrot.lane.b32.xlu0 %v184, 96
    %v237 = vpop.permute.xlu0 %236
    %v239 = vsel %vm188, %v184, 0
    %v242 = vsel %vm188, %v237, 0
    %244 = vmatprep.subr.bf16.mxu0 0
    %245 = vmatpush1.bf16.xpose.msra.mxu0 0
    %246 = vmatprep.subr.bf16.mxu0 0
    %247 = vmatpush1.bf16.xpose.msra.mxu0 0
    %248 = vmatprep.subr.bf16.mxu0 0
    %249 = vmatpush1.bf16.xpose.msra.mxu0 0
    %250 = vmatprep.subr.bf16.mxu0 0
    %251 = vmatpush1.bf16.xpose.msra.mxu0 0
    %252 = vmatprep.subr.bf16.mxu0 0
    %253 = vmatpush1.bf16.xpose.msra.mxu0 0
    %254 = vmatprep.subr.bf16.mxu0 0
    %255 = vmatpush1.bf16.xpose.msra.mxu0 0
    %256 = vmatprep.subr.bf16.mxu0 0
    %257 = vmatpush1.bf16.xpose.msra.mxu0 0
    %258 = vmatprep.subr.bf16.mxu0 0
    %259 = vmatpush1.bf16.xpose.msra.mxu0 %v242
    %260 = vmatprep.subr.bf16.mxu0 0
    %261 = vmatpush2.bf16.xpose.msra.mxu0 0
    %262 = vmatprep.subr.bf16.mxu0 0
    %263 = vmatpush2.bf16.xpose.msra.mxu0 0
    %264 = vmatprep.subr.bf16.mxu0 0
    %265 = vmatpush2.bf16.xpose.msra.mxu0 0
    %266 = vmatprep.subr.bf16.mxu0 0
    %267 = vmatpush2.bf16.xpose.msra.mxu0 0
    %268 = vmatprep.subr.bf16.mxu0 0
    %269 = vmatpush2.bf16.xpose.msra.mxu0 0
    %270 = vmatprep.subr.bf16.mxu0 0
    %271 = vmatpush2.bf16.xpose.msra.mxu0 0
    %272 = vmatprep.subr.bf16.mxu0 0
    %273 = vmatpush2.bf16.xpose.msra.mxu0 0
    %274 = vmatprep.subr.bf16.mxu0 0
    %275 = vmatpush2.bf16.xpose.msra.mxu0 0
    %276 = vmatprep.mubr.bf16.mxu0 0
    %277 = vmatmul.mubr.bf16.gmra.mxu0 %v239
    %v278 = vpop.f32.mrf.mxu0
    %v279 = vadd.f32 0.0, %v278
    %v280 = vpop.f32.mrf.mxu0
    %v281 = vpop.f32.mrf.mxu0
    %v282 = vpop.f32.mrf.mxu0
    %283 = vdwg.mxu0
    %v284 = vmul.f32 %v230, 0.35355338
    %v285 = vmul.f32 %v279, 0.35355338
    %v288 = vlaneseq
    %v289 = vshrl.u32 %v288, 7
    %v290 = vsub.s32 0, %v289
    %v291 = vrot.slane %v109, %v290
    %v292 = vlaneseq
    %v293 = vshrl.u32 %v292, 7
    %v294 = vsub.s32 0, %v293
    %v295 = vrot.slane %v110, %v294
    %v298 = vadd.f32 %v284, %v291
    %v299 = vadd.f32 %v285, %v295
    %v300 = vsel %vm188, %v298, -inf
    %301 = vmax.xlane.f32.xlu0 %v300
    %v302 = vpop.xlane.xlu0 %301
    %v303 = vsel %vm188, %v299, -inf
    %304 = vmax.xlane.f32.xlu0 %v303
    %v305 = vpop.xlane.xlu0 %304
    %v306 = vsub.f32 %v298, %v302
    %v307 = vsub.f32 %v299, %v305
    %v308 = vmul.f32 %v306, 1.442695
    %v309 = vpow.pop %v308
    %v310 = vmul.f32 %v307, 1.442695
    %v311 = vpow.pop %v310
    %v312 = vsel %vm188, %v309, 0.0
    %313 = vadd.xlane.f32.xlu0 %v312
    %v314 = vpop.xlane.xlu0 %313
    %v315 = vsel %vm188, %v311, 0.0
    %316 = vadd.xlane.f32.xlu0 %v315
    %v317 = vpop.xlane.xlu0 %316
    %v318 = vrcp.pop %v314
    %v319 = vrcp.pop %v317
    %v320 = vmul.f32 %v309, %v318
    %v321 = vmul.f32 %v311, %v319
    %v322 = vpack.c.bf16 %v320, %v320
    %v323 = vpack.c.bf16 %v321, %v321
    %324 = vrot.lane.b32.xlu0 %v183, 64
    %v325 = vpop.permute.xlu0 %324
    %v327 = vsel %vm188, %v322, 0
    %vm329 = vcmask 1043456
    %v331 = vsel %vm329, %v325, 0
    %333 = vmatprep.subr.bf16.mxu0 0
    %334 = vmatpush1.bf16.msra.mxu0 0
    %335 = vmatprep.subr.bf16.mxu0 0
    %336 = vmatpush1.bf16.msra.mxu0 0
    %337 = vmatprep.subr.bf16.mxu0 0
    %338 = vmatpush1.bf16.msra.mxu0 0
    %339 = vmatprep.subr.bf16.mxu0 0
    %340 = vmatpush1.bf16.msra.mxu0 0
    %341 = vmatprep.subr.bf16.mxu0 0
    %342 = vmatpush1.bf16.msra.mxu0 0
    %343 = vmatprep.subr.bf16.mxu0 0
    %344 = vmatpush1.bf16.msra.mxu0 0
    %345 = vmatprep.subr.bf16.mxu0 0
    %346 = vmatpush1.bf16.msra.mxu0 0
    %347 = vmatprep.subr.bf16.mxu0 0
    %348 = vmatpush1.bf16.msra.mxu0 %v331
    %349 = vmatprep.subr.bf16.mxu0 0
    %350 = vmatpush2.bf16.msra.mxu0 0
    %351 = vmatprep.subr.bf16.mxu0 0
    %352 = vmatpush2.bf16.msra.mxu0 0
    %353 = vmatprep.subr.bf16.mxu0 0
    %354 = vmatpush2.bf16.msra.mxu0 0
    %355 = vmatprep.subr.bf16.mxu0 0
    %356 = vmatpush2.bf16.msra.mxu0 0
    %357 = vmatprep.subr.bf16.mxu0 0
    %358 = vmatpush2.bf16.msra.mxu0 0
    %359 = vmatprep.subr.bf16.mxu0 0
    %360 = vmatpush2.bf16.msra.mxu0 0
    %361 = vmatprep.subr.bf16.mxu0 0
    %362 = vmatpush2.bf16.msra.mxu0 0
    %363 = vmatprep.subr.bf16.mxu0 0
    %364 = vmatpush2.bf16.msra.mxu0 0
    %365 = vmatprep.mubr.bf16.mxu0 0
    %366 = vmatmul.mubr.bf16.gmra.mxu0 %v327
    %v367 = vpop.f32.mrf.mxu0
    %v368 = vadd.f32 0.0, %v367
    %v369 = vpop.f32.mrf.mxu0
    %v370 = vpop.f32.mrf.mxu0
    %v371 = vpop.f32.mrf.mxu0
    %372 = vdwg.mxu0
    %373 = vrot.lane.b32.xlu0 %v184, 64
    %v374 = vpop.permute.xlu0 %373
    %v376 = vsel %vm188, %v323, 0
    %v379 = vsel %vm329, %v374, 0
    %381 = vmatprep.subr.bf16.mxu0 0
    %382 = vmatpush1.bf16.msra.mxu0 0
    %383 = vmatprep.subr.bf16.mxu0 0
    %384 = vmatpush1.bf16.msra.mxu0 0
    %385 = vmatprep.subr.bf16.mxu0 0
    %386 = vmatpush1.bf16.msra.mxu0 0
    %387 = vmatprep.subr.bf16.mxu0 0
    %388 = vmatpush1.bf16.msra.mxu0 0
    %389 = vmatprep.subr.bf16.mxu0 0
    %390 = vmatpush1.bf16.msra.mxu0 0
    %391 = vmatprep.subr.bf16.mxu0 0
    %392 = vmatpush1.bf16.msra.mxu0 0
    %393 = vmatprep.subr.bf16.mxu0 0
    %394 = vmatpush1.bf16.msra.mxu0 0
    %395 = vmatprep.subr.bf16.mxu0 0
    %396 = vmatpush1.bf16.msra.mxu0 %v379
    %397 = vmatprep.subr.bf16.mxu0 0
    %398 = vmatpush2.bf16.msra.mxu0 0
    %399 = vmatprep.subr.bf16.mxu0 0
    %400 = vmatpush2.bf16.msra.mxu0 0
    %401 = vmatprep.subr.bf16.mxu0 0
    %402 = vmatpush2.bf16.msra.mxu0 0
    %403 = vmatprep.subr.bf16.mxu0 0
    %404 = vmatpush2.bf16.msra.mxu0 0
    %405 = vmatprep.subr.bf16.mxu0 0
    %406 = vmatpush2.bf16.msra.mxu0 0
    %407 = vmatprep.subr.bf16.mxu0 0
    %408 = vmatpush2.bf16.msra.mxu0 0
    %409 = vmatprep.subr.bf16.mxu0 0
    %410 = vmatpush2.bf16.msra.mxu0 0
    %411 = vmatprep.subr.bf16.mxu0 0
    %412 = vmatpush2.bf16.msra.mxu0 0
    %413 = vmatprep.mubr.bf16.mxu0 0
    %414 = vmatmul.mubr.bf16.gmra.mxu0 %v376
    %v415 = vpop.f32.mrf.mxu0
    %v416 = vadd.f32 0.0, %v415
    %v417 = vpop.f32.mrf.mxu0
    %v418 = vpop.f32.mrf.mxu0
    %v419 = vpop.f32.mrf.mxu0
    %420 = vdwg.mxu0
    %v421 = vpack.c.bf16 %v416, %v368
    %422 = vrot.lane.b32.xlu0 %v183, 120
    %v423 = vpop.permute.xlu0 %422
    %424 = vrot.lane.b32.xlu0 %v183, 88
    %v425 = vpop.permute.xlu0 %424
    %v427 = vsel %vm188, %v423, 0
    %v430 = vsel %vm188, %v425, 0
    %432 = vmatprep.subr.bf16.mxu0 0
    %433 = vmatpush1.bf16.xpose.msra.mxu0 0
    %434 = vmatprep.subr.bf16.mxu0 0
    %435 = vmatpush1.bf16.xpose.msra.mxu0 0
    %436 = vmatprep.subr.bf16.mxu0 0
    %437 = vmatpush1.bf16.xpose.msra.mxu0 0
    %438 = vmatprep.subr.bf16.mxu0 0
    %439 = vmatpush1.bf16.xpose.msra.mxu0 0
    %440 = vmatprep.subr.bf16.mxu0 0
    %441 = vmatpush1.bf16.xpose.msra.mxu0 0
    %442 = vmatprep.subr.bf16.mxu0 0
    %443 = vmatpush1.bf16.xpose.msra.mxu0 0
    %444 = vmatprep.subr.bf16.mxu0 0
    %445 = vmatpush1.bf16.xpose.msra.mxu0 0
    %446 = vmatprep.subr.bf16.mxu0 0
    %447 = vmatpush1.bf16.xpose.msra.mxu0 %v430
    %448 = vmatprep.subr.bf16.mxu0 0
    %449 = vmatpush2.bf16.xpose.msra.mxu0 0
    %450 = vmatprep.subr.bf16.mxu0 0
    %451 = vmatpush2.bf16.xpose.msra.mxu0 0
    %452 = vmatprep.subr.bf16.mxu0 0
    %453 = vmatpush2.bf16.xpose.msra.mxu0 0
    %454 = vmatprep.subr.bf16.mxu0 0
    %455 = vmatpush2.bf16.xpose.msra.mxu0 0
    %456 = vmatprep.subr.bf16.mxu0 0
    %457 = vmatpush2.bf16.xpose.msra.mxu0 0
    %458 = vmatprep.subr.bf16.mxu0 0
    %459 = vmatpush2.bf16.xpose.msra.mxu0 0
    %460 = vmatprep.subr.bf16.mxu0 0
    %461 = vmatpush2.bf16.xpose.msra.mxu0 0
    %462 = vmatprep.subr.bf16.mxu0 0
    %463 = vmatpush2.bf16.xpose.msra.mxu0 0
    %464 = vmatprep.mubr.bf16.mxu0 0
    %465 = vmatmul.mubr.bf16.gmra.mxu0 %v427
    %v466 = vpop.f32.mrf.mxu0
    %v467 = vadd.f32 0.0, %v466
    %v468 = vpop.f32.mrf.mxu0
    %v469 = vpop.f32.mrf.mxu0
    %v470 = vpop.f32.mrf.mxu0
    %471 = vdwg.mxu0
    %472 = vrot.lane.b32.xlu0 %v184, 120
    %v473 = vpop.permute.xlu0 %472
    %474 = vrot.lane.b32.xlu0 %v184, 88
    %v475 = vpop.permute.xlu0 %474
    %v477 = vsel %vm188, %v473, 0
    %v480 = vsel %vm188, %v475, 0
    %482 = vmatprep.subr.bf16.mxu0 0
    %483 = vmatpush1.bf16.xpose.msra.mxu0 0
    %484 = vmatprep.subr.bf16.mxu0 0
    %485 = vmatpush1.bf16.xpose.msra.mxu0 0
    %486 = vmatprep.subr.bf16.mxu0 0
    %487 = vmatpush1.bf16.xpose.msra.mxu0 0
    %488 = vmatprep.subr.bf16.mxu0 0
    %489 = vmatpush1.bf16.xpose.msra.mxu0 0
    %490 = vmatprep.subr.bf16.mxu0 0
    %491 = vmatpush1.bf16.xpose.msra.mxu0 0
    %492 = vmatprep.subr.bf16.mxu0 0
    %493 = vmatpush1.bf16.xpose.msra.mxu0 0
    %494 = vmatprep.subr.bf16.mxu0 0
    %495 = vmatpush1.bf16.xpose.msra.mxu0 0
    %496 = vmatprep.subr.bf16.mxu0 0
    %497 = vmatpush1.bf16.xpose.msra.mxu0 %v480
    %498 = vmatprep.subr.bf16.mxu0 0
    %499 = vmatpush2.bf16.xpose.msra.mxu0 0
    %500 = vmatprep.subr.bf16.mxu0 0
    %501 = vmatpush2.bf16.xpose.msra.mxu0 0
    %502 = vmatprep.subr.bf16.mxu0 0
    %503 = vmatpush2.bf16.xpose.msra.mxu0 0
    %504 = vmatprep.subr.bf16.mxu0 0
    %505 = vmatpush2.bf16.xpose.msra.mxu0 0
    %506 = vmatprep.subr.bf16.mxu0 0
    %507 = vmatpush2.bf16.xpose.msra.mxu0 0
    %508 = vmatprep.subr.bf16.mxu0 0
    %509 = vmatpush2.bf16.xpose.msra.mxu0 0
    %510 = vmatprep.subr.bf16.mxu0 0
    %511 = vmatpush2.bf16.xpose.msra.mxu0 0
    %512 = vmatprep.subr.bf16.mxu0 0
    %513 = vmatpush2.bf16.xpose.msra.mxu0 0
    %514 = vmatprep.mubr.bf16.mxu0 0
    %515 = vmatmul.mubr.bf16.gmra.mxu0 %v477
    %v516 = vpop.f32.mrf.mxu0
    %v517 = vadd.f32 0.0, %v516
    %v518 = vpop.f32.mrf.mxu0
    %v519 = vpop.f32.mrf.mxu0
    %v520 = vpop.f32.mrf.mxu0
    %521 = vdwg.mxu0
    %v522 = vmul.f32 %v467, 0.35355338
    %v523 = vmul.f32 %v517, 0.35355338
    %v524 = vadd.f32 %v522, %v291
    %v525 = vadd.f32 %v523, %v295
    %v526 = vsel %vm188, %v524, -inf
    %527 = vmax.xlane.f32.xlu0 %v526
    %v528 = vpop.xlane.xlu0 %527
    %v529 = vsel %vm188, %v525, -inf
    %530 = vmax.xlane.f32.xlu0 %v529
    %v531 = vpop.xlane.xlu0 %530
    %v532 = vsub.f32 %v524, %v528
    %v533 = vsub.f32 %v525, %v531
    %v534 = vmul.f32 %v532, 1.442695
    %v535 = vpow.pop %v534
    %v536 = vmul.f32 %v533, 1.442695
    %v537 = vpow.pop %v536
    %v538 = vsel %vm188, %v535, 0.0
    %539 = vadd.xlane.f32.xlu0 %v538
    %v540 = vpop.xlane.xlu0 %539
    %v541 = vsel %vm188, %v537, 0.0
    %542 = vadd.xlane.f32.xlu0 %v541
    %v543 = vpop.xlane.xlu0 %542
    %v544 = vrcp.pop %v540
    %v545 = vrcp.pop %v543
    %v546 = vmul.f32 %v535, %v544
    %v547 = vmul.f32 %v537, %v545
    %v548 = vpack.c.bf16 %v546, %v546
    %v549 = vpack.c.bf16 %v547, %v547
    %550 = vrot.lane.b32.xlu0 %v183, 56
    %v551 = vpop.permute.xlu0 %550
    %v553 = vsel %vm188, %v548, 0
    %v556 = vsel %vm329, %v551, 0
    %558 = vmatprep.subr.bf16.mxu0 0
    %559 = vmatpush1.bf16.msra.mxu0 0
    %560 = vmatprep.subr.bf16.mxu0 0
    %561 = vmatpush1.bf16.msra.mxu0 0
    %562 = vmatprep.subr.bf16.mxu0 0
    %563 = vmatpush1.bf16.msra.mxu0 0
    %564 = vmatprep.subr.bf16.mxu0 0
    %565 = vmatpush1.bf16.msra.mxu0 0
    %566 = vmatprep.subr.bf16.mxu0 0
    %567 = vmatpush1.bf16.msra.mxu0 0
    %568 = vmatprep.subr.bf16.mxu0 0
    %569 = vmatpush1.bf16.msra.mxu0 0
    %570 = vmatprep.subr.bf16.mxu0 0
    %571 = vmatpush1.bf16.msra.mxu0 0
    %572 = vmatprep.subr.bf16.mxu0 0
    %573 = vmatpush1.bf16.msra.mxu0 %v556
    %574 = vmatprep.subr.bf16.mxu0 0
    %575 = vmatpush2.bf16.msra.mxu0 0
    %576 = vmatprep.subr.bf16.mxu0 0
    %577 = vmatpush2.bf16.msra.mxu0 0
    %578 = vmatprep.subr.bf16.mxu0 0
    %579 = vmatpush2.bf16.msra.mxu0 0
    %580 = vmatprep.subr.bf16.mxu0 0
    %581 = vmatpush2.bf16.msra.mxu0 0
    %582 = vmatprep.subr.bf16.mxu0 0
    %583 = vmatpush2.bf16.msra.mxu0 0
    %584 = vmatprep.subr.bf16.mxu0 0
    %585 = vmatpush2.bf16.msra.mxu0 0
    %586 = vmatprep.subr.bf16.mxu0 0
    %587 = vmatpush2.bf16.msra.mxu0 0
    %588 = vmatprep.subr.bf16.mxu0 0
    %589 = vmatpush2.bf16.msra.mxu0 0
    %590 = vmatprep.mubr.bf16.mxu0 0
    %591 = vmatmul.mubr.bf16.gmra.mxu0 %v553
    %v592 = vpop.f32.mrf.mxu0
    %v593 = vadd.f32 0.0, %v592
    %v594 = vpop.f32.mrf.mxu0
    %v595 = vpop.f32.mrf.mxu0
    %v596 = vpop.f32.mrf.mxu0
    %597 = vdwg.mxu0
    %598 = vrot.lane.b32.xlu0 %v184, 56
    %v599 = vpop.permute.xlu0 %598
    %v601 = vsel %vm188, %v549, 0
    %v604 = vsel %vm329, %v599, 0
    %606 = vmatprep.subr.bf16.mxu0 0
    %607 = vmatpush1.bf16.msra.mxu0 0
    %608 = vmatprep.subr.bf16.mxu0 0
    %609 = vmatpush1.bf16.msra.mxu0 0
    %610 = vmatprep.subr.bf16.mxu0 0
    %611 = vmatpush1.bf16.msra.mxu0 0
    %612 = vmatprep.subr.bf16.mxu0 0
    %613 = vmatpush1.bf16.msra.mxu0 0
    %614 = vmatprep.subr.bf16.mxu0 0
    %615 = vmatpush1.bf16.msra.mxu0 0
    %616 = vmatprep.subr.bf16.mxu0 0
    %617 = vmatpush1.bf16.msra.mxu0 0
    %618 = vmatprep.subr.bf16.mxu0 0
    %619 = vmatpush1.bf16.msra.mxu0 0
    %620 = vmatprep.subr.bf16.mxu0 0
    %621 = vmatpush1.bf16.msra.mxu0 %v604
    %622 = vmatprep.subr.bf16.mxu0 0
    %623 = vmatpush2.bf16.msra.mxu0 0
    %624 = vmatprep.subr.bf16.mxu0 0
    %625 = vmatpush2.bf16.msra.mxu0 0
    %626 = vmatprep.subr.bf16.mxu0 0
    %627 = vmatpush2.bf16.msra.mxu0 0
    %628 = vmatprep.subr.bf16.mxu0 0
    %629 = vmatpush2.bf16.msra.mxu0 0
    %630 = vmatprep.subr.bf16.mxu0 0
    %631 = vmatpush2.bf16.msra.mxu0 0
    %632 = vmatprep.subr.bf16.mxu0 0
    %633 = vmatpush2.bf16.msra.mxu0 0
    %634 = vmatprep.subr.bf16.mxu0 0
    %635 = vmatpush2.bf16.msra.mxu0 0
    %636 = vmatprep.subr.bf16.mxu0 0
    %637 = vmatpush2.bf16.msra.mxu0 0
    %638 = vmatprep.mubr.bf16.mxu0 0
    %639 = vmatmul.mubr.bf16.gmra.mxu0 %v601
    %v640 = vpop.f32.mrf.mxu0
    %v641 = vadd.f32 0.0, %v640
    %v642 = vpop.f32.mrf.mxu0
    %v643 = vpop.f32.mrf.mxu0
    %v644 = vpop.f32.mrf.mxu0
    %645 = vdwg.mxu0
    %v646 = vpack.c.bf16 %v641, %v593
    %v648 = vsel %vm188, %v646, 0
    %v651 = vsel %vm329, %v180, 0
    %653 = vmatprep.subr.bf16.mxu0 0
    %654 = vmatpush1.bf16.msra.mxu0 0
    %655 = vmatprep.subr.bf16.mxu0 0
    %656 = vmatpush1.bf16.msra.mxu0 0
    %657 = vmatprep.subr.bf16.mxu0 0
    %658 = vmatpush1.bf16.msra.mxu0 0
    %659 = vmatprep.subr.bf16.mxu0 0
    %660 = vmatpush1.bf16.msra.mxu0 0
    %661 = vmatprep.subr.bf16.mxu0 0
    %662 = vmatpush1.bf16.msra.mxu0 0
    %663 = vmatprep.subr.bf16.mxu0 0
    %664 = vmatpush1.bf16.msra.mxu0 0
    %665 = vmatprep.subr.bf16.mxu0 0
    %666 = vmatpush1.bf16.msra.mxu0 0
    %667 = vmatprep.subr.bf16.mxu0 0
    %668 = vmatpush1.bf16.msra.mxu0 %v651
    %669 = vmatprep.subr.bf16.mxu0 0
    %670 = vmatpush2.bf16.msra.mxu0 0
    %671 = vmatprep.subr.bf16.mxu0 0
    %672 = vmatpush2.bf16.msra.mxu0 0
    %673 = vmatprep.subr.bf16.mxu0 0
    %674 = vmatpush2.bf16.msra.mxu0 0
    %675 = vmatprep.subr.bf16.mxu0 0
    %676 = vmatpush2.bf16.msra.mxu0 0
    %677 = vmatprep.subr.bf16.mxu0 0
    %678 = vmatpush2.bf16.msra.mxu0 0
    %679 = vmatprep.subr.bf16.mxu0 0
    %680 = vmatpush2.bf16.msra.mxu0 0
    %681 = vmatprep.subr.bf16.mxu0 0
    %682 = vmatpush2.bf16.msra.mxu0 0
    %683 = vmatprep.subr.bf16.mxu0 0
    %684 = vmatpush2.bf16.msra.mxu0 0
    %685 = vmatprep.mubr.bf16.mxu0 0
    %686 = vmatmul.mubr.bf16.gmra.mxu0 %v648
    %v687 = vpop.f32.mrf.mxu0
    %v688 = vadd.f32 0.0, %v687
    %v689 = vpop.f32.mrf.mxu0
    %v690 = vpop.f32.mrf.mxu0
    %v691 = vadd.f32 0.0, %v690
    %v692 = vpop.f32.mrf.mxu0
    %693 = vdwg.mxu0
    %v695 = vsel %vm188, %v421, 0
    %v698 = vsel %vm329, %v179, 0
    %700 = vmatprep.subr.bf16.mxu0 0
    %701 = vmatpush1.bf16.msra.mxu0 0
    %702 = vmatprep.subr.bf16.mxu0 0
    %703 = vmatpush1.bf16.msra.mxu0 0
    %704 = vmatprep.subr.bf16.mxu0 0
    %705 = vmatpush1.bf16.msra.mxu0 0
    %706 = vmatprep.subr.bf16.mxu0 0
    %707 = vmatpush1.bf16.msra.mxu0 0
    %708 = vmatprep.subr.bf16.mxu0 0
    %709 = vmatpush1.bf16.msra.mxu0 0
    %710 = vmatprep.subr.bf16.mxu0 0
    %711 = vmatpush1.bf16.msra.mxu0 0
    %712 = vmatprep.subr.bf16.mxu0 0
    %713 = vmatpush1.bf16.msra.mxu0 0
    %714 = vmatprep.subr.bf16.mxu0 0
    %715 = vmatpush1.bf16.msra.mxu0 %v698
    %716 = vmatprep.subr.bf16.mxu0 0
    %717 = vmatpush2.bf16.msra.mxu0 0
    %718 = vmatprep.subr.bf16.mxu0 0
    %719 = vmatpush2.bf16.msra.mxu0 0
    %720 = vmatprep.subr.bf16.mxu0 0
    %721 = vmatpush2.bf16.msra.mxu0 0
    %722 = vmatprep.subr.bf16.mxu0 0
    %723 = vmatpush2.bf16.msra.mxu0 0
    %724 = vmatprep.subr.bf16.mxu0 0
    %725 = vmatpush2.bf16.msra.mxu0 0
    %726 = vmatprep.subr.bf16.mxu0 0
    %727 = vmatpush2.bf16.msra.mxu0 0
    %728 = vmatprep.subr.bf16.mxu0 0
    %729 = vmatpush2.bf16.msra.mxu0 0
    %730 = vmatprep.subr.bf16.mxu0 0
    %731 = vmatpush2.bf16.msra.mxu0 0
    %732 = vmatprep.mubr.bf16.mxu0 0
    %733 = vmatmul.mubr.bf16.gmra.mxu0 %v695
    %v734 = vpop.f32.mrf.mxu0
    %v735 = vadd.f32 %v688, %v734
    %v736 = vpop.f32.mrf.mxu0
    %v737 = vpop.f32.mrf.mxu0
    %v738 = vadd.f32 %v691, %v737
    %v739 = vpop.f32.mrf.mxu0
    %740 = vdwg.mxu0
    %741 = vrot.lane.b32.xlu0 %v183, 112
    %v742 = vpop.permute.xlu0 %741
    %743 = vrot.lane.b32.xlu0 %v183, 80
    %v744 = vpop.permute.xlu0 %743
    %v746 = vsel %vm188, %v742, 0
    %v749 = vsel %vm188, %v744, 0
    %751 = vmatprep.subr.bf16.mxu0 0
    %752 = vmatpush1.bf16.xpose.msra.mxu0 0
    %753 = vmatprep.subr.bf16.mxu0 0
    %754 = vmatpush1.bf16.xpose.msra.mxu0 0
    %755 = vmatprep.subr.bf16.mxu0 0
    %756 = vmatpush1.bf16.xpose.msra.mxu0 0
    %757 = vmatprep.subr.bf16.mxu0 0
    %758 = vmatpush1.bf16.xpose.msra.mxu0 0
    %759 = vmatprep.subr.bf16.mxu0 0
    %760 = vmatpush1.bf16.xpose.msra.mxu0 0
    %761 = vmatprep.subr.bf16.mxu0 0
    %762 = vmatpush1.bf16.xpose.msra.mxu0 0
    %763 = vmatprep.subr.bf16.mxu0 0
    %764 = vmatpush1.bf16.xpose.msra.mxu0 0
    %765 = vmatprep.subr.bf16.mxu0 0
    %766 = vmatpush1.bf16.xpose.msra.mxu0 %v749
    %767 = vmatprep.subr.bf16.mxu0 0
    %768 = vmatpush2.bf16.xpose.msra.mxu0 0
    %769 = vmatprep.subr.bf16.mxu0 0
    %770 = vmatpush2.bf16.xpose.msra.mxu0 0
    %771 = vmatprep.subr.bf16.mxu0 0
    %772 = vmatpush2.bf16.xpose.msra.mxu0 0
    %773 = vmatprep.subr.bf16.mxu0 0
    %774 = vmatpush2.bf16.xpose.msra.mxu0 0
    %775 = vmatprep.subr.bf16.mxu0 0
    %776 = vmatpush2.bf16.xpose.msra.mxu0 0
    %777 = vmatprep.subr.bf16.mxu0 0
    %778 = vmatpush2.bf16.xpose.msra.mxu0 0
    %779 = vmatprep.subr.bf16.mxu0 0
    %780 = vmatpush2.bf16.xpose.msra.mxu0 0
    %781 = vmatprep.subr.bf16.mxu0 0
    %782 = vmatpush2.bf16.xpose.msra.mxu0 0
    %783 = vmatprep.mubr.bf16.mxu0 0
    %784 = vmatmul.mubr.bf16.gmra.mxu0 %v746
    %v785 = vpop.f32.mrf.mxu0
    %v786 = vadd.f32 0.0, %v785
    %v787 = vpop.f32.mrf.mxu0
    %v788 = vpop.f32.mrf.mxu0
    %v789 = vpop.f32.mrf.mxu0
    %790 = vdwg.mxu0
    %791 = vrot.lane.b32.xlu0 %v184, 112
    %v792 = vpop.permute.xlu0 %791
    %793 = vrot.lane.b32.xlu0 %v184, 80
    %v794 = vpop.permute.xlu0 %793
    %v796 = vsel %vm188, %v792, 0
    %v799 = vsel %vm188, %v794, 0
    %801 = vmatprep.subr.bf16.mxu0 0
    %802 = vmatpush1.bf16.xpose.msra.mxu0 0
    %803 = vmatprep.subr.bf16.mxu0 0
    %804 = vmatpush1.bf16.xpose.msra.mxu0 0
    %805 = vmatprep.subr.bf16.mxu0 0
    %806 = vmatpush1.bf16.xpose.msra.mxu0 0
    %807 = vmatprep.subr.bf16.mxu0 0
    %808 = vmatpush1.bf16.xpose.msra.mxu0 0
    %809 = vmatprep.subr.bf16.mxu0 0
    %810 = vmatpush1.bf16.xpose.msra.mxu0 0
    %811 = vmatprep.subr.bf16.mxu0 0
    %812 = vmatpush1.bf16.xpose.msra.mxu0 0
    %813 = vmatprep.subr.bf16.mxu0 0
    %814 = vmatpush1.bf16.xpose.msra.mxu0 0
    %815 = vmatprep.subr.bf16.mxu0 0
    %816 = vmatpush1.bf16.xpose.msra.mxu0 %v799
    %817 = vmatprep.subr.bf16.mxu0 0
    %818 = vmatpush2.bf16.xpose.msra.mxu0 0
    %819 = vmatprep.subr.bf16.mxu0 0
    %820 = vmatpush2.bf16.xpose.msra.mxu0 0
    %821 = vmatprep.subr.bf16.mxu0 0
    %822 = vmatpush2.bf16.xpose.msra.mxu0 0
    %823 = vmatprep.subr.bf16.mxu0 0
    %824 = vmatpush2.bf16.xpose.msra.mxu0 0
    %825 = vmatprep.subr.bf16.mxu0 0
    %826 = vmatpush2.bf16.xpose.msra.mxu0 0
    %827 = vmatprep.subr.bf16.mxu0 0
    %828 = vmatpush2.bf16.xpose.msra.mxu0 0
    %829 = vmatprep.subr.bf16.mxu0 0
    %830 = vmatpush2.bf16.xpose.msra.mxu0 0
    %831 = vmatprep.subr.bf16.mxu0 0
    %832 = vmatpush2.bf16.xpose.msra.mxu0 0
    %833 = vmatprep.mubr.bf16.mxu0 0
    %834 = vmatmul.mubr.bf16.gmra.mxu0 %v796
    %v835 = vpop.f32.mrf.mxu0
    %v836 = vadd.f32 0.0, %v835
    %v837 = vpop.f32.mrf.mxu0
    %v838 = vpop.f32.mrf.mxu0
    %v839 = vpop.f32.mrf.mxu0
    %840 = vdwg.mxu0
    %v841 = vmul.f32 %v786, 0.35355338
    %v842 = vmul.f32 %v836, 0.35355338
    %v843 = vadd.f32 %v841, %v291
    %v844 = vadd.f32 %v842, %v295
    %v845 = vsel %vm188, %v843, -inf
    %846 = vmax.xlane.f32.xlu0 %v845
    %v847 = vpop.xlane.xlu0 %846
    %v848 = vsel %vm188, %v844, -inf
    %849 = vmax.xlane.f32.xlu0 %v848
    %v850 = vpop.xlane.xlu0 %849
    %v851 = vsub.f32 %v843, %v847
    %v852 = vsub.f32 %v844, %v850
    %v853 = vmul.f32 %v851, 1.442695
    %v854 = vpow.pop %v853
    %v855 = vmul.f32 %v852, 1.442695
    %v856 = vpow.pop %v855
    %v857 = vsel %vm188, %v854, 0.0
    %858 = vadd.xlane.f32.xlu0 %v857
    %v859 = vpop.xlane.xlu0 %858
    %v860 = vsel %vm188, %v856, 0.0
    %861 = vadd.xlane.f32.xlu0 %v860
    %v862 = vpop.xlane.xlu0 %861
    %v863 = vrcp.pop %v859
    %v864 = vrcp.pop %v862
    %v865 = vmul.f32 %v854, %v863
    %v866 = vmul.f32 %v856, %v864
    %v867 = vpack.c.bf16 %v865, %v865
    %v868 = vpack.c.bf16 %v866, %v866
    %869 = vrot.lane.b32.xlu0 %v183, 48
    %v870 = vpop.permute.xlu0 %869
    %v872 = vsel %vm188, %v867, 0
    %v875 = vsel %vm329, %v870, 0
    %877 = vmatprep.subr.bf16.mxu0 0
    %878 = vmatpush1.bf16.msra.mxu0 0
    %879 = vmatprep.subr.bf16.mxu0 0
    %880 = vmatpush1.bf16.msra.mxu0 0
    %881 = vmatprep.subr.bf16.mxu0 0
    %882 = vmatpush1.bf16.msra.mxu0 0
    %883 = vmatprep.subr.bf16.mxu0 0
    %884 = vmatpush1.bf16.msra.mxu0 0
    %885 = vmatprep.subr.bf16.mxu0 0
    %886 = vmatpush1.bf16.msra.mxu0 0
    %887 = vmatprep.subr.bf16.mxu0 0
    %888 = vmatpush1.bf16.msra.mxu0 0
    %889 = vmatprep.subr.bf16.mxu0 0
    %890 = vmatpush1.bf16.msra.mxu0 0
    %891 = vmatprep.subr.bf16.mxu0 0
    %892 = vmatpush1.bf16.msra.mxu0 %v875
    %893 = vmatprep.subr.bf16.mxu0 0
    %894 = vmatpush2.bf16.msra.mxu0 0
    %895 = vmatprep.subr.bf16.mxu0 0
    %896 = vmatpush2.bf16.msra.mxu0 0
    %897 = vmatprep.subr.bf16.mxu0 0
    %898 = vmatpush2.bf16.msra.mxu0 0
    %899 = vmatprep.subr.bf16.mxu0 0
    %900 = vmatpush2.bf16.msra.mxu0 0
    %901 = vmatprep.subr.bf16.mxu0 0
    %902 = vmatpush2.bf16.msra.mxu0 0
    %903 = vmatprep.subr.bf16.mxu0 0
    %904 = vmatpush2.bf16.msra.mxu0 0
    %905 = vmatprep.subr.bf16.mxu0 0
    %906 = vmatpush2.bf16.msra.mxu0 0
    %907 = vmatprep.subr.bf16.mxu0 0
    %908 = vmatpush2.bf16.msra.mxu0 0
    %909 = vmatprep.mubr.bf16.mxu0 0
    %910 = vmatmul.mubr.bf16.gmra.mxu0 %v872
    %v911 = vpop.f32.mrf.mxu0
    %v912 = vadd.f32 0.0, %v911
    %v913 = vpop.f32.mrf.mxu0
    %v914 = vpop.f32.mrf.mxu0
    %v915 = vpop.f32.mrf.mxu0
    %916 = vdwg.mxu0
    %917 = vrot.lane.b32.xlu0 %v184, 48
    %v918 = vpop.permute.xlu0 %917
    %v920 = vsel %vm188, %v868, 0
    %v923 = vsel %vm329, %v918, 0
    %925 = vmatprep.subr.bf16.mxu0 0
    %926 = vmatpush1.bf16.msra.mxu0 0
    %927 = vmatprep.subr.bf16.mxu0 0
    %928 = vmatpush1.bf16.msra.mxu0 0
    %929 = vmatprep.subr.bf16.mxu0 0
    %930 = vmatpush1.bf16.msra.mxu0 0
    %931 = vmatprep.subr.bf16.mxu0 0
    %932 = vmatpush1.bf16.msra.mxu0 0
    %933 = vmatprep.subr.bf16.mxu0 0
    %934 = vmatpush1.bf16.msra.mxu0 0
    %935 = vmatprep.subr.bf16.mxu0 0
    %936 = vmatpush1.bf16.msra.mxu0 0
    %937 = vmatprep.subr.bf16.mxu0 0
    %938 = vmatpush1.bf16.msra.mxu0 0
    %939 = vmatprep.subr.bf16.mxu0 0
    %940 = vmatpush1.bf16.msra.mxu0 %v923
    %941 = vmatprep.subr.bf16.mxu0 0
    %942 = vmatpush2.bf16.msra.mxu0 0
    %943 = vmatprep.subr.bf16.mxu0 0
    %944 = vmatpush2.bf16.msra.mxu0 0
    %945 = vmatprep.subr.bf16.mxu0 0
    %946 = vmatpush2.bf16.msra.mxu0 0
    %947 = vmatprep.subr.bf16.mxu0 0
    %948 = vmatpush2.bf16.msra.mxu0 0
    %949 = vmatprep.subr.bf16.mxu0 0
    %950 = vmatpush2.bf16.msra.mxu0 0
    %951 = vmatprep.subr.bf16.mxu0 0
    %952 = vmatpush2.bf16.msra.mxu0 0
    %953 = vmatprep.subr.bf16.mxu0 0
    %954 = vmatpush2.bf16.msra.mxu0 0
    %955 = vmatprep.subr.bf16.mxu0 0
    %956 = vmatpush2.bf16.msra.mxu0 0
    %957 = vmatprep.mubr.bf16.mxu0 0
    %958 = vmatmul.mubr.bf16.gmra.mxu0 %v920
    %v959 = vpop.f32.mrf.mxu0
    %v960 = vadd.f32 0.0, %v959
    %v961 = vpop.f32.mrf.mxu0
    %v962 = vpop.f32.mrf.mxu0
    %v963 = vpop.f32.mrf.mxu0
    %964 = vdwg.mxu0
    %v965 = vpack.c.bf16 %v960, %v912
    %v967 = vsel %vm188, %v965, 0
    %v970 = vsel %vm329, %v181, 0
    %972 = vmatprep.subr.bf16.mxu0 0
    %973 = vmatpush1.bf16.msra.mxu0 0
    %974 = vmatprep.subr.bf16.mxu0 0
    %975 = vmatpush1.bf16.msra.mxu0 0
    %976 = vmatprep.subr.bf16.mxu0 0
    %977 = vmatpush1.bf16.msra.mxu0 0
    %978 = vmatprep.subr.bf16.mxu0 0
    %979 = vmatpush1.bf16.msra.mxu0 0
    %980 = vmatprep.subr.bf16.mxu0 0
    %981 = vmatpush1.bf16.msra.mxu0 0
    %982 = vmatprep.subr.bf16.mxu0 0
    %983 = vmatpush1.bf16.msra.mxu0 0
    %984 = vmatprep.subr.bf16.mxu0 0
    %985 = vmatpush1.bf16.msra.mxu0 0
    %986 = vmatprep.subr.bf16.mxu0 0
    %987 = vmatpush1.bf16.msra.mxu0 %v970
    %988 = vmatprep.subr.bf16.mxu0 0
    %989 = vmatpush2.bf16.msra.mxu0 0
    %990 = vmatprep.subr.bf16.mxu0 0
    %991 = vmatpush2.bf16.msra.mxu0 0
    %992 = vmatprep.subr.bf16.mxu0 0
    %993 = vmatpush2.bf16.msra.mxu0 0
    %994 = vmatprep.subr.bf16.mxu0 0
    %995 = vmatpush2.bf16.msra.mxu0 0
    %996 = vmatprep.subr.bf16.mxu0 0
    %997 = vmatpush2.bf16.msra.mxu0 0
    %998 = vmatprep.subr.bf16.mxu0 0
    %999 = vmatpush2.bf16.msra.mxu0 0
    %1000 = vmatprep.subr.bf16.mxu0 0
    %1001 = vmatpush2.bf16.msra.mxu0 0
    %1002 = vmatprep.subr.bf16.mxu0 0
    %1003 = vmatpush2.bf16.msra.mxu0 0
    %1004 = vmatprep.mubr.bf16.mxu0 0
    %1005 = vmatmul.mubr.bf16.gmra.mxu0 %v967
    %v1006 = vpop.f32.mrf.mxu0
    %v1007 = vadd.f32 0.0, %v1006
    %v1008 = vpop.f32.mrf.mxu0
    %v1009 = vpop.f32.mrf.mxu0
    %v1010 = vadd.f32 0.0, %v1009
    %v1011 = vpop.f32.mrf.mxu0
    %1012 = vdwg.mxu0
    %v1013 = vadd.f32 %v735, %v1007
    %v1014 = vadd.f32 %v738, %v1010
    %1015 = vrot.lane.b32.xlu0 %v183, 104
    %v1016 = vpop.permute.xlu0 %1015
    %1017 = vrot.lane.b32.xlu0 %v183, 72
    %v1018 = vpop.permute.xlu0 %1017
    %v1020 = vsel %vm188, %v1016, 0
    %v1023 = vsel %vm188, %v1018, 0
    %1025 = vmatprep.subr.bf16.mxu0 0
    %1026 = vmatpush1.bf16.xpose.msra.mxu0 0
    %1027 = vmatprep.subr.bf16.mxu0 0
    %1028 = vmatpush1.bf16.xpose.msra.mxu0 0
    %1029 = vmatprep.subr.bf16.mxu0 0
    %1030 = vmatpush1.bf16.xpose.msra.mxu0 0
    %1031 = vmatprep.subr.bf16.mxu0 0
    %1032 = vmatpush1.bf16.xpose.msra.mxu0 0
    %1033 = vmatprep.subr.bf16.mxu0 0
    %1034 = vmatpush1.bf16.xpose.msra.mxu0 0
    %1035 = vmatprep.subr.bf16.mxu0 0
    %1036 = vmatpush1.bf16.xpose.msra.mxu0 0
    %1037 = vmatprep.subr.bf16.mxu0 0
    %1038 = vmatpush1.bf16.xpose.msra.mxu0 0
    %1039 = vmatprep.subr.bf16.mxu0 0
    %1040 = vmatpush1.bf16.xpose.msra.mxu0 %v1023
    %1041 = vmatprep.subr.bf16.mxu0 0
    %1042 = vmatpush2.bf16.xpose.msra.mxu0 0
    %1043 = vmatprep.subr.bf16.mxu0 0
    %1044 = vmatpush2.bf16.xpose.msra.mxu0 0
    %1045 = vmatprep.subr.bf16.mxu0 0
    %1046 = vmatpush2.bf16.xpose.msra.mxu0 0
    %1047 = vmatprep.subr.bf16.mxu0 0
    %1048 = vmatpush2.bf16.xpose.msra.mxu0 0
    %1049 = vmatprep.subr.bf16.mxu0 0
    %1050 = vmatpush2.bf16.xpose.msra.mxu0 0
    %1051 = vmatprep.subr.bf16.mxu0 0
    %1052 = vmatpush2.bf16.xpose.msra.mxu0 0
    %1053 = vmatprep.subr.bf16.mxu0 0
    %1054 = vmatpush2.bf16.xpose.msra.mxu0 0
    %1055 = vmatprep.subr.bf16.mxu0 0
    %1056 = vmatpush2.bf16.xpose.msra.mxu0 0
    %1057 = vmatprep.mubr.bf16.mxu0 0
    %1058 = vmatmul.mubr.bf16.gmra.mxu0 %v1020
    %v1059 = vpop.f32.mrf.mxu0
    %v1060 = vadd.f32 0.0, %v1059
    %v1061 = vpop.f32.mrf.mxu0
    %v1062 = vpop.f32.mrf.mxu0
    %v1063 = vpop.f32.mrf.mxu0
    %1064 = vdwg.mxu0
    %1065 = vrot.lane.b32.xlu0 %v184, 104
    %v1066 = vpop.permute.xlu0 %1065
    %1067 = vrot.lane.b32.xlu0 %v184, 72
    %v1068 = vpop.permute.xlu0 %1067
    %v1070 = vsel %vm188, %v1066, 0
    %v1073 = vsel %vm188, %v1068, 0
    %1075 = vmatprep.subr.bf16.mxu0 0
    %1076 = vmatpush1.bf16.xpose.msra.mxu0 0
    %1077 = vmatprep.subr.bf16.mxu0 0
    %1078 = vmatpush1.bf16.xpose.msra.mxu0 0
    %1079 = vmatprep.subr.bf16.mxu0 0
    %1080 = vmatpush1.bf16.xpose.msra.mxu0 0
    %1081 = vmatprep.subr.bf16.mxu0 0
    %1082 = vmatpush1.bf16.xpose.msra.mxu0 0
    %1083 = vmatprep.subr.bf16.mxu0 0
    %1084 = vmatpush1.bf16.xpose.msra.mxu0 0
    %1085 = vmatprep.subr.bf16.mxu0 0
    %1086 = vmatpush1.bf16.xpose.msra.mxu0 0
    %1087 = vmatprep.subr.bf16.mxu0 0
    %1088 = vmatpush1.bf16.xpose.msra.mxu0 0
    %1089 = vmatprep.subr.bf16.mxu0 0
    %1090 = vmatpush1.bf16.xpose.msra.mxu0 %v1073
    %1091 = vmatprep.subr.bf16.mxu0 0
    %1092 = vmatpush2.bf16.xpose.msra.mxu0 0
    %1093 = vmatprep.subr.bf16.mxu0 0
    %1094 = vmatpush2.bf16.xpose.msra.mxu0 0
    %1095 = vmatprep.subr.bf16.mxu0 0
    %1096 = vmatpush2.bf16.xpose.msra.mxu0 0
    %1097 = vmatprep.subr.bf16.mxu0 0
    %1098 = vmatpush2.bf16.xpose.msra.mxu0 0
    %1099 = vmatprep.subr.bf16.mxu0 0
    %1100 = vmatpush2.bf16.xpose.msra.mxu0 0
    %1101 = vmatprep.subr.bf16.mxu0 0
    %1102 = vmatpush2.bf16.xpose.msra.mxu0 0
    %1103 = vmatprep.subr.bf16.mxu0 0
    %1104 = vmatpush2.bf16.xpose.msra.mxu0 0
    %1105 = vmatprep.subr.bf16.mxu0 0
    %1106 = vmatpush2.bf16.xpose.msra.mxu0 0
    %1107 = vmatprep.mubr.bf16.mxu0 0
    %1108 = vmatmul.mubr.bf16.gmra.mxu0 %v1070
    %v1109 = vpop.f32.mrf.mxu0
    %v1110 = vadd.f32 0.0, %v1109
    %v1111 = vpop.f32.mrf.mxu0
    %v1112 = vpop.f32.mrf.mxu0
    %v1113 = vpop.f32.mrf.mxu0
    %1114 = vdwg.mxu0
    %v1115 = vmul.f32 %v1060, 0.35355338
    %v1116 = vmul.f32 %v1110, 0.35355338
    %v1117 = vadd.f32 %v1115, %v291
    %v1118 = vadd.f32 %v1116, %v295
    %v1119 = vsel %vm188, %v1117, -inf
    %1120 = vmax.xlane.f32.xlu0 %v1119
    %v1121 = vpop.xlane.xlu0 %1120
    %v1122 = vsel %vm188, %v1118, -inf
    %1123 = vmax.xlane.f32.xlu0 %v1122
    %v1124 = vpop.xlane.xlu0 %1123
    %v1125 = vsub.f32 %v1117, %v1121
    %v1126 = vsub.f32 %v1118, %v1124
    %v1127 = vmul.f32 %v1125, 1.442695
    %v1128 = vpow.pop %v1127
    %v1129 = vmul.f32 %v1126, 1.442695
    %v1130 = vpow.pop %v1129
    %v1131 = vsel %vm188, %v1128, 0.0
    %1132 = vadd.xlane.f32.xlu0 %v1131
    %v1133 = vpop.xlane.xlu0 %1132
    %v1134 = vsel %vm188, %v1130, 0.0
    %1135 = vadd.xlane.f32.xlu0 %v1134
    %v1136 = vpop.xlane.xlu0 %1135
    %v1137 = vrcp.pop %v1133
    %v1138 = vrcp.pop %v1136
    %v1139 = vmul.f32 %v1128, %v1137
    %v1140 = vmul.f32 %v1130, %v1138
    %v1141 = vpack.c.bf16 %v1139, %v1139
    %v1142 = vpack.c.bf16 %v1140, %v1140
    %1143 = vrot.lane.b32.xlu0 %v183, 40
    %v1144 = vpop.permute.xlu0 %1143
    %v1146 = vsel %vm188, %v1141, 0
    %v1149 = vsel %vm329, %v1144, 0
    %1151 = vmatprep.subr.bf16.mxu0 0
    %1152 = vmatpush1.bf16.msra.mxu0 0
    %1153 = vmatprep.subr.bf16.mxu0 0
    %1154 = vmatpush1.bf16.msra.mxu0 0
    %1155 = vmatprep.subr.bf16.mxu0 0
    %1156 = vmatpush1.bf16.msra.mxu0 0
    %1157 = vmatprep.subr.bf16.mxu0 0
    %1158 = vmatpush1.bf16.msra.mxu0 0
    %1159 = vmatprep.subr.bf16.mxu0 0
    %1160 = vmatpush1.bf16.msra.mxu0 0
    %1161 = vmatprep.subr.bf16.mxu0 0
    %1162 = vmatpush1.bf16.msra.mxu0 0
    %1163 = vmatprep.subr.bf16.mxu0 0
    %1164 = vmatpush1.bf16.msra.mxu0 0
    %1165 = vmatprep.subr.bf16.mxu0 0
    %1166 = vmatpush1.bf16.msra.mxu0 %v1149
    %1167 = vmatprep.subr.bf16.mxu0 0
    %1168 = vmatpush2.bf16.msra.mxu0 0
    %1169 = vmatprep.subr.bf16.mxu0 0
    %1170 = vmatpush2.bf16.msra.mxu0 0
    %1171 = vmatprep.subr.bf16.mxu0 0
    %1172 = vmatpush2.bf16.msra.mxu0 0
    %1173 = vmatprep.subr.bf16.mxu0 0
    %1174 = vmatpush2.bf16.msra.mxu0 0
    %1175 = vmatprep.subr.bf16.mxu0 0
    %1176 = vmatpush2.bf16.msra.mxu0 0
    %1177 = vmatprep.subr.bf16.mxu0 0
    %1178 = vmatpush2.bf16.msra.mxu0 0
    %1179 = vmatprep.subr.bf16.mxu0 0
    %1180 = vmatpush2.bf16.msra.mxu0 0
    %1181 = vmatprep.subr.bf16.mxu0 0
    %1182 = vmatpush2.bf16.msra.mxu0 0
    %1183 = vmatprep.mubr.bf16.mxu0 0
    %1184 = vmatmul.mubr.bf16.gmra.mxu0 %v1146
    %v1185 = vpop.f32.mrf.mxu0
    %v1186 = vadd.f32 0.0, %v1185
    %v1187 = vpop.f32.mrf.mxu0
    %v1188 = vpop.f32.mrf.mxu0
    %v1189 = vpop.f32.mrf.mxu0
    %1190 = vdwg.mxu0
    %1191 = vrot.lane.b32.xlu0 %v184, 40
    %v1192 = vpop.permute.xlu0 %1191
    %v1194 = vsel %vm188, %v1142, 0
    %v1197 = vsel %vm329, %v1192, 0
    %1199 = vmatprep.subr.bf16.mxu0 0
    %1200 = vmatpush1.bf16.msra.mxu0 0
    %1201 = vmatprep.subr.bf16.mxu0 0
    %1202 = vmatpush1.bf16.msra.mxu0 0
    %1203 = vmatprep.subr.bf16.mxu0 0
    %1204 = vmatpush1.bf16.msra.mxu0 0
    %1205 = vmatprep.subr.bf16.mxu0 0
    %1206 = vmatpush1.bf16.msra.mxu0 0
    %1207 = vmatprep.subr.bf16.mxu0 0
    %1208 = vmatpush1.bf16.msra.mxu0 0
    %1209 = vmatprep.subr.bf16.mxu0 0
    %1210 = vmatpush1.bf16.msra.mxu0 0
    %1211 = vmatprep.subr.bf16.mxu0 0
    %1212 = vmatpush1.bf16.msra.mxu0 0
    %1213 = vmatprep.subr.bf16.mxu0 0
    %1214 = vmatpush1.bf16.msra.mxu0 %v1197
    %1215 = vmatprep.subr.bf16.mxu0 0
    %1216 = vmatpush2.bf16.msra.mxu0 0
    %1217 = vmatprep.subr.bf16.mxu0 0
    %1218 = vmatpush2.bf16.msra.mxu0 0
    %1219 = vmatprep.subr.bf16.mxu0 0
    %1220 = vmatpush2.bf16.msra.mxu0 0
    %1221 = vmatprep.subr.bf16.mxu0 0
    %1222 = vmatpush2.bf16.msra.mxu0 0
    %1223 = vmatprep.subr.bf16.mxu0 0
    %1224 = vmatpush2.bf16.msra.mxu0 0
    %1225 = vmatprep.subr.bf16.mxu0 0
    %1226 = vmatpush2.bf16.msra.mxu0 0
    %1227 = vmatprep.subr.bf16.mxu0 0
    %1228 = vmatpush2.bf16.msra.mxu0 0
    %1229 = vmatprep.subr.bf16.mxu0 0
    %1230 = vmatpush2.bf16.msra.mxu0 0
    %1231 = vmatprep.mubr.bf16.mxu0 0
    %1232 = vmatmul.mubr.bf16.gmra.mxu0 %v1194
    %v1233 = vpop.f32.mrf.mxu0
    %v1234 = vadd.f32 0.0, %v1233
    %v1235 = vpop.f32.mrf.mxu0
    %v1236 = vpop.f32.mrf.mxu0
    %v1237 = vpop.f32.mrf.mxu0
    %1238 = vdwg.mxu0
    %v1239 = vpack.c.bf16 %v1234, %v1186
    %v1241 = vsel %vm188, %v1239, 0
    %v1244 = vsel %vm329, %v182, 0
    %1246 = vmatprep.subr.bf16.mxu0 0
    %1247 = vmatpush1.bf16.msra.mxu0 0
    %1248 = vmatprep.subr.bf16.mxu0 0
    %1249 = vmatpush1.bf16.msra.mxu0 0
    %1250 = vmatprep.subr.bf16.mxu0 0
    %1251 = vmatpush1.bf16.msra.mxu0 0
    %1252 = vmatprep.subr.bf16.mxu0 0
    %1253 = vmatpush1.bf16.msra.mxu0 0
    %1254 = vmatprep.subr.bf16.mxu0 0
    %1255 = vmatpush1.bf16.msra.mxu0 0
    %1256 = vmatprep.subr.bf16.mxu0 0
    %1257 = vmatpush1.bf16.msra.mxu0 0
    %1258 = vmatprep.subr.bf16.mxu0 0
    %1259 = vmatpush1.bf16.msra.mxu0 0
    %1260 = vmatprep.subr.bf16.mxu0 0
    %1261 = vmatpush1.bf16.msra.mxu0 %v1244
    %1262 = vmatprep.subr.bf16.mxu0 0
    %1263 = vmatpush2.bf16.msra.mxu0 0
    %1264 = vmatprep.subr.bf16.mxu0 0
    %1265 = vmatpush2.bf16.msra.mxu0 0
    %1266 = vmatprep.subr.bf16.mxu0 0
    %1267 = vmatpush2.bf16.msra.mxu0 0
    %1268 = vmatprep.subr.bf16.mxu0 0
    %1269 = vmatpush2.bf16.msra.mxu0 0
    %1270 = vmatprep.subr.bf16.mxu0 0
    %1271 = vmatpush2.bf16.msra.mxu0 0
    %1272 = vmatprep.subr.bf16.mxu0 0
    %1273 = vmatpush2.bf16.msra.mxu0 0
    %1274 = vmatprep.subr.bf16.mxu0 0
    %1275 = vmatpush2.bf16.msra.mxu0 0
    %1276 = vmatprep.subr.bf16.mxu0 0
    %1277 = vmatpush2.bf16.msra.mxu0 0
    %1278 = vmatprep.mubr.bf16.mxu0 0
    %1279 = vmatmul.mubr.bf16.gmra.mxu0 %v1241
    %v1280 = vpop.f32.mrf.mxu0
    %v1281 = vadd.f32 0.0, %v1280
    %v1282 = vpop.f32.mrf.mxu0
    %v1283 = vpop.f32.mrf.mxu0
    %v1284 = vadd.f32 0.0, %v1283
    %v1285 = vpop.f32.mrf.mxu0
    %1286 = vdwg.mxu0
    %v1287 = vadd.f32 %v1013, %v1281
    %v1288 = vadd.f32 %v1014, %v1284
    %v1289 = vld [vmem:[%s7] sm:$0x1]
    %v1291 = vlaneseq
    %v1292 = vshrl.u32 %v1291, 7
    %v1293 = vsub.s32 0, %v1292
    %v1294 = vrot.slane %v1289, %v1293
    %v1296 = vadd.f32 %v1287, %v1294
    %v1297 = vadd.f32 %v1288, %v1294
    %v1298 = vadd.f32 %v107, %v1296
    %v1299 = vadd.f32 %v108, %v1297
    %v1300 = vld [vmem:[%s8] sm:$0x1]
    %v1301 = vld [vmem:[%s9] sm:$0x1]
    %v1302 = vsel %vm65, %v1298, 0.0
    %1303 = vadd.xlane.f32.xlu0 %v1302
    %v1304 = vpop.xlane.xlu0 %1303
    %v1305 = vsel %vm65, %v1299, 0.0
    %1306 = vadd.xlane.f32.xlu0 %v1305
    %v1307 = vpop.xlane.xlu0 %1306
    %v1308 = vmul.f32 %v1304, %v72
    %v1309 = vmul.f32 %v1307, %v72
    %v1310 = vsub.f32 %v1298, %v1308
    %v1311 = vsub.f32 %v1299, %v1309
    %v1312 = vmul.f32 %v1310, %v1310
    %v1313 = vmul.f32 %v1311, %v1311
    %v1314 = vsel %vm65, %v1312, 0.0
    %1315 = vadd.xlane.f32.xlu0 %v1314
    %v1316 = vpop.xlane.xlu0 %1315
    %v1317 = vsel %vm65, %v1313, 0.0
    %1318 = vadd.xlane.f32.xlu0 %v1317
    %v1319 = vpop.xlane.xlu0 %1318
    %v1320 = vmul.f32 %v1316, %v72
    %v1321 = vmul.f32 %v1319, %v72
    %v1322 = vadd.f32 %v1320, 1e-12
    %v1323 = vadd.f32 %v1321, 1e-12
    %v1324 = vrsqrt.pop %v1322
    %v1325 = vrsqrt.pop %v1323
    %v1326 = vmul.f32 %v1310, %v1324
    %v1327 = vmul.f32 %v1311, %v1325
    %v1329 = vlaneseq
    %v1330 = vshrl.u32 %v1329, 7
    %v1331 = vsub.s32 0, %v1330
    %v1332 = vrot.slane %v1300, %v1331
    %v1334 = vmul.f32 %v1326, %v1332
    %v1335 = vmul.f32 %v1327, %v1332
    %v1337 = vlaneseq
    %v1338 = vshrl.u32 %v1337, 7
    %v1339 = vsub.s32 0, %v1338
    %v1340 = vrot.slane %v1301, %v1339
    %v1342 = vadd.f32 %v1334, %v1340
    %v1343 = vadd.f32 %v1335, %v1340
    %v1344 = vld [vmem:[%s10] sm:$0xf]
    %v1345 = vld [vmem:[%s10 + $0x4] sm:$0xf]
    %v1346 = vld [vmem:[%s10 + $0x8] sm:$0xf]
    %v1347 = vld [vmem:[%s10 + $0xc] sm:$0xf]
    %v1348 = vpack.c.bf16 %v1343, %v1342
    %v1349 = vld [vmem:[%s11] sm:$0x1]
    %v1351 = vlaneseq
    %v1352 = vshrl.u32 %v1351, 7
    %v1353 = vsub.s32 0, %v1352
    %v1354 = vrot.slane %v1349, %v1353
    %v1360 = vunpack.c.l.b16 %v1344
    %v1361 = vunpack.c.l.b16 %v1345
    %v1362 = vunpack.c.l.b16 %v1346
    %v1363 = vunpack.c.l.b16 %v1347
    %v1364 = vpack.c.b16 %v1361, %v1360
    %v1365 = vpack.c.b16 %v1363, %v1362
    %v1369 = vsel %vm65, %v1348, 0
    %1371 = vmatprep.subr.bf16.mxu0 0
    %1372 = vmatpush1.bf16.msra.mxu0 0
    %1373 = vmatprep.subr.bf16.mxu0 0
    %1374 = vmatpush1.bf16.msra.mxu0 0
    %1375 = vmatprep.subr.bf16.mxu0 0
    %1376 = vmatpush1.bf16.msra.mxu0 0
    %1377 = vmatprep.subr.bf16.mxu0 0
    %1378 = vmatpush1.bf16.msra.mxu0 0
    %1379 = vmatprep.subr.bf16.mxu0 0
    %1380 = vmatpush1.bf16.msra.mxu0 0
    %1381 = vmatprep.subr.bf16.mxu0 0
    %1382 = vmatpush1.bf16.msra.mxu0 0
    %1383 = vmatprep.subr.bf16.mxu0 0
    %1384 = vmatpush1.bf16.msra.mxu0 %v1365
    %1385 = vmatprep.subr.bf16.mxu0 0
    %1386 = vmatpush1.bf16.msra.mxu0 %v1364
    %1387 = vmatprep.subr.bf16.mxu0 0
    %1388 = vmatpush2.bf16.msra.mxu0 0
    %1389 = vmatprep.subr.bf16.mxu0 0
    %1390 = vmatpush2.bf16.msra.mxu0 0
    %1391 = vmatprep.subr.bf16.mxu0 0
    %1392 = vmatpush2.bf16.msra.mxu0 0
    %1393 = vmatprep.subr.bf16.mxu0 0
    %1394 = vmatpush2.bf16.msra.mxu0 0
    %1395 = vmatprep.subr.bf16.mxu0 0
    %1396 = vmatpush2.bf16.msra.mxu0 0
    %1397 = vmatprep.subr.bf16.mxu0 0
    %1398 = vmatpush2.bf16.msra.mxu0 0
    %1399 = vmatprep.subr.bf16.mxu0 0
    %1400 = vmatpush2.bf16.msra.mxu0 0
    %1401 = vmatprep.subr.bf16.mxu0 0
    %1402 = vmatpush2.bf16.msra.mxu0 0
    %1403 = vmatprep.mubr.bf16.mxu0 0
    %1404 = vmatmul.mubr.bf16.gmra.mxu0 %v1369
    %v1405 = vpop.f32.mrf.mxu0
    %v1406 = vadd.f32 %v1354, %v1405
    %v1407 = vpop.f32.mrf.mxu0
    %v1408 = vpop.f32.mrf.mxu0
    %v1409 = vadd.f32 %v1354, %v1408
    %v1410 = vpop.f32.mrf.mxu0
    %1411 = vdwg.mxu0
    %v1412 = vmul.f32 %v1406, %v1406
    %v1413 = vmul.f32 %v1409, %v1409
    %v1414 = vmul.f32 %v1406, %v1412
    %v1415 = vmul.f32 %v1409, %v1413
    %v1416 = vmul.f32 %v1414, 0.044715
    %v1417 = vmul.f32 %v1415, 0.044715
    %v1418 = vadd.f32 %v1406, %v1416
    %v1419 = vadd.f32 %v1409, %v1417
    %v1420 = vmul.f32 %v1418, 0.7978846
    %v1421 = vmul.f32 %v1419, 0.7978846
    %v1422 = vtanh.pop %v1420
    %v1423 = vtanh.pop %v1421
    %v1424 = vadd.f32 %v1422, 1.0
    %v1425 = vadd.f32 %v1423, 1.0
    %v1426 = vmul.f32 %v1424, 0.5
    %v1427 = vmul.f32 %v1425, 0.5
    %v1428 = vmul.f32 %v1406, %v1426
    %v1429 = vmul.f32 %v1409, %v1427
    %v1430 = vld [vmem:[%s12] sm:$0xf]
    %v1431 = vld [vmem:[%s12 + $0x4] sm:$0xf]
    %v1432 = vld [vmem:[%s12 + $0x8] sm:$0xf]
    %v1433 = vld [vmem:[%s12 + $0xc] sm:$0xf]
    %v1434 = vld [vmem:[%s12 + $0x10] sm:$0xf]
    %v1435 = vld [vmem:[%s12 + $0x14] sm:$0xf]
    %v1436 = vld [vmem:[%s12 + $0x18] sm:$0xf]
    %v1437 = vld [vmem:[%s12 + $0x1c] sm:$0xf]
    %v1438 = vpack.c.bf16 %v1429, %v1428
    %v1439 = vld [vmem:[%s13] sm:$0x1]
    %v1441 = vlaneseq
    %v1442 = vshrl.u32 %v1441, 7
    %v1443 = vsub.s32 0, %v1442
    %v1444 = vrot.slane %v1439, %v1443
    %v1454 = vunpack.c.l.b16 %v1430
    %v1455 = vunpack.c.l.b16 %v1431
    %v1456 = vunpack.c.l.b16 %v1432
    %v1457 = vunpack.c.l.b16 %v1433
    %v1458 = vunpack.c.l.b16 %v1434
    %v1459 = vunpack.c.l.b16 %v1435
    %v1460 = vunpack.c.l.b16 %v1436
    %v1461 = vunpack.c.l.b16 %v1437
    %v1462 = vpack.c.b16 %v1455, %v1454
    %v1463 = vpack.c.b16 %v1457, %v1456
    %v1464 = vpack.c.b16 %v1459, %v1458
    %v1465 = vpack.c.b16 %v1461, %v1460
    %vm1470 = vcmask 523264
    %v1472 = vsel %vm1470, %v1438, 0
    %1474 = vmatprep.subr.bf16.mxu0 0
    %1475 = vmatpush1.bf16.msra.mxu0 0
    %1476 = vmatprep.subr.bf16.mxu0 0
    %1477 = vmatpush1.bf16.msra.mxu0 0
    %1478 = vmatprep.subr.bf16.mxu0 0
    %1479 = vmatpush1.bf16.msra.mxu0 0
    %1480 = vmatprep.subr.bf16.mxu0 0
    %1481 = vmatpush1.bf16.msra.mxu0 0
    %1482 = vmatprep.subr.bf16.mxu0 0
    %1483 = vmatpush1.bf16.msra.mxu0 %v1465
    %1484 = vmatprep.subr.bf16.mxu0 0
    %1485 = vmatpush1.bf16.msra.mxu0 %v1464
    %1486 = vmatprep.subr.bf16.mxu0 0
    %1487 = vmatpush1.bf16.msra.mxu0 %v1463
    %1488 = vmatprep.subr.bf16.mxu0 0
    %1489 = vmatpush1.bf16.msra.mxu0 %v1462
    %1490 = vmatprep.subr.bf16.mxu0 0
    %1491 = vmatpush2.bf16.msra.mxu0 0
    %1492 = vmatprep.subr.bf16.mxu0 0
    %1493 = vmatpush2.bf16.msra.mxu0 0
    %1494 = vmatprep.subr.bf16.mxu0 0
    %1495 = vmatpush2.bf16.msra.mxu0 0
    %1496 = vmatprep.subr.bf16.mxu0 0
    %1497 = vmatpush2.bf16.msra.mxu0 0
    %1498 = vmatprep.subr.bf16.mxu0 0
    %1499 = vmatpush2.bf16.msra.mxu0 0
    %1500 = vmatprep.subr.bf16.mxu0 0
    %1501 = vmatpush2.bf16.msra.mxu0 0
    %1502 = vmatprep.subr.bf16.mxu0 0
    %1503 = vmatpush2.bf16.msra.mxu0 0
    %1504 = vmatprep.subr.bf16.mxu0 0
    %1505 = vmatpush2.bf16.msra.mxu0 0
    %1506 = vmatprep.mubr.bf16.mxu0 0
    %1507 = vmatmul.mubr.bf16.gmra.mxu0 %v1472
    %v1508 = vpop.f32.mrf.mxu0
    %v1509 = vadd.f32 %v1444, %v1508
    %v1510 = vpop.f32.mrf.mxu0
    %v1511 = vpop.f32.mrf.mxu0
    %v1512 = vadd.f32 %v1444, %v1511
    %v1513 = vpop.f32.mrf.mxu0
    %1514 = vdwg.mxu0
    %v1515 = vadd.f32 %v1342, %v1509
    %v1516 = vadd.f32 %v1343, %v1512
    %v1517 = vld [vmem:[%s14] sm:$0x1]
    %v1518 = vld [vmem:[%s15] sm:$0x1]
    %v1519 = vsel %vm65, %v1515, 0.0
    %1520 = vadd.xlane.f32.xlu0 %v1519
    %v1521 = vpop.xlane.xlu0 %1520
    %v1522 = vsel %vm65, %v1516, 0.0
    %1523 = vadd.xlane.f32.xlu0 %v1522
    %v1524 = vpop.xlane.xlu0 %1523
    %v1525 = vmul.f32 %v1521, %v72
    %v1526 = vmul.f32 %v1524, %v72
    %v1527 = vsub.f32 %v1515, %v1525
    %v1528 = vsub.f32 %v1516, %v1526
    %v1529 = vmul.f32 %v1527, %v1527
    %v1530 = vmul.f32 %v1528, %v1528
    %v1531 = vsel %vm65, %v1529, 0.0
    %1532 = vadd.xlane.f32.xlu0 %v1531
    %v1533 = vpop.xlane.xlu0 %1532
    %v1534 = vsel %vm65, %v1530, 0.0
    %1535 = vadd.xlane.f32.xlu0 %v1534
    %v1536 = vpop.xlane.xlu0 %1535
    %v1537 = vmul.f32 %v1533, %v72
    %v1538 = vmul.f32 %v1536, %v72
    %v1539 = vadd.f32 %v1537, 1e-12
    %v1540 = vadd.f32 %v1538, 1e-12
    %v1541 = vrsqrt.pop %v1539
    %v1542 = vrsqrt.pop %v1540
    %v1543 = vmul.f32 %v1527, %v1541
    %v1544 = vmul.f32 %v1528, %v1542
    %v1546 = vlaneseq
    %v1547 = vshrl.u32 %v1546, 7
    %v1548 = vsub.s32 0, %v1547
    %v1549 = vrot.slane %v1517, %v1548
    %v1551 = vmul.f32 %v1543, %v1549
    %v1552 = vmul.f32 %v1544, %v1549
    %v1554 = vlaneseq
    %v1555 = vshrl.u32 %v1554, 7
    %v1556 = vsub.s32 0, %v1555
    %v1557 = vrot.slane %v1518, %v1556
    %v1559 = vadd.f32 %v1551, %v1557
    %v1560 = vadd.f32 %v1552, %v1557
    %s1561 = scalar_lea.vmem %s4, 16
    %v1562 = vld [vmem:[%s1561] sm:$0xf]
    %v1563 = vld [vmem:[%s1561 + $0x4] sm:$0xf]
    %v1564 = vld [vmem:[%s1561 + $0x8] sm:$0xf]
    %v1565 = vld [vmem:[%s1561 + $0xc] sm:$0xf]
    %v1566 = vpack.c.bf16 %v1560, %v1559
    %s1567 = scalar_lea.vmem %s5, 1
    %v1568 = vld [vmem:[%s1567] sm:$0x1]
    %v1570 = vlaneseq
    %v1571 = vshrl.u32 %v1570, 7
    %v1572 = vsub.s32 0, %v1571
    %v1573 = vrot.slane %v1568, %v1572
    %v1579 = vunpack.c.l.b16 %v1562
    %v1580 = vunpack.c.l.b16 %v1563
    %v1581 = vunpack.c.l.b16 %v1564
    %v1582 = vunpack.c.l.b16 %v1565
    %v1583 = vpack.c.b16 %v1580, %v1579
    %v1584 = vpack.c.b16 %v1582, %v1581
    %v1588 = vsel %vm65, %v1566, 0
    %1590 = vmatprep.subr.bf16.mxu0 0
    %1591 = vmatpush1.bf16.msra.mxu0 0
    %1592 = vmatprep.subr.bf16.mxu0 0
    %1593 = vmatpush1.bf16.msra.mxu0 0
    %1594 = vmatprep.subr.bf16.mxu0 0
    %1595 = vmatpush1.bf16.msra.mxu0 0
    %1596 = vmatprep.subr.bf16.mxu0 0
    %1597 = vmatpush1.bf16.msra.mxu0 0
    %1598 = vmatprep.subr.bf16.mxu0 0
    %1599 = vmatpush1.bf16.msra.mxu0 0
    %1600 = vmatprep.subr.bf16.mxu0 0
    %1601 = vmatpush1.bf16.msra.mxu0 0
    %1602 = vmatprep.subr.bf16.mxu0 0
    %1603 = vmatpush1.bf16.msra.mxu0 %v1584
    %1604 = vmatprep.subr.bf16.mxu0 0
    %1605 = vmatpush1.bf16.msra.mxu0 %v1583
    %1606 = vmatprep.subr.bf16.mxu0 0
    %1607 = vmatpush2.bf16.msra.mxu0 0
    %1608 = vmatprep.subr.bf16.mxu0 0
    %1609 = vmatpush2.bf16.msra.mxu0 0
    %1610 = vmatprep.subr.bf16.mxu0 0
    %1611 = vmatpush2.bf16.msra.mxu0 0
    %1612 = vmatprep.subr.bf16.mxu0 0
    %1613 = vmatpush2.bf16.msra.mxu0 0
    %1614 = vmatprep.subr.bf16.mxu0 0
    %1615 = vmatpush2.bf16.msra.mxu0 0
    %1616 = vmatprep.subr.bf16.mxu0 0
    %1617 = vmatpush2.bf16.msra.mxu0 0
    %1618 = vmatprep.subr.bf16.mxu0 0
    %1619 = vmatpush2.bf16.msra.mxu0 0
    %1620 = vmatprep.subr.bf16.mxu0 0
    %1621 = vmatpush2.bf16.msra.mxu0 0
    %1622 = vmatprep.mubr.bf16.mxu0 0
    %1623 = vmatmul.mubr.bf16.gmra.mxu0 %v1588
    %v1624 = vpop.f32.mrf.mxu0
    %v1625 = vadd.f32 %v1573, %v1624
    %v1626 = vpop.f32.mrf.mxu0
    %v1627 = vpop.f32.mrf.mxu0
    %v1628 = vadd.f32 %v1573, %v1627
    %v1629 = vpop.f32.mrf.mxu0
    %1630 = vdwg.mxu0
    %s1631 = scalar_lea.vmem %s6, 16
    %v1632 = vld [vmem:[%s1631] sm:$0xf]
    %v1633 = vld [vmem:[%s1631 + $0x4] sm:$0xf]
    %v1634 = vld [vmem:[%s1631 + $0x8] sm:$0xf]
    %v1635 = vld [vmem:[%s1631 + $0xc] sm:$0xf]
    %v1636 = vpack.c.bf16 %v1625, %v1625
    %v1637 = vpack.c.bf16 %v1628, %v1628
    %1639 = vrot.lane.b32.xlu0 %v1636, 96
    %v1640 = vpop.permute.xlu0 %1639
    %v1642 = vsel %vm188, %v1636, 0
    %v1645 = vsel %vm188, %v1640, 0
    %1647 = vmatprep.subr.bf16.mxu0 0
    %1648 = vmatpush1.bf16.xpose.msra.mxu0 0
    %1649 = vmatprep.subr.bf16.mxu0 0
    %1650 = vmatpush1.bf16.xpose.msra.mxu0 0
    %1651 = vmatprep.subr.bf16.mxu0 0
    %1652 = vmatpush1.bf16.xpose.msra.mxu0 0
    %1653 = vmatprep.subr.bf16.mxu0 0
    %1654 = vmatpush1.bf16.xpose.msra.mxu0 0
    %1655 = vmatprep.subr.bf16.mxu0 0
    %1656 = vmatpush1.bf16.xpose.msra.mxu0 0
    %1657 = vmatprep.subr.bf16.mxu0 0
    %1658 = vmatpush1.bf16.xpose.msra.mxu0 0
    %1659 = vmatprep.subr.bf16.mxu0 0
    %1660 = vmatpush1.bf16.xpose.msra.mxu0 0
    %1661 = vmatprep.subr.bf16.mxu0 0
    %1662 = vmatpush1.bf16.xpose.msra.mxu0 %v1645
    %1663 = vmatprep.subr.bf16.mxu0 0
    %1664 = vmatpush2.bf16.xpose.msra.mxu0 0
    %1665 = vmatprep.subr.bf16.mxu0 0
    %1666 = vmatpush2.bf16.xpose.msra.mxu0 0
    %1667 = vmatprep.subr.bf16.mxu0 0
    %1668 = vmatpush2.bf16.xpose.msra.mxu0 0
    %1669 = vmatprep.subr.bf16.mxu0 0
    %1670 = vmatpush2.bf16.xpose.msra.mxu0 0
    %1671 = vmatprep.subr.bf16.mxu0 0
    %1672 = vmatpush2.bf16.xpose.msra.mxu0 0
    %1673 = vmatprep.subr.bf16.mxu0 0
    %1674 = vmatpush2.bf16.xpose.msra.mxu0 0
    %1675 = vmatprep.subr.bf16.mxu0 0
    %1676 = vmatpush2.bf16.xpose.msra.mxu0 0
    %1677 = vmatprep.subr.bf16.mxu0 0
    %1678 = vmatpush2.bf16.xpose.msra.mxu0 0
    %1679 = vmatprep.mubr.bf16.mxu0 0
    %1680 = vmatmul.mubr.bf16.gmra.mxu0 %v1642
    %v1681 = vpop.f32.mrf.mxu0
    %v1682 = vadd.f32 0.0, %v1681
    %v1683 = vpop.f32.mrf.mxu0
    %v1684 = vpop.f32.mrf.mxu0
    %v1685 = vpop.f32.mrf.mxu0
    %1686 = vdwg.mxu0
    %1688 = vrot.lane.b32.xlu0 %v1637, 96
    %v1689 = vpop.permute.xlu0 %1688
    %v1691 = vsel %vm188, %v1637, 0
    %v1694 = vsel %vm188, %v1689, 0
    %1696 = vmatprep.subr.bf16.mxu0 0
    %1697 = vmatpush1.bf16.xpose.msra.mxu0 0
    %1698 = vmatprep.subr.bf16.mxu0 0
    %1699 = vmatpush1.bf16.xpose.msra.mxu0 0
    %1700 = vmatprep.subr.bf16.mxu0 0
    %1701 = vmatpush1.bf16.xpose.msra.mxu0 0
    %1702 = vmatprep.subr.bf16.mxu0 0
    %1703 = vmatpush1.bf16.xpose.msra.mxu0 0
    %1704 = vmatprep.subr.bf16.mxu0 0
    %1705 = vmatpush1.bf16.xpose.msra.mxu0 0
    %1706 = vmatprep.subr.bf16.mxu0 0
    %1707 = vmatpush1.bf16.xpose.msra.mxu0 0
    %1708 = vmatprep.subr.bf16.mxu0 0
    %1709 = vmatpush1.bf16.xpose.msra.mxu0 0
    %1710 = vmatprep.subr.bf16.mxu0 0
    %1711 = vmatpush1.bf16.xpose.msra.mxu0 %v1694
    %1712 = vmatprep.subr.bf16.mxu0 0
    %1713 = vmatpush2.bf16.xpose.msra.mxu0 0
    %1714 = vmatprep.subr.bf16.mxu0 0
    %1715 = vmatpush2.bf16.xpose.msra.mxu0 0
    %1716 = vmatprep.subr.bf16.mxu0 0
    %1717 = vmatpush2.bf16.xpose.msra.mxu0 0
    %1718 = vmatprep.subr.bf16.mxu0 0
    %1719 = vmatpush2.bf16.xpose.msra.mxu0 0
    %1720 = vmatprep.subr.bf16.mxu0 0
    %1721 = vmatpush2.bf16.xpose.msra.mxu0 0
    %1722 = vmatprep.subr.bf16.mxu0 0
    %1723 = vmatpush2.bf16.xpose.msra.mxu0 0
    %1724 = vmatprep.subr.bf16.mxu0 0
    %1725 = vmatpush2.bf16.xpose.msra.mxu0 0
    %1726 = vmatprep.subr.bf16.mxu0 0
    %1727 = vmatpush2.bf16.xpose.msra.mxu0 0
    %1728 = vmatprep.mubr.bf16.mxu0 0
    %1729 = vmatmul.mubr.bf16.gmra.mxu0 %v1691
    %v1730 = vpop.f32.mrf.mxu0
    %v1731 = vadd.f32 0.0, %v1730
    %v1732 = vpop.f32.mrf.mxu0
    %v1733 = vpop.f32.mrf.mxu0
    %v1734 = vpop.f32.mrf.mxu0
    %1735 = vdwg.mxu0
    %v1736 = vmul.f32 %v1682, 0.35355338
    %v1737 = vmul.f32 %v1731, 0.35355338
    %v1738 = vadd.f32 %v1736, %v291
    %v1739 = vadd.f32 %v1737, %v295
    %v1740 = vsel %vm188, %v1738, -inf
    %1741 = vmax.xlane.f32.xlu0 %v1740
    %v1742 = vpop.xlane.xlu0 %1741
    %v1743 = vsel %vm188, %v1739, -inf
    %1744 = vmax.xlane.f32.xlu0 %v1743
    %v1745 = vpop.xlane.xlu0 %1744
    %v1746 = vsub.f32 %v1738, %v1742
    %v1747 = vsub.f32 %v1739, %v1745
    %v1748 = vmul.f32 %v1746, 1.442695
    %v1749 = vpow.pop %v1748
    %v1750 = vmul.f32 %v1747, 1.442695
    %v1751 = vpow.pop %v1750
    %v1752 = vsel %vm188, %v1749, 0.0
    %1753 = vadd.xlane.f32.xlu0 %v1752
    %v1754 = vpop.xlane.xlu0 %1753
    %v1755 = vsel %vm188, %v1751, 0.0
    %1756 = vadd.xlane.f32.xlu0 %v1755
    %v1757 = vpop.xlane.xlu0 %1756
    %v1758 = vrcp.pop %v1754
    %v1759 = vrcp.pop %v1757
    %v1760 = vmul.f32 %v1749, %v1758
    %v1761 = vmul.f32 %v1751, %v1759
    %v1762 = vpack.c.bf16 %v1760, %v1760
    %v1763 = vpack.c.bf16 %v1761, %v1761
    %1764 = vrot.lane.b32.xlu0 %v1636, 64
    %v1765 = vpop.permute.xlu0 %1764
    %v1767 = vsel %vm188, %v1762, 0
    %v1770 = vsel %vm329, %v1765, 0
    %1772 = vmatprep.subr.bf16.mxu0 0
    %1773 = vmatpush1.bf16.msra.mxu0 0
    %1774 = vmatprep.subr.bf16.mxu0 0
    %1775 = vmatpush1.bf16.msra.mxu0 0
    %1776 = vmatprep.subr.bf16.mxu0 0
    %1777 = vmatpush1.bf16.msra.mxu0 0
    %1778 = vmatprep.subr.bf16.mxu0 0
    %1779 = vmatpush1.bf16.msra.mxu0 0
    %1780 = vmatprep.subr.bf16.mxu0 0
    %1781 = vmatpush1.bf16.msra.mxu0 0
    %1782 = vmatprep.subr.bf16.mxu0 0
    %1783 = vmatpush1.bf16.msra.mxu0 0
    %1784 = vmatprep.subr.bf16.mxu0 0
    %1785 = vmatpush1.bf16.msra.mxu0 0
    %1786 = vmatprep.subr.bf16.mxu0 0
    %1787 = vmatpush1.bf16.msra.mxu0 %v1770
    %1788 = vmatprep.subr.bf16.mxu0 0
    %1789 = vmatpush2.bf16.msra.mxu0 0
    %1790 = vmatprep.subr.bf16.mxu0 0
    %1791 = vmatpush2.bf16.msra.mxu0 0
    %1792 = vmatprep.subr.bf16.mxu0 0
    %1793 = vmatpush2.bf16.msra.mxu0 0
    %1794 = vmatprep.subr.bf16.mxu0 0
    %1795 = vmatpush2.bf16.msra.mxu0 0
    %1796 = vmatprep.subr.bf16.mxu0 0
    %1797 = vmatpush2.bf16.msra.mxu0 0
    %1798 = vmatprep.subr.bf16.mxu0 0
    %1799 = vmatpush2.bf16.msra.mxu0 0
    %1800 = vmatprep.subr.bf16.mxu0 0
    %1801 = vmatpush2.bf16.msra.mxu0 0
    %1802 = vmatprep.subr.bf16.mxu0 0
    %1803 = vmatpush2.bf16.msra.mxu0 0
    %1804 = vmatprep.mubr.bf16.mxu0 0
    %1805 = vmatmul.mubr.bf16.gmra.mxu0 %v1767
    %v1806 = vpop.f32.mrf.mxu0
    %v1807 = vadd.f32 0.0, %v1806
    %v1808 = vpop.f32.mrf.mxu0
    %v1809 = vpop.f32.mrf.mxu0
    %v1810 = vpop.f32.mrf.mxu0
    %1811 = vdwg.mxu0
    %1812 = vrot.lane.b32.xlu0 %v1637, 64
    %v1813 = vpop.permute.xlu0 %1812
    %v1815 = vsel %vm188, %v1763, 0
    %v1818 = vsel %vm329, %v1813, 0
    %1820 = vmatprep.subr.bf16.mxu0 0
    %1821 = vmatpush1.bf16.msra.mxu0 0
    %1822 = vmatprep.subr.bf16.mxu0 0
    %1823 = vmatpush1.bf16.msra.mxu0 0
    %1824 = vmatprep.subr.bf16.mxu0 0
    %1825 = vmatpush1.bf16.msra.mxu0 0
    %1826 = vmatprep.subr.bf16.mxu0 0
    %1827 = vmatpush1.bf16.msra.mxu0 0
    %1828 = vmatprep.subr.bf16.mxu0 0
    %1829 = vmatpush1.bf16.msra.mxu0 0
    %1830 = vmatprep.subr.bf16.mxu0 0
    %1831 = vmatpush1.bf16.msra.mxu0 0
    %1832 = vmatprep.subr.bf16.mxu0 0
    %1833 = vmatpush1.bf16.msra.mxu0 0
    %1834 = vmatprep.subr.bf16.mxu0 0
    %1835 = vmatpush1.bf16.msra.mxu0 %v1818
    %1836 = vmatprep.subr.bf16.mxu0 0
    %1837 = vmatpush2.bf16.msra.mxu0 0
    %1838 = vmatprep.subr.bf16.mxu0 0
    %1839 = vmatpush2.bf16.msra.mxu0 0
    %1840 = vmatprep.subr.bf16.mxu0 0
    %1841 = vmatpush2.bf16.msra.mxu0 0
    %1842 = vmatprep.subr.bf16.mxu0 0
    %1843 = vmatpush2.bf16.msra.mxu0 0
    %1844 = vmatprep.subr.bf16.mxu0 0
    %1845 = vmatpush2.bf16.msra.mxu0 0
    %1846 = vmatprep.subr.bf16.mxu0 0
    %1847 = vmatpush2.bf16.msra.mxu0 0
    %1848 = vmatprep.subr.bf16.mxu0 0
    %1849 = vmatpush2.bf16.msra.mxu0 0
    %1850 = vmatprep.subr.bf16.mxu0 0
    %1851 = vmatpush2.bf16.msra.mxu0 0
    %1852 = vmatprep.mubr.bf16.mxu0 0
    %1853 = vmatmul.mubr.bf16.gmra.mxu0 %v1815
    %v1854 = vpop.f32.mrf.mxu0
    %v1855 = vadd.f32 0.0, %v1854
    %v1856 = vpop.f32.mrf.mxu0
    %v1857 = vpop.f32.mrf.mxu0
    %v1858 = vpop.f32.mrf.mxu0
    %1859 = vdwg.mxu0
    %v1860 = vpack.c.bf16 %v1855, %v1807
    %1861 = vrot.lane.b32.xlu0 %v1636, 120
    %v1862 = vpop.permute.xlu0 %1861
    %1863 = vrot.lane.b32.xlu0 %v1636, 88
    %v1864 = vpop.permute.xlu0 %1863
    %v1866 = vsel %vm188, %v1862, 0
    %v1869 = vsel %vm188, %v1864, 0
    %1871 = vmatprep.subr.bf16.mxu0 0
    %1872 = vmatpush1.bf16.xpose.msra.mxu0 0
    %1873 = vmatprep.subr.bf16.mxu0 0
    %1874 = vmatpush1.bf16.xpose.msra.mxu0 0
    %1875 = vmatprep.subr.bf16.mxu0 0
    %1876 = vmatpush1.bf16.xpose.msra.mxu0 0
    %1877 = vmatprep.subr.bf16.mxu0 0
    %1878 = vmatpush1.bf16.xpose.msra.mxu0 0
    %1879 = vmatprep.subr.bf16.mxu0 0
    %1880 = vmatpush1.bf16.xpose.msra.mxu0 0
    %1881 = vmatprep.subr.bf16.mxu0 0
    %1882 = vmatpush1.bf16.xpose.msra.mxu0 0
    %1883 = vmatprep.subr.bf16.mxu0 0
    %1884 = vmatpush1.bf16.xpose.msra.mxu0 0
    %1885 = vmatprep.subr.bf16.mxu0 0
    %1886 = vmatpush1.bf16.xpose.msra.mxu0 %v1869
    %1887 = vmatprep.subr.bf16.mxu0 0
    %1888 = vmatpush2.bf16.xpose.msra.mxu0 0
    %1889 = vmatprep.subr.bf16.mxu0 0
    %1890 = vmatpush2.bf16.xpose.msra.mxu0 0
    %1891 = vmatprep.subr.bf16.mxu0 0
    %1892 = vmatpush2.bf16.xpose.msra.mxu0 0
    %1893 = vmatprep.subr.bf16.mxu0 0
    %1894 = vmatpush2.bf16.xpose.msra.mxu0 0
    %1895 = vmatprep.subr.bf16.mxu0 0
    %1896 = vmatpush2.bf16.xpose.msra.mxu0 0
    %1897 = vmatprep.subr.bf16.mxu0 0
    %1898 = vmatpush2.bf16.xpose.msra.mxu0 0
    %1899 = vmatprep.subr.bf16.mxu0 0
    %1900 = vmatpush2.bf16.xpose.msra.mxu0 0
    %1901 = vmatprep.subr.bf16.mxu0 0
    %1902 = vmatpush2.bf16.xpose.msra.mxu0 0
    %1903 = vmatprep.mubr.bf16.mxu0 0
    %1904 = vmatmul.mubr.bf16.gmra.mxu0 %v1866
    %v1905 = vpop.f32.mrf.mxu0
    %v1906 = vadd.f32 0.0, %v1905
    %v1907 = vpop.f32.mrf.mxu0
    %v1908 = vpop.f32.mrf.mxu0
    %v1909 = vpop.f32.mrf.mxu0
    %1910 = vdwg.mxu0
    %1911 = vrot.lane.b32.xlu0 %v1637, 120
    %v1912 = vpop.permute.xlu0 %1911
    %1913 = vrot.lane.b32.xlu0 %v1637, 88
    %v1914 = vpop.permute.xlu0 %1913
    %v1916 = vsel %vm188, %v1912, 0
    %v1919 = vsel %vm188, %v1914, 0
    %1921 = vmatprep.subr.bf16.mxu0 0
    %1922 = vmatpush1.bf16.xpose.msra.mxu0 0
    %1923 = vmatprep.subr.bf16.mxu0 0
    %1924 = vmatpush1.bf16.xpose.msra.mxu0 0
    %1925 = vmatprep.subr.bf16.mxu0 0
    %1926 = vmatpush1.bf16.xpose.msra.mxu0 0
    %1927 = vmatprep.subr.bf16.mxu0 0
    %1928 = vmatpush1.bf16.xpose.msra.mxu0 0
    %1929 = vmatprep.subr.bf16.mxu0 0
    %1930 = vmatpush1.bf16.xpose.msra.mxu0 0
    %1931 = vmatprep.subr.bf16.mxu0 0
    %1932 = vmatpush1.bf16.xpose.msra.mxu0 0
    %1933 = vmatprep.subr.bf16.mxu0 0
    %1934 = vmatpush1.bf16.xpose.msra.mxu0 0
    %1935 = vmatprep.subr.bf16.mxu0 0
    %1936 = vmatpush1.bf16.xpose.msra.mxu0 %v1919
    %1937 = vmatprep.subr.bf16.mxu0 0
    %1938 = vmatpush2.bf16.xpose.msra.mxu0 0
    %1939 = vmatprep.subr.bf16.mxu0 0
    %1940 = vmatpush2.bf16.xpose.msra.mxu0 0
    %1941 = vmatprep.subr.bf16.mxu0 0
    %1942 = vmatpush2.bf16.xpose.msra.mxu0 0
    %1943 = vmatprep.subr.bf16.mxu0 0
    %1944 = vmatpush2.bf16.xpose.msra.mxu0 0
    %1945 = vmatprep.subr.bf16.mxu0 0
    %1946 = vmatpush2.bf16.xpose.msra.mxu0 0
    %1947 = vmatprep.subr.bf16.mxu0 0
    %1948 = vmatpush2.bf16.xpose.msra.mxu0 0
    %1949 = vmatprep.subr.bf16.mxu0 0
    %1950 = vmatpush2.bf16.xpose.msra.mxu0 0
    %1951 = vmatprep.subr.bf16.mxu0 0
    %1952 = vmatpush2.bf16.xpose.msra.mxu0 0
    %1953 = vmatprep.mubr.bf16.mxu0 0
    %1954 = vmatmul.mubr.bf16.gmra.mxu0 %v1916
    %v1955 = vpop.f32.mrf.mxu0
    %v1956 = vadd.f32 0.0, %v1955
    %v1957 = vpop.f32.mrf.mxu0
    %v1958 = vpop.f32.mrf.mxu0
    %v1959 = vpop.f32.mrf.mxu0
    %1960 = vdwg.mxu0
    %v1961 = vmul.f32 %v1906, 0.35355338
    %v1962 = vmul.f32 %v1956, 0.35355338
    %v1963 = vadd.f32 %v1961, %v291
    %v1964 = vadd.f32 %v1962, %v295
    %v1965 = vsel %vm188, %v1963, -inf
    %1966 = vmax.xlane.f32.xlu0 %v1965
    %v1967 = vpop.xlane.xlu0 %1966
    %v1968 = vsel %vm188, %v1964, -inf
    %1969 = vmax.xlane.f32.xlu0 %v1968
    %v1970 = vpop.xlane.xlu0 %1969
    %v1971 = vsub.f32 %v1963, %v1967
    %v1972 = vsub.f32 %v1964, %v1970
    %v1973 = vmul.f32 %v1971, 1.442695
    %v1974 = vpow.pop %v1973
    %v1975 = vmul.f32 %v1972, 1.442695
    %v1976 = vpow.pop %v1975
    %v1977 = vsel %vm188, %v1974, 0.0
    %1978 = vadd.xlane.f32.xlu0 %v1977
    %v1979 = vpop.xlane.xlu0 %1978
    %v1980 = vsel %vm188, %v1976, 0.0
    %1981 = vadd.xlane.f32.xlu0 %v1980
    %v1982 = vpop.xlane.xlu0 %1981
    %v1983 = vrcp.pop %v1979
    %v1984 = vrcp.pop %v1982
    %v1985 = vmul.f32 %v1974, %v1983
    %v1986 = vmul.f32 %v1976, %v1984
    %v1987 = vpack.c.bf16 %v1985, %v1985
    %v1988 = vpack.c.bf16 %v1986, %v1986
    %1989 = vrot.lane.b32.xlu0 %v1636, 56
    %v1990 = vpop.permute.xlu0 %1989
    %v1992 = vsel %vm188, %v1987, 0
    %v1995 = vsel %vm329, %v1990, 0
    %1997 = vmatprep.subr.bf16.mxu0 0
    %1998 = vmatpush1.bf16.msra.mxu0 0
    %1999 = vmatprep.subr.bf16.mxu0 0
    %2000 = vmatpush1.bf16.msra.mxu0 0
    %2001 = vmatprep.subr.bf16.mxu0 0
    %2002 = vmatpush1.bf16.msra.mxu0 0
    %2003 = vmatprep.subr.bf16.mxu0 0
    %2004 = vmatpush1.bf16.msra.mxu0 0
    %2005 = vmatprep.subr.bf16.mxu0 0
    %2006 = vmatpush1.bf16.msra.mxu0 0
    %2007 = vmatprep.subr.bf16.mxu0 0
    %2008 = vmatpush1.bf16.msra.mxu0 0
    %2009 = vmatprep.subr.bf16.mxu0 0
    %2010 = vmatpush1.bf16.msra.mxu0 0
    %2011 = vmatprep.subr.bf16.mxu0 0
    %2012 = vmatpush1.bf16.msra.mxu0 %v1995
    %2013 = vmatprep.subr.bf16.mxu0 0
    %2014 = vmatpush2.bf16.msra.mxu0 0
    %2015 = vmatprep.subr.bf16.mxu0 0
    %2016 = vmatpush2.bf16.msra.mxu0 0
    %2017 = vmatprep.subr.bf16.mxu0 0
    %2018 = vmatpush2.bf16.msra.mxu0 0
    %2019 = vmatprep.subr.bf16.mxu0 0
    %2020 = vmatpush2.bf16.msra.mxu0 0
    %2021 = vmatprep.subr.bf16.mxu0 0
    %2022 = vmatpush2.bf16.msra.mxu0 0
    %2023 = vmatprep.subr.bf16.mxu0 0
    %2024 = vmatpush2.bf16.msra.mxu0 0
    %2025 = vmatprep.subr.bf16.mxu0 0
    %2026 = vmatpush2.bf16.msra.mxu0 0
    %2027 = vmatprep.subr.bf16.mxu0 0
    %2028 = vmatpush2.bf16.msra.mxu0 0
    %2029 = vmatprep.mubr.bf16.mxu0 0
    %2030 = vmatmul.mubr.bf16.gmra.mxu0 %v1992
    %v2031 = vpop.f32.mrf.mxu0
    %v2032 = vadd.f32 0.0, %v2031
    %v2033 = vpop.f32.mrf.mxu0
    %v2034 = vpop.f32.mrf.mxu0
    %v2035 = vpop.f32.mrf.mxu0
    %2036 = vdwg.mxu0
    %2037 = vrot.lane.b32.xlu0 %v1637, 56
    %v2038 = vpop.permute.xlu0 %2037
    %v2040 = vsel %vm188, %v1988, 0
    %v2043 = vsel %vm329, %v2038, 0
    %2045 = vmatprep.subr.bf16.mxu0 0
    %2046 = vmatpush1.bf16.msra.mxu0 0
    %2047 = vmatprep.subr.bf16.mxu0 0
    %2048 = vmatpush1.bf16.msra.mxu0 0
    %2049 = vmatprep.subr.bf16.mxu0 0
    %2050 = vmatpush1.bf16.msra.mxu0 0
    %2051 = vmatprep.subr.bf16.mxu0 0
    %2052 = vmatpush1.bf16.msra.mxu0 0
    %2053 = vmatprep.subr.bf16.mxu0 0
    %2054 = vmatpush1.bf16.msra.mxu0 0
    %2055 = vmatprep.subr.bf16.mxu0 0
    %2056 = vmatpush1.bf16.msra.mxu0 0
    %2057 = vmatprep.subr.bf16.mxu0 0
    %2058 = vmatpush1.bf16.msra.mxu0 0
    %2059 = vmatprep.subr.bf16.mxu0 0
    %2060 = vmatpush1.bf16.msra.mxu0 %v2043
    %2061 = vmatprep.subr.bf16.mxu0 0
    %2062 = vmatpush2.bf16.msra.mxu0 0
    %2063 = vmatprep.subr.bf16.mxu0 0
    %2064 = vmatpush2.bf16.msra.mxu0 0
    %2065 = vmatprep.subr.bf16.mxu0 0
    %2066 = vmatpush2.bf16.msra.mxu0 0
    %2067 = vmatprep.subr.bf16.mxu0 0
    %2068 = vmatpush2.bf16.msra.mxu0 0
    %2069 = vmatprep.subr.bf16.mxu0 0
    %2070 = vmatpush2.bf16.msra.mxu0 0
    %2071 = vmatprep.subr.bf16.mxu0 0
    %2072 = vmatpush2.bf16.msra.mxu0 0
    %2073 = vmatprep.subr.bf16.mxu0 0
    %2074 = vmatpush2.bf16.msra.mxu0 0
    %2075 = vmatprep.subr.bf16.mxu0 0
    %2076 = vmatpush2.bf16.msra.mxu0 0
    %2077 = vmatprep.mubr.bf16.mxu0 0
    %2078 = vmatmul.mubr.bf16.gmra.mxu0 %v2040
    %v2079 = vpop.f32.mrf.mxu0
    %v2080 = vadd.f32 0.0, %v2079
    %v2081 = vpop.f32.mrf.mxu0
    %v2082 = vpop.f32.mrf.mxu0
    %v2083 = vpop.f32.mrf.mxu0
    %2084 = vdwg.mxu0
    %v2085 = vpack.c.bf16 %v2080, %v2032
    %v2087 = vsel %vm188, %v2085, 0
    %v2090 = vsel %vm329, %v1633, 0
    %2092 = vmatprep.subr.bf16.mxu0 0
    %2093 = vmatpush1.bf16.msra.mxu0 0
    %2094 = vmatprep.subr.bf16.mxu0 0
    %2095 = vmatpush1.bf16.msra.mxu0 0
    %2096 = vmatprep.subr.bf16.mxu0 0
    %2097 = vmatpush1.bf16.msra.mxu0 0
    %2098 = vmatprep.subr.bf16.mxu0 0
    %2099 = vmatpush1.bf16.msra.mxu0 0
    %2100 = vmatprep.subr.bf16.mxu0 0
    %2101 = vmatpush1.bf16.msra.mxu0 0
    %2102 = vmatprep.subr.bf16.mxu0 0
    %2103 = vmatpush1.bf16.msra.mxu0 0
    %2104 = vmatprep.subr.bf16.mxu0 0
    %2105 = vmatpush1.bf16.msra.mxu0 0
    %2106 = vmatprep.subr.bf16.mxu0 0
    %2107 = vmatpush1.bf16.msra.mxu0 %v2090
    %2108 = vmatprep.subr.bf16.mxu0 0
    %2109 = vmatpush2.bf16.msra.mxu0 0
    %2110 = vmatprep.subr.bf16.mxu0 0
    %2111 = vmatpush2.bf16.msra.mxu0 0
    %2112 = vmatprep.subr.bf16.mxu0 0
    %2113 = vmatpush2.bf16.msra.mxu0 0
    %2114 = vmatprep.subr.bf16.mxu0 0
    %2115 = vmatpush2.bf16.msra.mxu0 0
    %2116 = vmatprep.subr.bf16.mxu0 0
    %2117 = vmatpush2.bf16.msra.mxu0 0
    %2118 = vmatprep.subr.bf16.mxu0 0
    %2119 = vmatpush2.bf16.msra.mxu0 0
    %2120 = vmatprep.subr.bf16.mxu0 0
    %2121 = vmatpush2.bf16.msra.mxu0 0
    %2122 = vmatprep.subr.bf16.mxu0 0
    %2123 = vmatpush2.bf16.msra.mxu0 0
    %2124 = vmatprep.mubr.bf16.mxu0 0
    %2125 = vmatmul.mubr.bf16.gmra.mxu0 %v2087
    %v2126 = vpop.f32.mrf.mxu0
    %v2127 = vadd.f32 0.0, %v2126
    %v2128 = vpop.f32.mrf.mxu0
    %v2129 = vpop.f32.mrf.mxu0
    %v2130 = vadd.f32 0.0, %v2129
    %v2131 = vpop.f32.mrf.mxu0
    %2132 = vdwg.mxu0
    %v2134 = vsel %vm188, %v1860, 0
    %v2137 = vsel %vm329, %v1632, 0
    %2139 = vmatprep.subr.bf16.mxu0 0
    %2140 = vmatpush1.bf16.msra.mxu0 0
    %2141 = vmatprep.subr.bf16.mxu0 0
    %2142 = vmatpush1.bf16.msra.mxu0 0
    %2143 = vmatprep.subr.bf16.mxu0 0
    %2144 = vmatpush1.bf16.msra.mxu0 0
    %2145 = vmatprep.subr.bf16.mxu0 0
    %2146 = vmatpush1.bf16.msra.mxu0 0
    %2147 = vmatprep.subr.bf16.mxu0 0
    %2148 = vmatpush1.bf16.msra.mxu0 0
    %2149 = vmatprep.subr.bf16.mxu0 0
    %2150 = vmatpush1.bf16.msra.mxu0 0
    %2151 = vmatprep.subr.bf16.mxu0 0
    %2152 = vmatpush1.bf16.msra.mxu0 0
    %2153 = vmatprep.subr.bf16.mxu0 0
    %2154 = vmatpush1.bf16.msra.mxu0 %v2137
    %2155 = vmatprep.subr.bf16.mxu0 0
    %2156 = vmatpush2.bf16.msra.mxu0 0
    %2157 = vmatprep.subr.bf16.mxu0 0
    %2158 = vmatpush2.bf16.msra.mxu0 0
    %2159 = vmatprep.subr.bf16.mxu0 0
    %2160 = vmatpush2.bf16.msra.mxu0 0
    %2161 = vmatprep.subr.bf16.mxu0 0
    %2162 = vmatpush2.bf16.msra.mxu0 0
    %2163 = vmatprep.subr.bf16.mxu0 0
    %2164 = vmatpush2.bf16.msra.mxu0 0
    %2165 = vmatprep.subr.bf16.mxu0 0
    %2166 = vmatpush2.bf16.msra.mxu0 0
    %2167 = vmatprep.subr.bf16.mxu0 0
    %2168 = vmatpush2.bf16.msra.mxu0 0
    %2169 = vmatprep.subr.bf16.mxu0 0
    %2170 = vmatpush2.bf16.msra.mxu0 0
    %2171 = vmatprep.mubr.bf16.mxu0 0
    %2172 = vmatmul.mubr.bf16.gmra.mxu0 %v2134
    %v2173 = vpop.f32.mrf.mxu0
    %v2174 = vadd.f32 %v2127, %v2173
    %v2175 = vpop.f32.mrf.mxu0
    %v2176 = vpop.f32.mrf.mxu0
    %v2177 = vadd.f32 %v2130, %v2176
    %v2178 = vpop.f32.mrf.mxu0
    %2179 = vdwg.mxu0
    %2180 = vrot.lane.b32.xlu0 %v1636, 112
    %v2181 = vpop.permute.xlu0 %2180
    %2182 = vrot.lane.b32.xlu0 %v1636, 80
    %v2183 = vpop.permute.xlu0 %2182
    %v2185 = vsel %vm188, %v2181, 0
    %v2188 = vsel %vm188, %v2183, 0
    %2190 = vmatprep.subr.bf16.mxu0 0
    %2191 = vmatpush1.bf16.xpose.msra.mxu0 0
    %2192 = vmatprep.subr.bf16.mxu0 0
    %2193 = vmatpush1.bf16.xpose.msra.mxu0 0
    %2194 = vmatprep.subr.bf16.mxu0 0
    %2195 = vmatpush1.bf16.xpose.msra.mxu0 0
    %2196 = vmatprep.subr.bf16.mxu0 0
    %2197 = vmatpush1.bf16.xpose.msra.mxu0 0
    %2198 = vmatprep.subr.bf16.mxu0 0
    %2199 = vmatpush1.bf16.xpose.msra.mxu0 0
    %2200 = vmatprep.subr.bf16.mxu0 0
    %2201 = vmatpush1.bf16.xpose.msra.mxu0 0
    %2202 = vmatprep.subr.bf16.mxu0 0
    %2203 = vmatpush1.bf16.xpose.msra.mxu0 0
    %2204 = vmatprep.subr.bf16.mxu0 0
    %2205 = vmatpush1.bf16.xpose.msra.mxu0 %v2188
    %2206 = vmatprep.subr.bf16.mxu0 0
    %2207 = vmatpush2.bf16.xpose.msra.mxu0 0
    %2208 = vmatprep.subr.bf16.mxu0 0
    %2209 = vmatpush2.bf16.xpose.msra.mxu0 0
    %2210 = vmatprep.subr.bf16.mxu0 0
    %2211 = vmatpush2.bf16.xpose.msra.mxu0 0
    %2212 = vmatprep.subr.bf16.mxu0 0
    %2213 = vmatpush2.bf16.xpose.msra.mxu0 0
    %2214 = vmatprep.subr.bf16.mxu0 0
    %2215 = vmatpush2.bf16.xpose.msra.mxu0 0
    %2216 = vmatprep.subr.bf16.mxu0 0
    %2217 = vmatpush2.bf16.xpose.msra.mxu0 0
    %2218 = vmatprep.subr.bf16.mxu0 0
    %2219 = vmatpush2.bf16.xpose.msra.mxu0 0
    %2220 = vmatprep.subr.bf16.mxu0 0
    %2221 = vmatpush2.bf16.xpose.msra.mxu0 0
    %2222 = vmatprep.mubr.bf16.mxu0 0
    %2223 = vmatmul.mubr.bf16.gmra.mxu0 %v2185
    %v2224 = vpop.f32.mrf.mxu0
    %v2225 = vadd.f32 0.0, %v2224
    %v2226 = vpop.f32.mrf.mxu0
    %v2227 = vpop.f32.mrf.mxu0
    %v2228 = vpop.f32.mrf.mxu0
    %2229 = vdwg.mxu0
    %2230 = vrot.lane.b32.xlu0 %v1637, 112
    %v2231 = vpop.permute.xlu0 %2230
    %2232 = vrot.lane.b32.xlu0 %v1637, 80
    %v2233 = vpop.permute.xlu0 %2232
    %v2235 = vsel %vm188, %v2231, 0
    %v2238 = vsel %vm188, %v2233, 0
    %2240 = vmatprep.subr.bf16.mxu0 0
    %2241 = vmatpush1.bf16.xpose.msra.mxu0 0
    %2242 = vmatprep.subr.bf16.mxu0 0
    %2243 = vmatpush1.bf16.xpose.msra.mxu0 0
    %2244 = vmatprep.subr.bf16.mxu0 0
    %2245 = vmatpush1.bf16.xpose.msra.mxu0 0
    %2246 = vmatprep.subr.bf16.mxu0 0
    %2247 = vmatpush1.bf16.xpose.msra.mxu0 0
    %2248 = vmatprep.subr.bf16.mxu0 0
    %2249 = vmatpush1.bf16.xpose.msra.mxu0 0
    %2250 = vmatprep.subr.bf16.mxu0 0
    %2251 = vmatpush1.bf16.xpose.msra.mxu0 0
    %2252 = vmatprep.subr.bf16.mxu0 0
    %2253 = vmatpush1.bf16.xpose.msra.mxu0 0
    %2254 = vmatprep.subr.bf16.mxu0 0
    %2255 = vmatpush1.bf16.xpose.msra.mxu0 %v2238
    %2256 = vmatprep.subr.bf16.mxu0 0
    %2257 = vmatpush2.bf16.xpose.msra.mxu0 0
    %2258 = vmatprep.subr.bf16.mxu0 0
    %2259 = vmatpush2.bf16.xpose.msra.mxu0 0
    %2260 = vmatprep.subr.bf16.mxu0 0
    %2261 = vmatpush2.bf16.xpose.msra.mxu0 0
    %2262 = vmatprep.subr.bf16.mxu0 0
    %2263 = vmatpush2.bf16.xpose.msra.mxu0 0
    %2264 = vmatprep.subr.bf16.mxu0 0
    %2265 = vmatpush2.bf16.xpose.msra.mxu0 0
    %2266 = vmatprep.subr.bf16.mxu0 0
    %2267 = vmatpush2.bf16.xpose.msra.mxu0 0
    %2268 = vmatprep.subr.bf16.mxu0 0
    %2269 = vmatpush2.bf16.xpose.msra.mxu0 0
    %2270 = vmatprep.subr.bf16.mxu0 0
    %2271 = vmatpush2.bf16.xpose.msra.mxu0 0
    %2272 = vmatprep.mubr.bf16.mxu0 0
    %2273 = vmatmul.mubr.bf16.gmra.mxu0 %v2235
    %v2274 = vpop.f32.mrf.mxu0
    %v2275 = vadd.f32 0.0, %v2274
    %v2276 = vpop.f32.mrf.mxu0
    %v2277 = vpop.f32.mrf.mxu0
    %v2278 = vpop.f32.mrf.mxu0
    %2279 = vdwg.mxu0
    %v2280 = vmul.f32 %v2225, 0.35355338
    %v2281 = vmul.f32 %v2275, 0.35355338
    %v2282 = vadd.f32 %v2280, %v291
    %v2283 = vadd.f32 %v2281, %v295
    %v2284 = vsel %vm188, %v2282, -inf
    %2285 = vmax.xlane.f32.xlu0 %v2284
    %v2286 = vpop.xlane.xlu0 %2285
    %v2287 = vsel %vm188, %v2283, -inf
    %2288 = vmax.xlane.f32.xlu0 %v2287
    %v2289 = vpop.xlane.xlu0 %2288
    %v2290 = vsub.f32 %v2282, %v2286
    %v2291 = vsub.f32 %v2283, %v2289
    %v2292 = vmul.f32 %v2290, 1.442695
    %v2293 = vpow.pop %v2292
    %v2294 = vmul.f32 %v2291, 1.442695
    %v2295 = vpow.pop %v2294
    %v2296 = vsel %vm188, %v2293, 0.0
    %2297 = vadd.xlane.f32.xlu0 %v2296
    %v2298 = vpop.xlane.xlu0 %2297
    %v2299 = vsel %vm188, %v2295, 0.0
    %2300 = vadd.xlane.f32.xlu0 %v2299
    %v2301 = vpop.xlane.xlu0 %2300
    %v2302 = vrcp.pop %v2298
    %v2303 = vrcp.pop %v2301
    %v2304 = vmul.f32 %v2293, %v2302
    %v2305 = vmul.f32 %v2295, %v2303
    %v2306 = vpack.c.bf16 %v2304, %v2304
    %v2307 = vpack.c.bf16 %v2305, %v2305
    %2308 = vrot.lane.b32.xlu0 %v1636, 48
    %v2309 = vpop.permute.xlu0 %2308
    %v2311 = vsel %vm188, %v2306, 0
    %v2314 = vsel %vm329, %v2309, 0
    %2316 = vmatprep.subr.bf16.mxu0 0
    %2317 = vmatpush1.bf16.msra.mxu0 0
    %2318 = vmatprep.subr.bf16.mxu0 0
    %2319 = vmatpush1.bf16.msra.mxu0 0
    %2320 = vmatprep.subr.bf16.mxu0 0
    %2321 = vmatpush1.bf16.msra.mxu0 0
    %2322 = vmatprep.subr.bf16.mxu0 0
    %2323 = vmatpush1.bf16.msra.mxu0 0
    %2324 = vmatprep.subr.bf16.mxu0 0
    %2325 = vmatpush1.bf16.msra.mxu0 0
    %2326 = vmatprep.subr.bf16.mxu0 0
    %2327 = vmatpush1.bf16.msra.mxu0 0
    %2328 = vmatprep.subr.bf16.mxu0 0
    %2329 = vmatpush1.bf16.msra.mxu0 0
    %2330 = vmatprep.subr.bf16.mxu0 0
    %2331 = vmatpush1.bf16.msra.mxu0 %v2314
    %2332 = vmatprep.subr.bf16.mxu0 0
    %2333 = vmatpush2.bf16.msra.mxu0 0
    %2334 = vmatprep.subr.bf16.mxu0 0
    %2335 = vmatpush2.bf16.msra.mxu0 0
    %2336 = vmatprep.subr.bf16.mxu0 0
    %2337 = vmatpush2.bf16.msra.mxu0 0
    %2338 = vmatprep.subr.bf16.mxu0 0
    %2339 = vmatpush2.bf16.msra.mxu0 0
    %2340 = vmatprep.subr.bf16.mxu0 0
    %2341 = vmatpush2.bf16.msra.mxu0 0
    %2342 = vmatprep.subr.bf16.mxu0 0
    %2343 = vmatpush2.bf16.msra.mxu0 0
    %2344 = vmatprep.subr.bf16.mxu0 0
    %2345 = vmatpush2.bf16.msra.mxu0 0
    %2346 = vmatprep.subr.bf16.mxu0 0
    %2347 = vmatpush2.bf16.msra.mxu0 0
    %2348 = vmatprep.mubr.bf16.mxu0 0
    %2349 = vmatmul.mubr.bf16.gmra.mxu0 %v2311
    %v2350 = vpop.f32.mrf.mxu0
    %v2351 = vadd.f32 0.0, %v2350
    %v2352 = vpop.f32.mrf.mxu0
    %v2353 = vpop.f32.mrf.mxu0
    %v2354 = vpop.f32.mrf.mxu0
    %2355 = vdwg.mxu0
    %2356 = vrot.lane.b32.xlu0 %v1637, 48
    %v2357 = vpop.permute.xlu0 %2356
    %v2359 = vsel %vm188, %v2307, 0
    %v2362 = vsel %vm329, %v2357, 0
    %2364 = vmatprep.subr.bf16.mxu0 0
    %2365 = vmatpush1.bf16.msra.mxu0 0
    %2366 = vmatprep.subr.bf16.mxu0 0
    %2367 = vmatpush1.bf16.msra.mxu0 0
    %2368 = vmatprep.subr.bf16.mxu0 0
    %2369 = vmatpush1.bf16.msra.mxu0 0
    %2370 = vmatprep.subr.bf16.mxu0 0
    %2371 = vmatpush1.bf16.msra.mxu0 0
    %2372 = vmatprep.subr.bf16.mxu0 0
    %2373 = vmatpush1.bf16.msra.mxu0 0
    %2374 = vmatprep.subr.bf16.mxu0 0
    %2375 = vmatpush1.bf16.msra.mxu0 0
    %2376 = vmatprep.subr.bf16.mxu0 0
    %2377 = vmatpush1.bf16.msra.mxu0 0
    %2378 = vmatprep.subr.bf16.mxu0 0
    %2379 = vmatpush1.bf16.msra.mxu0 %v2362
    %2380 = vmatprep.subr.bf16.mxu0 0
    %2381 = vmatpush2.bf16.msra.mxu0 0
    %2382 = vmatprep.subr.bf16.mxu0 0
    %2383 = vmatpush2.bf16.msra.mxu0 0
    %2384 = vmatprep.subr.bf16.mxu0 0
    %2385 = vmatpush2.bf16.msra.mxu0 0
    %2386 = vmatprep.subr.bf16.mxu0 0
    %2387 = vmatpush2.bf16.msra.mxu0 0
    %2388 = vmatprep.subr.bf16.mxu0 0
    %2389 = vmatpush2.bf16.msra.mxu0 0
    %2390 = vmatprep.subr.bf16.mxu0 0
    %2391 = vmatpush2.bf16.msra.mxu0 0
    %2392 = vmatprep.subr.bf16.mxu0 0
    %2393 = vmatpush2.bf16.msra.mxu0 0
    %2394 = vmatprep.subr.bf16.mxu0 0
    %2395 = vmatpush2.bf16.msra.mxu0 0
    %2396 = vmatprep.mubr.bf16.mxu0 0
    %2397 = vmatmul.mubr.bf16.gmra.mxu0 %v2359
    %v2398 = vpop.f32.mrf.mxu0
    %v2399 = vadd.f32 0.0, %v2398
    %v2400 = vpop.f32.mrf.mxu0
    %v2401 = vpop.f32.mrf.mxu0
    %v2402 = vpop.f32.mrf.mxu0
    %2403 = vdwg.mxu0
    %v2404 = vpack.c.bf16 %v2399, %v2351
    %v2406 = vsel %vm188, %v2404, 0
    %v2409 = vsel %vm329, %v1634, 0
    %2411 = vmatprep.subr.bf16.mxu0 0
    %2412 = vmatpush1.bf16.msra.mxu0 0
    %2413 = vmatprep.subr.bf16.mxu0 0
    %2414 = vmatpush1.bf16.msra.mxu0 0
    %2415 = vmatprep.subr.bf16.mxu0 0
    %2416 = vmatpush1.bf16.msra.mxu0 0
    %2417 = vmatprep.subr.bf16.mxu0 0
    %2418 = vmatpush1.bf16.msra.mxu0 0
    %2419 = vmatprep.subr.bf16.mxu0 0
    %2420 = vmatpush1.bf16.msra.mxu0 0
    %2421 = vmatprep.subr.bf16.mxu0 0
    %2422 = vmatpush1.bf16.msra.mxu0 0
    %2423 = vmatprep.subr.bf16.mxu0 0
    %2424 = vmatpush1.bf16.msra.mxu0 0
    %2425 = vmatprep.subr.bf16.mxu0 0
    %2426 = vmatpush1.bf16.msra.mxu0 %v2409
    %2427 = vmatprep.subr.bf16.mxu0 0
    %2428 = vmatpush2.bf16.msra.mxu0 0
    %2429 = vmatprep.subr.bf16.mxu0 0
    %2430 = vmatpush2.bf16.msra.mxu0 0
    %2431 = vmatprep.subr.bf16.mxu0 0
    %2432 = vmatpush2.bf16.msra.mxu0 0
    %2433 = vmatprep.subr.bf16.mxu0 0
    %2434 = vmatpush2.bf16.msra.mxu0 0
    %2435 = vmatprep.subr.bf16.mxu0 0
    %2436 = vmatpush2.bf16.msra.mxu0 0
    %2437 = vmatprep.subr.bf16.mxu0 0
    %2438 = vmatpush2.bf16.msra.mxu0 0
    %2439 = vmatprep.subr.bf16.mxu0 0
    %2440 = vmatpush2.bf16.msra.mxu0 0
    %2441 = vmatprep.subr.bf16.mxu0 0
    %2442 = vmatpush2.bf16.msra.mxu0 0
    %2443 = vmatprep.mubr.bf16.mxu0 0
    %2444 = vmatmul.mubr.bf16.gmra.mxu0 %v2406
    %v2445 = vpop.f32.mrf.mxu0
    %v2446 = vadd.f32 0.0, %v2445
    %v2447 = vpop.f32.mrf.mxu0
    %v2448 = vpop.f32.mrf.mxu0
    %v2449 = vadd.f32 0.0, %v2448
    %v2450 = vpop.f32.mrf.mxu0
    %2451 = vdwg.mxu0
    %v2452 = vadd.f32 %v2174, %v2446
    %v2453 = vadd.f32 %v2177, %v2449
    %2454 = vrot.lane.b32.xlu0 %v1636, 104
    %v2455 = vpop.permute.xlu0 %2454
    %2456 = vrot.lane.b32.xlu0 %v1636, 72
    %v2457 = vpop.permute.xlu0 %2456
    %v2459 = vsel %vm188, %v2455, 0
    %v2462 = vsel %vm188, %v2457, 0
    %2464 = vmatprep.subr.bf16.mxu0 0
    %2465 = vmatpush1.bf16.xpose.msra.mxu0 0
    %2466 = vmatprep.subr.bf16.mxu0 0
    %2467 = vmatpush1.bf16.xpose.msra.mxu0 0
    %2468 = vmatprep.subr.bf16.mxu0 0
    %2469 = vmatpush1.bf16.xpose.msra.mxu0 0
    %2470 = vmatprep.subr.bf16.mxu0 0
    %2471 = vmatpush1.bf16.xpose.msra.mxu0 0
    %2472 = vmatprep.subr.bf16.mxu0 0
    %2473 = vmatpush1.bf16.xpose.msra.mxu0 0
    %2474 = vmatprep.subr.bf16.mxu0 0
    %2475 = vmatpush1.bf16.xpose.msra.mxu0 0
    %2476 = vmatprep.subr.bf16.mxu0 0
    %2477 = vmatpush1.bf16.xpose.msra.mxu0 0
    %2478 = vmatprep.subr.bf16.mxu0 0
    %2479 = vmatpush1.bf16.xpose.msra.mxu0 %v2462
    %2480 = vmatprep.subr.bf16.mxu0 0
    %2481 = vmatpush2.bf16.xpose.msra.mxu0 0
    %2482 = vmatprep.subr.bf16.mxu0 0
    %2483 = vmatpush2.bf16.xpose.msra.mxu0 0
    %2484 = vmatprep.subr.bf16.mxu0 0
    %2485 = vmatpush2.bf16.xpose.msra.mxu0 0
    %2486 = vmatprep.subr.bf16.mxu0 0
    %2487 = vmatpush2.bf16.xpose.msra.mxu0 0
    %2488 = vmatprep.subr.bf16.mxu0 0
    %2489 = vmatpush2.bf16.xpose.msra.mxu0 0
    %2490 = vmatprep.subr.bf16.mxu0 0
    %2491 = vmatpush2.bf16.xpose.msra.mxu0 0
    %2492 = vmatprep.subr.bf16.mxu0 0
    %2493 = vmatpush2.bf16.xpose.msra.mxu0 0
    %2494 = vmatprep.subr.bf16.mxu0 0
    %2495 = vmatpush2.bf16.xpose.msra.mxu0 0
    %2496 = vmatprep.mubr.bf16.mxu0 0
    %2497 = vmatmul.mubr.bf16.gmra.mxu0 %v2459
    %v2498 = vpop.f32.mrf.mxu0
    %v2499 = vadd.f32 0.0, %v2498
    %v2500 = vpop.f32.mrf.mxu0
    %v2501 = vpop.f32.mrf.mxu0
    %v2502 = vpop.f32.mrf.mxu0
    %2503 = vdwg.mxu0
    %2504 = vrot.lane.b32.xlu0 %v1637, 104
    %v2505 = vpop.permute.xlu0 %2504
    %2506 = vrot.lane.b32.xlu0 %v1637, 72
    %v2507 = vpop.permute.xlu0 %2506
    %v2509 = vsel %vm188, %v2505, 0
    %v2512 = vsel %vm188, %v2507, 0
    %2514 = vmatprep.subr.bf16.mxu0 0
    %2515 = vmatpush1.bf16.xpose.msra.mxu0 0
    %2516 = vmatprep.subr.bf16.mxu0 0
    %2517 = vmatpush1.bf16.xpose.msra.mxu0 0
    %2518 = vmatprep.subr.bf16.mxu0 0
    %2519 = vmatpush1.bf16.xpose.msra.mxu0 0
    %2520 = vmatprep.subr.bf16.mxu0 0
    %2521 = vmatpush1.bf16.xpose.msra.mxu0 0
    %2522 = vmatprep.subr.bf16.mxu0 0
    %2523 = vmatpush1.bf16.xpose.msra.mxu0 0
    %2524 = vmatprep.subr.bf16.mxu0 0
    %2525 = vmatpush1.bf16.xpose.msra.mxu0 0
    %2526 = vmatprep.subr.bf16.mxu0 0
    %2527 = vmatpush1.bf16.xpose.msra.mxu0 0
    %2528 = vmatprep.subr.bf16.mxu0 0
    %2529 = vmatpush1.bf16.xpose.msra.mxu0 %v2512
    %2530 = vmatprep.subr.bf16.mxu0 0
    %2531 = vmatpush2.bf16.xpose.msra.mxu0 0
    %2532 = vmatprep.subr.bf16.mxu0 0
    %2533 = vmatpush2.bf16.xpose.msra.mxu0 0
    %2534 = vmatprep.subr.bf16.mxu0 0
    %2535 = vmatpush2.bf16.xpose.msra.mxu0 0
    %2536 = vmatprep.subr.bf16.mxu0 0
    %2537 = vmatpush2.bf16.xpose.msra.mxu0 0
    %2538 = vmatprep.subr.bf16.mxu0 0
    %2539 = vmatpush2.bf16.xpose.msra.mxu0 0
    %2540 = vmatprep.subr.bf16.mxu0 0
    %2541 = vmatpush2.bf16.xpose.msra.mxu0 0
    %2542 = vmatprep.subr.bf16.mxu0 0
    %2543 = vmatpush2.bf16.xpose.msra.mxu0 0
    %2544 = vmatprep.subr.bf16.mxu0 0
    %2545 = vmatpush2.bf16.xpose.msra.mxu0 0
    %2546 = vmatprep.mubr.bf16.mxu0 0
    %2547 = vmatmul.mubr.bf16.gmra.mxu0 %v2509
    %v2548 = vpop.f32.mrf.mxu0
    %v2549 = vadd.f32 0.0, %v2548
    %v2550 = vpop.f32.mrf.mxu0
    %v2551 = vpop.f32.mrf.mxu0
    %v2552 = vpop.f32.mrf.mxu0
    %2553 = vdwg.mxu0
    %v2554 = vmul.f32 %v2499, 0.35355338
    %v2555 = vmul.f32 %v2549, 0.35355338
    %v2556 = vadd.f32 %v2554, %v291
    %v2557 = vadd.f32 %v2555, %v295
    %v2558 = vsel %vm188, %v2556, -inf
    %2559 = vmax.xlane.f32.xlu0 %v2558
    %v2560 = vpop.xlane.xlu0 %2559
    %v2561 = vsel %vm188, %v2557, -inf
    %2562 = vmax.xlane.f32.xlu0 %v2561
    %v2563 = vpop.xlane.xlu0 %2562
    %v2564 = vsub.f32 %v2556, %v2560
    %v2565 = vsub.f32 %v2557, %v2563
    %v2566 = vmul.f32 %v2564, 1.442695
    %v2567 = vpow.pop %v2566
    %v2568 = vmul.f32 %v2565, 1.442695
    %v2569 = vpow.pop %v2568
    %v2570 = vsel %vm188, %v2567, 0.0
    %2571 = vadd.xlane.f32.xlu0 %v2570
    %v2572 = vpop.xlane.xlu0 %2571
    %v2573 = vsel %vm188, %v2569, 0.0
    %2574 = vadd.xlane.f32.xlu0 %v2573
    %v2575 = vpop.xlane.xlu0 %2574
    %v2576 = vrcp.pop %v2572
    %v2577 = vrcp.pop %v2575
    %v2578 = vmul.f32 %v2567, %v2576
    %v2579 = vmul.f32 %v2569, %v2577
    %v2580 = vpack.c.bf16 %v2578, %v2578
    %v2581 = vpack.c.bf16 %v2579, %v2579
    %2582 = vrot.lane.b32.xlu0 %v1636, 40
    %v2583 = vpop.permute.xlu0 %2582
    %v2585 = vsel %vm188, %v2580, 0
    %v2588 = vsel %vm329, %v2583, 0
    %2590 = vmatprep.subr.bf16.mxu0 0
    %2591 = vmatpush1.bf16.msra.mxu0 0
    %2592 = vmatprep.subr.bf16.mxu0 0
    %2593 = vmatpush1.bf16.msra.mxu0 0
    %2594 = vmatprep.subr.bf16.mxu0 0
    %2595 = vmatpush1.bf16.msra.mxu0 0
    %2596 = vmatprep.subr.bf16.mxu0 0
    %2597 = vmatpush1.bf16.msra.mxu0 0
    %2598 = vmatprep.subr.bf16.mxu0 0
    %2599 = vmatpush1.bf16.msra.mxu0 0
    %2600 = vmatprep.subr.bf16.mxu0 0
    %2601 = vmatpush1.bf16.msra.mxu0 0
    %2602 = vmatprep.subr.bf16.mxu0 0
    %2603 = vmatpush1.bf16.msra.mxu0 0
    %2604 = vmatprep.subr.bf16.mxu0 0
    %2605 = vmatpush1.bf16.msra.mxu0 %v2588
    %2606 = vmatprep.subr.bf16.mxu0 0
    %2607 = vmatpush2.bf16.msra.mxu0 0
    %2608 = vmatprep.subr.bf16.mxu0 0
    %2609 = vmatpush2.bf16.msra.mxu0 0
    %2610 = vmatprep.subr.bf16.mxu0 0
    %2611 = vmatpush2.bf16.msra.mxu0 0
    %2612 = vmatprep.subr.bf16.mxu0 0
    %2613 = vmatpush2.bf16.msra.mxu0 0
    %2614 = vmatprep.subr.bf16.mxu0 0
    %2615 = vmatpush2.bf16.msra.mxu0 0
    %2616 = vmatprep.subr.bf16.mxu0 0
    %2617 = vmatpush2.bf16.msra.mxu0 0
    %2618 = vmatprep.subr.bf16.mxu0 0
    %2619 = vmatpush2.bf16.msra.mxu0 0
    %2620 = vmatprep.subr.bf16.mxu0 0
    %2621 = vmatpush2.bf16.msra.mxu0 0
    %2622 = vmatprep.mubr.bf16.mxu0 0
    %2623 = vmatmul.mubr.bf16.gmra.mxu0 %v2585
    %v2624 = vpop.f32.mrf.mxu0
    %v2625 = vadd.f32 0.0, %v2624
    %v2626 = vpop.f32.mrf.mxu0
    %v2627 = vpop.f32.mrf.mxu0
    %v2628 = vpop.f32.mrf.mxu0
    %2629 = vdwg.mxu0
    %2630 = vrot.lane.b32.xlu0 %v1637, 40
    %v2631 = vpop.permute.xlu0 %2630
    %v2633 = vsel %vm188, %v2581, 0
    %v2636 = vsel %vm329, %v2631, 0
    %2638 = vmatprep.subr.bf16.mxu0 0
    %2639 = vmatpush1.bf16.msra.mxu0 0
    %2640 = vmatprep.subr.bf16.mxu0 0
    %2641 = vmatpush1.bf16.msra.mxu0 0
    %2642 = vmatprep.subr.bf16.mxu0 0
    %2643 = vmatpush1.bf16.msra.mxu0 0
    %2644 = vmatprep.subr.bf16.mxu0 0
    %2645 = vmatpush1.bf16.msra.mxu0 0
    %2646 = vmatprep.subr.bf16.mxu0 0
    %2647 = vmatpush1.bf16.msra.mxu0 0
    %2648 = vmatprep.subr.bf16.mxu0 0
    %2649 = vmatpush1.bf16.msra.mxu0 0
    %2650 = vmatprep.subr.bf16.mxu0 0
    %2651 = vmatpush1.bf16.msra.mxu0 0
    %2652 = vmatprep.subr.bf16.mxu0 0
    %2653 = vmatpush1.bf16.msra.mxu0 %v2636
    %2654 = vmatprep.subr.bf16.mxu0 0
    %2655 = vmatpush2.bf16.msra.mxu0 0
    %2656 = vmatprep.subr.bf16.mxu0 0
    %2657 = vmatpush2.bf16.msra.mxu0 0
    %2658 = vmatprep.subr.bf16.mxu0 0
    %2659 = vmatpush2.bf16.msra.mxu0 0
    %2660 = vmatprep.subr.bf16.mxu0 0
    %2661 = vmatpush2.bf16.msra.mxu0 0
    %2662 = vmatprep.subr.bf16.mxu0 0
    %2663 = vmatpush2.bf16.msra.mxu0 0
    %2664 = vmatprep.subr.bf16.mxu0 0
    %2665 = vmatpush2.bf16.msra.mxu0 0
    %2666 = vmatprep.subr.bf16.mxu0 0
    %2667 = vmatpush2.bf16.msra.mxu0 0
    %2668 = vmatprep.subr.bf16.mxu0 0
    %2669 = vmatpush2.bf16.msra.mxu0 0
    %2670 = vmatprep.mubr.bf16.mxu0 0
    %2671 = vmatmul.mubr.bf16.gmra.mxu0 %v2633
    %v2672 = vpop.f32.mrf.mxu0
    %v2673 = vadd.f32 0.0, %v2672
    %v2674 = vpop.f32.mrf.mxu0
    %v2675 = vpop.f32.mrf.mxu0
    %v2676 = vpop.f32.mrf.mxu0
    %2677 = vdwg.mxu0
    %v2678 = vpack.c.bf16 %v2673, %v2625
    %v2680 = vsel %vm188, %v2678, 0
    %v2683 = vsel %vm329, %v1635, 0
    %2685 = vmatprep.subr.bf16.mxu0 0
    %2686 = vmatpush1.bf16.msra.mxu0 0
    %2687 = vmatprep.subr.bf16.mxu0 0
    %2688 = vmatpush1.bf16.msra.mxu0 0
    %2689 = vmatprep.subr.bf16.mxu0 0
    %2690 = vmatpush1.bf16.msra.mxu0 0
    %2691 = vmatprep.subr.bf16.mxu0 0
    %2692 = vmatpush1.bf16.msra.mxu0 0
    %2693 = vmatprep.subr.bf16.mxu0 0
    %2694 = vmatpush1.bf16.msra.mxu0 0
    %2695 = vmatprep.subr.bf16.mxu0 0
    %2696 = vmatpush1.bf16.msra.mxu0 0
    %2697 = vmatprep.subr.bf16.mxu0 0
    %2698 = vmatpush1.bf16.msra.mxu0 0
    %2699 = vmatprep.subr.bf16.mxu0 0
    %2700 = vmatpush1.bf16.msra.mxu0 %v2683
    %2701 = vmatprep.subr.bf16.mxu0 0
    %2702 = vmatpush2.bf16.msra.mxu0 0
    %2703 = vmatprep.subr.bf16.mxu0 0
    %2704 = vmatpush2.bf16.msra.mxu0 0
    %2705 = vmatprep.subr.bf16.mxu0 0
    %2706 = vmatpush2.bf16.msra.mxu0 0
    %2707 = vmatprep.subr.bf16.mxu0 0
    %2708 = vmatpush2.bf16.msra.mxu0 0
    %2709 = vmatprep.subr.bf16.mxu0 0
    %2710 = vmatpush2.bf16.msra.mxu0 0
    %2711 = vmatprep.subr.bf16.mxu0 0
    %2712 = vmatpush2.bf16.msra.mxu0 0
    %2713 = vmatprep.subr.bf16.mxu0 0
    %2714 = vmatpush2.bf16.msra.mxu0 0
    %2715 = vmatprep.subr.bf16.mxu0 0
    %2716 = vmatpush2.bf16.msra.mxu0 0
    %2717 = vmatprep.mubr.bf16.mxu0 0
    %2718 = vmatmul.mubr.bf16.gmra.mxu0 %v2680
    %v2719 = vpop.f32.mrf.mxu0
    %v2720 = vadd.f32 0.0, %v2719
    %v2721 = vpop.f32.mrf.mxu0
    %v2722 = vpop.f32.mrf.mxu0
    %v2723 = vadd.f32 0.0, %v2722
    %v2724 = vpop.f32.mrf.mxu0
    %2725 = vdwg.mxu0
    %v2726 = vadd.f32 %v2452, %v2720
    %v2727 = vadd.f32 %v2453, %v2723
    %s2728 = scalar_lea.vmem %s7, 1
    %v2729 = vld [vmem:[%s2728] sm:$0x1]
    %v2731 = vlaneseq
    %v2732 = vshrl.u32 %v2731, 7
    %v2733 = vsub.s32 0, %v2732
    %v2734 = vrot.slane %v2729, %v2733
    %v2736 = vadd.f32 %v2726, %v2734
    %v2737 = vadd.f32 %v2727, %v2734
    %v2738 = vadd.f32 %v1559, %v2736
    %v2739 = vadd.f32 %v1560, %v2737
    %s2740 = scalar_lea.vmem %s8, 1
    %v2741 = vld [vmem:[%s2740] sm:$0x1]
    %s2742 = scalar_lea.vmem %s9, 1
    %v2743 = vld [vmem:[%s2742] sm:$0x1]
    %v2744 = vsel %vm65, %v2738, 0.0
    %2745 = vadd.xlane.f32.xlu0 %v2744
    %v2746 = vpop.xlane.xlu0 %2745
    %v2747 = vsel %vm65, %v2739, 0.0
    %2748 = vadd.xlane.f32.xlu0 %v2747
    %v2749 = vpop.xlane.xlu0 %2748
    %v2750 = vmul.f32 %v2746, %v72
    %v2751 = vmul.f32 %v2749, %v72
    %v2752 = vsub.f32 %v2738, %v2750
    %v2753 = vsub.f32 %v2739, %v2751
    %v2754 = vmul.f32 %v2752, %v2752
    %v2755 = vmul.f32 %v2753, %v2753
    %v2756 = vsel %vm65, %v2754, 0.0
    %2757 = vadd.xlane.f32.xlu0 %v2756
    %v2758 = vpop.xlane.xlu0 %2757
    %v2759 = vsel %vm65, %v2755, 0.0
    %2760 = vadd.xlane.f32.xlu0 %v2759
    %v2761 = vpop.xlane.xlu0 %2760
    %v2762 = vmul.f32 %v2758, %v72
    %v2763 = vmul.f32 %v2761, %v72
    %v2764 = vadd.f32 %v2762, 1e-12
    %v2765 = vadd.f32 %v2763, 1e-12
    %v2766 = vrsqrt.pop %v2764
    %v2767 = vrsqrt.pop %v2765
    %v2768 = vmul.f32 %v2752, %v2766
    %v2769 = vmul.f32 %v2753, %v2767
    %v2771 = vlaneseq
    %v2772 = vshrl.u32 %v2771, 7
    %v2773 = vsub.s32 0, %v2772
    %v2774 = vrot.slane %v2741, %v2773
    %v2776 = vmul.f32 %v2768, %v2774
    %v2777 = vmul.f32 %v2769, %v2774
    %v2779 = vlaneseq
    %v2780 = vshrl.u32 %v2779, 7
    %v2781 = vsub.s32 0, %v2780
    %v2782 = vrot.slane %v2743, %v2781
    %v2784 = vadd.f32 %v2776, %v2782
    %v2785 = vadd.f32 %v2777, %v2782
    %s2786 = scalar_lea.vmem %s10, 16
    %v2787 = vld [vmem:[%s2786] sm:$0xf]
    %v2788 = vld [vmem:[%s2786 + $0x4] sm:$0xf]
    %v2789 = vld [vmem:[%s2786 + $0x8] sm:$0xf]
    %v2790 = vld [vmem:[%s2786 + $0xc] sm:$0xf]
    %v2791 = vpack.c.bf16 %v2785, %v2784
    %s2792 = scalar_lea.vmem %s11, 1
    %v2793 = vld [vmem:[%s2792] sm:$0x1]
    %v2795 = vlaneseq
    %v2796 = vshrl.u32 %v2795, 7
    %v2797 = vsub.s32 0, %v2796
    %v2798 = vrot.slane %v2793, %v2797
    %v2804 = vunpack.c.l.b16 %v2787
    %v2805 = vunpack.c.l.b16 %v2788
    %v2806 = vunpack.c.l.b16 %v2789
    %v2807 = vunpack.c.l.b16 %v2790
    %v2808 = vpack.c.b16 %v2805, %v2804
    %v2809 = vpack.c.b16 %v2807, %v2806
    %v2813 = vsel %vm65, %v2791, 0
    %2815 = vmatprep.subr.bf16.mxu0 0
    %2816 = vmatpush1.bf16.msra.mxu0 0
    %2817 = vmatprep.subr.bf16.mxu0 0
    %2818 = vmatpush1.bf16.msra.mxu0 0
    %2819 = vmatprep.subr.bf16.mxu0 0
    %2820 = vmatpush1.bf16.msra.mxu0 0
    %2821 = vmatprep.subr.bf16.mxu0 0
    %2822 = vmatpush1.bf16.msra.mxu0 0
    %2823 = vmatprep.subr.bf16.mxu0 0
    %2824 = vmatpush1.bf16.msra.mxu0 0
    %2825 = vmatprep.subr.bf16.mxu0 0
    %2826 = vmatpush1.bf16.msra.mxu0 0
    %2827 = vmatprep.subr.bf16.mxu0 0
    %2828 = vmatpush1.bf16.msra.mxu0 %v2809
    %2829 = vmatprep.subr.bf16.mxu0 0
    %2830 = vmatpush1.bf16.msra.mxu0 %v2808
    %2831 = vmatprep.subr.bf16.mxu0 0
    %2832 = vmatpush2.bf16.msra.mxu0 0
    %2833 = vmatprep.subr.bf16.mxu0 0
    %2834 = vmatpush2.bf16.msra.mxu0 0
    %2835 = vmatprep.subr.bf16.mxu0 0
    %2836 = vmatpush2.bf16.msra.mxu0 0
    %2837 = vmatprep.subr.bf16.mxu0 0
    %2838 = vmatpush2.bf16.msra.mxu0 0
    %2839 = vmatprep.subr.bf16.mxu0 0
    %2840 = vmatpush2.bf16.msra.mxu0 0
    %2841 = vmatprep.subr.bf16.mxu0 0
    %2842 = vmatpush2.bf16.msra.mxu0 0
    %2843 = vmatprep.subr.bf16.mxu0 0
    %2844 = vmatpush2.bf16.msra.mxu0 0
    %2845 = vmatprep.subr.bf16.mxu0 0
    %2846 = vmatpush2.bf16.msra.mxu0 0
    %2847 = vmatprep.mubr.bf16.mxu0 0
    %2848 = vmatmul.mubr.bf16.gmra.mxu0 %v2813
    %v2849 = vpop.f32.mrf.mxu0
    %v2850 = vadd.f32 %v2798, %v2849
    %v2851 = vpop.f32.mrf.mxu0
    %v2852 = vpop.f32.mrf.mxu0
    %v2853 = vadd.f32 %v2798, %v2852
    %v2854 = vpop.f32.mrf.mxu0
    %2855 = vdwg.mxu0
    %v2856 = vmul.f32 %v2850, %v2850
    %v2857 = vmul.f32 %v2853, %v2853
    %v2858 = vmul.f32 %v2850, %v2856
    %v2859 = vmul.f32 %v2853, %v2857
    %v2860 = vmul.f32 %v2858, 0.044715
    %v2861 = vmul.f32 %v2859, 0.044715
    %v2862 = vadd.f32 %v2850, %v2860
    %v2863 = vadd.f32 %v2853, %v2861
    %v2864 = vmul.f32 %v2862, 0.7978846
    %v2865 = vmul.f32 %v2863, 0.7978846
    %v2866 = vtanh.pop %v2864
    %v2867 = vtanh.pop %v2865
    %v2868 = vadd.f32 %v2866, 1.0
    %v2869 = vadd.f32 %v2867, 1.0
    %v2870 = vmul.f32 %v2868, 0.5
    %v2871 = vmul.f32 %v2869, 0.5
    %v2872 = vmul.f32 %v2850, %v2870
    %v2873 = vmul.f32 %v2853, %v2871
    %s2874 = scalar_lea.vmem %s12, 32
    %v2875 = vld [vmem:[%s2874] sm:$0xf]
    %v2876 = vld [vmem:[%s2874 + $0x4] sm:$0xf]
    %v2877 = vld [vmem:[%s2874 + $0x8] sm:$0xf]
    %v2878 = vld [vmem:[%s2874 + $0xc] sm:$0xf]
    %v2879 = vld [vmem:[%s2874 + $0x10] sm:$0xf]
    %v2880 = vld [vmem:[%s2874 + $0x14] sm:$0xf]
    %v2881 = vld [vmem:[%s2874 + $0x18] sm:$0xf]
    %v2882 = vld [vmem:[%s2874 + $0x1c] sm:$0xf]
    %v2883 = vpack.c.bf16 %v2873, %v2872
    %s2884 = scalar_lea.vmem %s13, 1
    %v2885 = vld [vmem:[%s2884] sm:$0x1]
    %v2887 = vlaneseq
    %v2888 = vshrl.u32 %v2887, 7
    %v2889 = vsub.s32 0, %v2888
    %v2890 = vrot.slane %v2885, %v2889
    %v2900 = vunpack.c.l.b16 %v2875
    %v2901 = vunpack.c.l.b16 %v2876
    %v2902 = vunpack.c.l.b16 %v2877
    %v2903 = vunpack.c.l.b16 %v2878
    %v2904 = vunpack.c.l.b16 %v2879
    %v2905 = vunpack.c.l.b16 %v2880
    %v2906 = vunpack.c.l.b16 %v2881
    %v2907 = vunpack.c.l.b16 %v2882
    %v2908 = vpack.c.b16 %v2901, %v2900
    %v2909 = vpack.c.b16 %v2903, %v2902
    %v2910 = vpack.c.b16 %v2905, %v2904
    %v2911 = vpack.c.b16 %v2907, %v2906
    %v2917 = vsel %vm1470, %v2883, 0
    %2919 = vmatprep.subr.bf16.mxu0 0
    %2920 = vmatpush1.bf16.msra.mxu0 0
    %2921 = vmatprep.subr.bf16.mxu0 0
    %2922 = vmatpush1.bf16.msra.mxu0 0
    %2923 = vmatprep.subr.bf16.mxu0 0
    %2924 = vmatpush1.bf16.msra.mxu0 0
    %2925 = vmatprep.subr.bf16.mxu0 0
    %2926 = vmatpush1.bf16.msra.mxu0 0
    %2927 = vmatprep.subr.bf16.mxu0 0
    %2928 = vmatpush1.bf16.msra.mxu0 %v2911
    %2929 = vmatprep.subr.bf16.mxu0 0
    %2930 = vmatpush1.bf16.msra.mxu0 %v2910
    %2931 = vmatprep.subr.bf16.mxu0 0
    %2932 = vmatpush1.bf16.msra.mxu0 %v2909
    %2933 = vmatprep.subr.bf16.mxu0 0
    %2934 = vmatpush1.bf16.msra.mxu0 %v2908
    %2935 = vmatprep.subr.bf16.mxu0 0
    %2936 = vmatpush2.bf16.msra.mxu0 0
    %2937 = vmatprep.subr.bf16.mxu0 0
    %2938 = vmatpush2.bf16.msra.mxu0 0
    %2939 = vmatprep.subr.bf16.mxu0 0
    %2940 = vmatpush2.bf16.msra.mxu0 0
    %2941 = vmatprep.subr.bf16.mxu0 0
    %2942 = vmatpush2.bf16.msra.mxu0 0
    %2943 = vmatprep.subr.bf16.mxu0 0
    %2944 = vmatpush2.bf16.msra.mxu0 0
    %2945 = vmatprep.subr.bf16.mxu0 0
    %2946 = vmatpush2.bf16.msra.mxu0 0
    %2947 = vmatprep.subr.bf16.mxu0 0
    %2948 = vmatpush2.bf16.msra.mxu0 0
    %2949 = vmatprep.subr.bf16.mxu0 0
    %2950 = vmatpush2.bf16.msra.mxu0 0
    %2951 = vmatprep.mubr.bf16.mxu0 0
    %2952 = vmatmul.mubr.bf16.gmra.mxu0 %v2917
    %v2953 = vpop.f32.mrf.mxu0
    %v2954 = vadd.f32 %v2890, %v2953
    %v2955 = vpop.f32.mrf.mxu0
    %v2956 = vpop.f32.mrf.mxu0
    %v2957 = vadd.f32 %v2890, %v2956
    %v2958 = vpop.f32.mrf.mxu0
    %2959 = vdwg.mxu0
    %v2960 = vadd.f32 %v2784, %v2954
    %v2961 = vadd.f32 %v2785, %v2957
    %s2962 = scalar_lea.vmem %s14, 1
    %v2963 = vld [vmem:[%s2962] sm:$0x1]
    %s2964 = scalar_lea.vmem %s15, 1
    %v2965 = vld [vmem:[%s2964] sm:$0x1]
    %v2966 = vsel %vm65, %v2960, 0.0
    %2967 = vadd.xlane.f32.xlu0 %v2966
    %v2968 = vpop.xlane.xlu0 %2967
    %v2969 = vsel %vm65, %v2961, 0.0
    %2970 = vadd.xlane.f32.xlu0 %v2969
    %v2971 = vpop.xlane.xlu0 %2970
    %v2972 = vmul.f32 %v2968, %v72
    %v2973 = vmul.f32 %v2971, %v72
    %v2974 = vsub.f32 %v2960, %v2972
    %v2975 = vsub.f32 %v2961, %v2973
    %v2976 = vmul.f32 %v2974, %v2974
    %v2977 = vmul.f32 %v2975, %v2975
    %v2978 = vsel %vm65, %v2976, 0.0
    %2979 = vadd.xlane.f32.xlu0 %v2978
    %v2980 = vpop.xlane.xlu0 %2979
    %v2981 = vsel %vm65, %v2977, 0.0
    %2982 = vadd.xlane.f32.xlu0 %v2981
    %v2983 = vpop.xlane.xlu0 %2982
    %v2984 = vmul.f32 %v2980, %v72
    %v2985 = vmul.f32 %v2983, %v72
    %v2986 = vadd.f32 %v2984, 1e-12
    %v2987 = vadd.f32 %v2985, 1e-12
    %v2988 = vrsqrt.pop %v2986
    %v2989 = vrsqrt.pop %v2987
    %v2990 = vmul.f32 %v2974, %v2988
    %v2991 = vmul.f32 %v2975, %v2989
    %v2993 = vlaneseq
    %v2994 = vshrl.u32 %v2993, 7
    %v2995 = vsub.s32 0, %v2994
    %v2996 = vrot.slane %v2963, %v2995
    %v2998 = vmul.f32 %v2990, %v2996
    %v2999 = vmul.f32 %v2991, %v2996
    %v3001 = vlaneseq
    %v3002 = vshrl.u32 %v3001, 7
    %v3003 = vsub.s32 0, %v3002
    %v3004 = vrot.slane %v2965, %v3003
    %v3006 = vadd.f32 %v2998, %v3004
    %v3007 = vadd.f32 %v2999, %v3004
    %v3008 = vld [vmem:[%s16] sm:$0xf]
    %v3009 = vld [vmem:[%s16 + $0x4] sm:$0xf]
    %v3010 = vld [vmem:[%s16 + $0x8] sm:$0xf]
    %v3011 = vld [vmem:[%s16 + $0xc] sm:$0xf]
    %v3012 = vpack.c.bf16 %v3006, %v3006
    %v3013 = vpack.c.bf16 %v3007, %v3007
    %v3014 = vld [vmem:[%s17] sm:$0x1]
    %v3016 = vlaneseq
    %v3017 = vshrl.u32 %v3016, 7
    %v3018 = vsub.s32 0, %v3017
    %v3019 = vrot.slane %v3014, %v3018
    %v3023 = vunpack.c.l.b16 %v3012
    %v3024 = vunpack.c.l.b16 %v3013
    %v3025 = vrot.slane %v3024, 7
    %vm3026 = vcmask 1041409
    %v3027 = vsel %vm3026, %v3025, %v3023
    %v3028 = vpack.c.b16 %v3027, %v3027
    %v3033 = vunpack.c.l.b16 %v3008
    %v3034 = vunpack.c.l.b16 %v3009
    %v3035 = vunpack.c.l.b16 %v3010
    %v3036 = vunpack.c.l.b16 %v3011
    %v3037 = vpack.c.b16 %v3034, %v3033
    %v3038 = vpack.c.b16 %v3036, %v3035
    %v3042 = vsel %vm65, %v3028, 0
    %3044 = vmatprep.subr.bf16.mxu0 0
    %3045 = vmatpush1.bf16.msra.mxu0 0
    %3046 = vmatprep.subr.bf16.mxu0 0
    %3047 = vmatpush1.bf16.msra.mxu0 0
    %3048 = vmatprep.subr.bf16.mxu0 0
    %3049 = vmatpush1.bf16.msra.mxu0 0
    %3050 = vmatprep.subr.bf16.mxu0 0
    %3051 = vmatpush1.bf16.msra.mxu0 0
    %3052 = vmatprep.subr.bf16.mxu0 0
    %3053 = vmatpush1.bf16.msra.mxu0 0
    %3054 = vmatprep.subr.bf16.mxu0 0
    %3055 = vmatpush1.bf16.msra.mxu0 0
    %3056 = vmatprep.subr.bf16.mxu0 0
    %3057 = vmatpush1.bf16.msra.mxu0 %v3038
    %3058 = vmatprep.subr.bf16.mxu0 0
    %3059 = vmatpush1.bf16.msra.mxu0 %v3037
    %3060 = vmatprep.subr.bf16.mxu0 0
    %3061 = vmatpush2.bf16.msra.mxu0 0
    %3062 = vmatprep.subr.bf16.mxu0 0
    %3063 = vmatpush2.bf16.msra.mxu0 0
    %3064 = vmatprep.subr.bf16.mxu0 0
    %3065 = vmatpush2.bf16.msra.mxu0 0
    %3066 = vmatprep.subr.bf16.mxu0 0
    %3067 = vmatpush2.bf16.msra.mxu0 0
    %3068 = vmatprep.subr.bf16.mxu0 0
    %3069 = vmatpush2.bf16.msra.mxu0 0
    %3070 = vmatprep.subr.bf16.mxu0 0
    %3071 = vmatpush2.bf16.msra.mxu0 0
    %3072 = vmatprep.subr.bf16.mxu0 0
    %3073 = vmatpush2.bf16.msra.mxu0 0
    %3074 = vmatprep.subr.bf16.mxu0 0
    %3075 = vmatpush2.bf16.msra.mxu0 0
    %3076 = vmatprep.mubr.bf16.mxu0 0
    %3077 = vmatmul.mubr.bf16.gmra.mxu0 %v3042
    %v3078 = vpop.f32.mrf.mxu0
    %v3079 = vadd.f32 %v3019, %v3078
    %v3080 = vpop.f32.mrf.mxu0
    %v3081 = vpop.f32.mrf.mxu0
    %v3082 = vpop.f32.mrf.mxu0
    %3083 = vdwg.mxu0
    %3084 = vst [vmem:[#allocation2] sm:$0x3] %v3079
    // Predicated region
    $region74: #{_lambda_.1} parent=1 // pred_check
      _
    $region75: #{_lambda_.1} parent=1 // pred_check_branch
      %3086 = sbr.rel (0) target = $region77
    $region76: #{_lambda_.1} parent=1 // pred_region
      %s3088 = ssub.s32 32, 32
      %3089 = vsyncadd [#allocation3], %s3088
      %s3091 = sshll.u32 [#allocation2], 4
      %s3092 = int_to_ptr.vmem [resolvable:$true] %s3091
      %3094 = dma.vmem_to_hbm [thread:$0]  %s3092, 32, %s18, [#allocation3]
    $region77: #{_lambda_.1} parent=1 // pred_fallthru
      _
    // Predicated region
    $region78: #{_lambda_.1} parent=1 // pred_check
      _
    $region79: #{_lambda_.1} parent=1 // pred_check_branch
      %3096 = sbr.rel (0) target = $region81
    $region80: #{_lambda_.1} parent=1 // pred_region
      %3097 = dma.done [#allocation3], 32
    $region81: #{_lambda_.1} parent=1 // pred_fallthru
      _
    %3098 = vsyncpa [#allocation3], 1

</llo_original>
